<compile_context>
chip_gen: v6e
topology: v6e:2x2x1
jax: 0.10.0
libtpu: 0.0.40
codegen_flags: <defaults>
</compile_context>

<pallas_src>
import numpy as np
import jax
import jax.numpy as jnp
from jax.experimental import pallas as pl
from jax.experimental.pallas import tpu as pltpu

INPUT_SIZE = 4
HIDDEN_SIZE = 50
OUTPUT_SIZE = 1
NUM_LAYERS = 2
SEQ_LEN = 10
BATCH = 8
EPS = 1e-5

HP = 128            # hidden size padded to one lane tile
GP = 4 * HP         # 512: gate-padded width (each gate owns a 128-lane block)
DP = 8              # input features padded to one sublane tile

# Row offsets inside the packed LSTM weight buffer (multiples of 8).
_R_IH0 = 0                      # (DP,     2*GP)  layer-0 input->gates in left GP cols
_R_COMB = _R_IH0 + DP           # (2 * HP, 2*GP)  fused W_comb (see header)
_LSTM_ROWS = _R_COMB + 2 * HP   # 264

# Row offsets inside the packed head weight buffer (multiples of 128).
_R_FC1 = 0
_R_FC2 = _R_FC1 + HP
_R_FC3 = _R_FC2 + HP
_HEAD_ROWS = _R_FC3 + HP        # 384

# Dest gate block k (layout [i|f|o|g]) takes PyTorch source gate _GATE_SRC[k]
# (PyTorch order is i, f, g, o).
_GATE_SRC = (0, 1, 3, 2)


# ----------------------------------- kernel -----------------------------------
def lstm_model_kernel(x_ref, lw_ref, hw_ref, v_ref, out_ref, xp_ref):
    B = out_ref.shape[0]
    T = x_ref.shape[0] // B

    # ---- unpack packed parameter buffers (static, tile-aligned ref slices) ----
    w_ih0 = lw_ref[_R_IH0:_R_IH0 + DP, 0:GP]            # (8,   512)
    w_comb = lw_ref[_R_COMB:_R_COMB + 2 * HP, :]        # (256, 1024) fused RHS

    fc1w = hw_ref[_R_FC1:_R_FC1 + HP, :]                # (128, 128)
    fc2w = hw_ref[_R_FC2:_R_FC2 + HP, :]                # (128, 128) (cols 64..127 zero)
    fc3w = hw_ref[_R_FC3:_R_FC3 + HP, :]                # (128, 128) (only col 0 real)

    b0 = v_ref[0:1, 0:GP]                               # (1, 512) combined b_ih0 + b_hh0
    b1 = v_ref[1:2, 0:GP]                               # (1, 512) combined b_ih1 + b_hh1
    fc1b = v_ref[2:3, 0:HP]
    bn1g = v_ref[3:4, 0:HP]
    bn1b = v_ref[4:5, 0:HP]
    fc2b = v_ref[5:6, 0:HP]
    bn2g = v_ref[6:7, 0:HP]
    bn2b = v_ref[7:8, 0:HP]
    fc3b = v_ref[8:9, 0:OUTPUT_SIZE]                    # (1, 1)

    # Only per-step broadcast, hoisted out of the unrolled recurrence.
    b1_full = jnp.broadcast_to(b1, (B, GP))

    # ---- layer-0 input projection for ALL timesteps in one matmul -> VMEM scratch ----
    # xp_ref[t*B:(t+1)*B] is layer-0's (input + bias) pre-activation for step t.
    xp_ref[...] = jnp.dot(x_ref[...], w_ih0, preferred_element_type=jnp.float32) + b0

    c0 = jnp.zeros((B, HP), jnp.float32)
    c1 = jnp.zeros((B, HP), jnp.float32)
    h1 = jnp.zeros((B, HP), jnp.float32)
    rec0 = jnp.zeros((B, GP), jnp.float32)   # h0(-1) @ w_hh0 == 0 (zero initial state)

    def gate_split(g):
        # Gate blocks laid out [i | f | o | g]: one sigmoid slab + one tanh slab.
        s = jax.nn.sigmoid(g[:, 0:3 * HP])
        i = s[:, 0 * HP:1 * HP]
        f = s[:, 1 * HP:2 * HP]
        o = s[:, 2 * HP:3 * HP]
        gg = jnp.tanh(g[:, 3 * HP:4 * HP])
        return i, f, o, gg

    # Static sequence length -> fully unrolled recurrence (LLO-visible schedule).
    for t in range(T):
        # Layer 0 for step t: its recurrent matmul was fused into last step's MXU op.
        g0 = xp_ref[t * B:(t + 1) * B, :] + rec0
        i0, f0, o0, gg0 = gate_split(g0)
        c0 = f0 * c0 + i0 * gg0
        h0 = o0 * jnp.tanh(c0)

        # ONE fused MXU op per step: layer-1 gates for step t AND layer-0 recurrent
        # pre-activation for step t+1.  Concat sits on a 128-lane tile boundary so it
        # should lower to a layout no-op.
        # TODO(synk): confirm in the bundle dump that the concat does not materialize.
        lhs = jnp.concatenate([h0, h1], axis=1)                       # (B, 256)
        gcomb = jnp.dot(lhs, w_comb, preferred_element_type=jnp.float32)
        rec0 = gcomb[:, 0:GP]
        g1 = gcomb[:, GP:2 * GP] + b1_full
        i1, f1, o1, gg1 = gate_split(g1)
        c1 = f1 * c1 + i1 * gg1
        h1 = o1 * jnp.tanh(c1)

    # ---- MLP head on the last-timestep hidden state (out[:, -1, :]) ----
    def batchnorm_train(z, gamma, beta):
        mean = jnp.mean(z, axis=0, keepdims=True)
        var = jnp.mean((z - mean) ** 2, axis=0, keepdims=True)   # biased variance
        return (z - mean) * jax.lax.rsqrt(var + EPS) * gamma + beta

    z = jnp.dot(h1, fc1w, preferred_element_type=jnp.float32) + fc1b
    z = jnp.maximum(batchnorm_train(z, bn1g, bn1b), 0.0)
    z = jnp.dot(z, fc2w, preferred_element_type=jnp.float32) + fc2b
    z = jnp.maximum(batchnorm_train(z, bn2g, bn2b), 0.0)
    z = jnp.dot(z, fc3w, preferred_element_type=jnp.float32)
    out_ref[...] = (z[:, 0:OUTPUT_SIZE] + fc3b).astype(out_ref.dtype)


# ---------------------------------- wrapper ------------------------------------
def lstm_model_forward(x, packed):
    lstm_w, head_w, vecs = packed
    B, T, D = x.shape
    # Time-major + flattened + feature-padded in JAX (outside the kernel).
    xt = jnp.transpose(x, (1, 0, 2)).reshape(T * B, D)
    xt = jnp.pad(xt, ((0, 0), (0, DP - D)))
    vmem = pl.BlockSpec(memory_space=pltpu.MemorySpace.VMEM)
    # Grid-less and fully VMEM-resident by design (latency-bound, ~1.5 MiB footprint);
    # a grid would only add per-step overhead.  If batch ever grows large, add a
    # leading batch grid axis with dimension_semantics=("parallel",) instead.
    return pl.pallas_call(
        lstm_model_kernel,
        out_shape=jax.ShapeDtypeStruct((B, OUTPUT_SIZE), jnp.float32),
        in_specs=[vmem, vmem, vmem, vmem],
        out_specs=vmem,
        scratch_shapes=[pltpu.VMEM((T * B, GP), jnp.float32)],
    )(xt, lstm_w, head_w, vecs)


# --------------------------- deterministic param init ---------------------------
def init_params(key):
    ks = jax.random.split(key, 16)

    def u(k, shape, bound):
        return jax.random.uniform(k, shape, jnp.float32, -bound, bound)

    kh = 1.0 / np.sqrt(HIDDEN_SIZE)
    # LSTM layer 0 (input -> hidden), PyTorch layout (4H, in)
    w_ih0 = u(ks[0], (4 * HIDDEN_SIZE, INPUT_SIZE), kh)
    w_hh0 = u(ks[1], (4 * HIDDEN_SIZE, HIDDEN_SIZE), kh)
    b_ih0 = u(ks[2], (4 * HIDDEN_SIZE,), kh)
    b_hh0 = u(ks[3], (4 * HIDDEN_SIZE,), kh)
    # LSTM layer 1 (hidden -> hidden)
    w_ih1 = u(ks[4], (4 * HIDDEN_SIZE, HIDDEN_SIZE), kh)
    w_hh1 = u(ks[5], (4 * HIDDEN_SIZE, HIDDEN_SIZE), kh)
    b_ih1 = u(ks[6], (4 * HIDDEN_SIZE,), kh)
    b_hh1 = u(ks[7], (4 * HIDDEN_SIZE,), kh)
    # FC head
    k1 = 1.0 / np.sqrt(HIDDEN_SIZE)
    fc1w = u(ks[8], (128, HIDDEN_SIZE), k1)
    fc1b = u(ks[9], (128,), k1)
    k2 = 1.0 / np.sqrt(128)
    fc2w = u(ks[10], (64, 128), k2)
    fc2b = u(ks[11], (64,), k2)
    k3 = 1.0 / np.sqrt(64)
    fc3w = u(ks[12], (OUTPUT_SIZE, 64), k3)
    fc3b = u(ks[13], (OUTPUT_SIZE,), k3)

    return {
        "w_ih0_t": w_ih0.T, "w_hh0_t": w_hh0.T, "b0": (b_ih0 + b_hh0).reshape(1, -1),
        "w_ih1_t": w_ih1.T, "w_hh1_t": w_hh1.T, "b1": (b_ih1 + b_hh1).reshape(1, -1),
        "fc1w_t": fc1w.T, "fc1b": fc1b.reshape(1, -1),
        "bn1g": jnp.ones((1, 128), jnp.float32), "bn1b": jnp.zeros((1, 128), jnp.float32),
        "fc2w_t": fc2w.T, "fc2b": fc2b.reshape(1, -1),
        "bn2g": jnp.ones((1, 64), jnp.float32), "bn2b": jnp.zeros((1, 64), jnp.float32),
        "fc3w_t": fc3w.T, "fc3b": fc3b.reshape(1, -1),
    }


# --------------------- pack params into 3 lane-aligned buffers -------------------
def _pad_gate_cols(w):
    """(rows, 4*HIDDEN_SIZE) -> (rows, 4*HP): gates reordered to [i|f|o|g], each gate
    in its own 128-lane block (pad lanes exactly zero)."""
    w = np.asarray(w, np.float32)
    out = np.zeros((w.shape[0], GP), np.float32)
    for k, src in enumerate(_GATE_SRC):
        out[:, k * HP:k * HP + HIDDEN_SIZE] = w[:, src * HIDDEN_SIZE:(src + 1) * HIDDEN_SIZE]
    return out


def pack_params(p):
    # --- LSTM buffer: rows 0..7 = w_ih0 (left GP cols), rows 8..263 = fused W_comb ---
    lstm_w = np.zeros((_LSTM_ROWS, 2 * GP), np.float32)
    lstm_w[_R_IH0:_R_IH0 + INPUT_SIZE, 0:GP] = _pad_gate_cols(p["w_ih0_t"])
    # W_comb, h0 rows: [ w_hh0 | w_ih1 ]
    lstm_w[_R_COMB:_R_COMB + HIDDEN_SIZE, 0:GP] = _pad_gate_cols(p["w_hh0_t"])
    lstm_w[_R_COMB:_R_COMB + HIDDEN_SIZE, GP:2 * GP] = _pad_gate_cols(p["w_ih1_t"])
    # W_comb, h1 rows: [   0   | w_hh1 ]   (left half stays zero: h1 never feeds layer 0)
    lstm_w[_R_COMB + HP:_R_COMB + HP + HIDDEN_SIZE, GP:2 * GP] = _pad_gate_cols(p["w_hh1_t"])

    head_w = np.zeros((_HEAD_ROWS, HP), np.float32)
    head_w[_R_FC1:_R_FC1 + HIDDEN_SIZE, :] = np.asarray(p["fc1w_t"])             # (50, 128)
    head_w[_R_FC2:_R_FC2 + 128, 0:64] = np.asarray(p["fc2w_t"])                  # (128, 64)
    head_w[_R_FC3:_R_FC3 + 64, 0:OUTPUT_SIZE] = np.asarray(p["fc3w_t"])          # (64, 1)

    vecs = np.zeros((9, GP), np.float32)
    vecs[0:1, :] = _pad_gate_cols(p["b0"])
    vecs[1:2, :] = _pad_gate_cols(p["b1"])
    vecs[2, 0:128] = np.asarray(p["fc1b"]).reshape(-1)
    vecs[3, 0:128] = np.asarray(p["bn1g"]).reshape(-1)
    vecs[4, 0:128] = np.asarray(p["bn1b"]).reshape(-1)
    vecs[5, 0:64] = np.asarray(p["fc2b"]).reshape(-1)
    vecs[6, 0:64] = np.asarray(p["bn2g"]).reshape(-1)
    vecs[7, 0:64] = np.asarray(p["bn2b"]).reshape(-1)
    vecs[8, 0:OUTPUT_SIZE] = np.asarray(p["fc3b"]).reshape(-1)

    # Explicit zero-pad contract (per correctness review): the h/c pad-lane invariant
    # and the benign BN over fc2's 64 padded columns both rely on these being EXACT zeros.
    for k in range(4):
        assert np.all(lstm_w[:, k * HP + HIDDEN_SIZE:(k + 1) * HP] == 0.0)
        assert np.all(lstm_w[:, GP + k * HP + HIDDEN_SIZE:GP + (k + 1) * HP] == 0.0)
        assert np.all(vecs[0:2, k * HP + HIDDEN_SIZE:(k + 1) * HP] == 0.0)
    assert np.all(head_w[_R_FC1 + HIDDEN_SIZE:_R_FC2, :] == 0.0)
    assert np.all(head_w[_R_FC2:_R_FC2 + 128, 64:] == 0.0)
    assert np.all(head_w[_R_FC3:_R_FC3 + 64, OUTPUT_SIZE:] == 0.0)
    assert np.all(vecs[5:8, 64:] == 0.0)
    assert np.all(vecs[8, OUTPUT_SIZE:] == 0.0)

    return jnp.asarray(lstm_w), jnp.asarray(head_w), jnp.asarray(vecs)


# ----------------------------- pure-JAX reference -------------------------------
def _lstm_cell_ref(xt, h, c, w_ih_t, w_hh_t, b):
    gates = xt @ w_ih_t + h @ w_hh_t + b
    i = jax.nn.sigmoid(gates[:, 0 * HIDDEN_SIZE:1 * HIDDEN_SIZE])
    f = jax.nn.sigmoid(gates[:, 1 * HIDDEN_SIZE:2 * HIDDEN_SIZE])
    g = jnp.tanh(gates[:, 2 * HIDDEN_SIZE:3 * HIDDEN_SIZE])
    o = jax.nn.sigmoid(gates[:, 3 * HIDDEN_SIZE:4 * HIDDEN_SIZE])
    c_new = f * c + i * g
    return o * jnp.tanh(c_new), c_new


def _batchnorm_ref(z, gamma, beta):
    mean = jnp.mean(z, axis=0, keepdims=True)
    var = jnp.mean((z - mean) ** 2, axis=0, keepdims=True)
    return (z - mean) * jax.lax.rsqrt(var + EPS) * gamma + beta


def reference_forward(x, p):
    B = x.shape[0]
    h0 = jnp.zeros((B, HIDDEN_SIZE), jnp.float32)
    c0 = jnp.zeros((B, HIDDEN_SIZE), jnp.float32)
    h1 = jnp.zeros((B, HIDDEN_SIZE), jnp.float32)
    c1 = jnp.zeros((B, HIDDEN_SIZE), jnp.float32)
    for t in range(x.shape[1]):
        xt = x[:, t, :]
        h0, c0 = _lstm_cell_ref(xt, h0, c0, p["w_ih0_t"], p["w_hh0_t"], p["b0"])
        h1, c1 = _lstm_cell_ref(h0, h1, c1, p["w_ih1_t"], p["w_hh1_t"], p["b1"])
    z = h1 @ p["fc1w_t"] + p["fc1b"]
    z = jnp.maximum(_batchnorm_ref(z, p["bn1g"], p["bn1b"]), 0.0)
    z = z @ p["fc2w_t"] + p["fc2b"]
    z = jnp.maximum(_batchnorm_ref(z, p["bn2g"], p["bn2b"]), 0.0)
    return z @ p["fc3w_t"] + p["fc3b"]


if __name__ == "__main__":
    key = jax.random.PRNGKey(0)
    kx, kp = jax.random.split(key)
    x = jax.random.normal(kx, (BATCH, SEQ_LEN, INPUT_SIZE), jnp.float32)
    params = init_params(kp)
    packed = pack_params(params)

    out = lstm_model_forward(x, packed)
    out = jax.block_until_ready(out)
    assert out.shape == (BATCH, OUTPUT_SIZE)

    ref = jax.block_until_ready(reference_forward(x, params))
    np.testing.assert_allclose(np.asarray(out), np.asarray(ref), rtol=1e-3, atol=1e-3)

    print("KERNEL_OK")
</pallas_src>

<mosaic_0001>
module attributes {stable_mosaic.version = 11 : i64} {
  func.func @lstm_model_kernel(%arg0: memref<80x8xf32, #tpu.memory_space<vmem>>, %arg1: memref<264x1024xf32, #tpu.memory_space<vmem>>, %arg2: memref<384x128xf32, #tpu.memory_space<vmem>>, %arg3: memref<9x512xf32, #tpu.memory_space<vmem>>, %arg4: memref<8x1xf32, #tpu.memory_space<vmem>>, %arg5: memref<80x512xf32, #tpu.memory_space<vmem>>) attributes {dimension_semantics = [], scalar_prefetch = 0 : i64, scratch_operands = 1 : i64, tpu.core_type = #tpu.core_type<tc>} {
    %c0 = arith.constant 0 : index
    %c0_0 = arith.constant 0 : index
    %0 = vector.load %arg1[%c0, %c0_0] : memref<264x1024xf32, #tpu.memory_space<vmem>>, vector<8x512xf32>
    %c8 = arith.constant 8 : index
    %c0_1 = arith.constant 0 : index
    %1 = vector.load %arg1[%c8, %c0_1] : memref<264x1024xf32, #tpu.memory_space<vmem>>, vector<256x1024xf32>
    %c0_2 = arith.constant 0 : index
    %c0_3 = arith.constant 0 : index
    %2 = vector.load %arg2[%c0_2, %c0_3] : memref<384x128xf32, #tpu.memory_space<vmem>>, vector<128x128xf32>
    %c128 = arith.constant 128 : index
    %c0_4 = arith.constant 0 : index
    %3 = vector.load %arg2[%c128, %c0_4] : memref<384x128xf32, #tpu.memory_space<vmem>>, vector<128x128xf32>
    %c256 = arith.constant 256 : index
    %c0_5 = arith.constant 0 : index
    %4 = vector.load %arg2[%c256, %c0_5] : memref<384x128xf32, #tpu.memory_space<vmem>>, vector<128x128xf32>
    %c0_6 = arith.constant 0 : index
    %c0_7 = arith.constant 0 : index
    %5 = vector.load %arg3[%c0_6, %c0_7] : memref<9x512xf32, #tpu.memory_space<vmem>>, vector<1x512xf32>
    %c1 = arith.constant 1 : index
    %c0_8 = arith.constant 0 : index
    %6 = vector.load %arg3[%c1, %c0_8] : memref<9x512xf32, #tpu.memory_space<vmem>>, vector<1x512xf32>
    %c2 = arith.constant 2 : index
    %c0_9 = arith.constant 0 : index
    %7 = vector.load %arg3[%c2, %c0_9] : memref<9x512xf32, #tpu.memory_space<vmem>>, vector<1x128xf32>
    %c3 = arith.constant 3 : index
    %c0_10 = arith.constant 0 : index
    %8 = vector.load %arg3[%c3, %c0_10] : memref<9x512xf32, #tpu.memory_space<vmem>>, vector<1x128xf32>
    %c4 = arith.constant 4 : index
    %c0_11 = arith.constant 0 : index
    %9 = vector.load %arg3[%c4, %c0_11] : memref<9x512xf32, #tpu.memory_space<vmem>>, vector<1x128xf32>
    %c5 = arith.constant 5 : index
    %c0_12 = arith.constant 0 : index
    %10 = vector.load %arg3[%c5, %c0_12] : memref<9x512xf32, #tpu.memory_space<vmem>>, vector<1x128xf32>
    %c6 = arith.constant 6 : index
    %c0_13 = arith.constant 0 : index
    %11 = vector.load %arg3[%c6, %c0_13] : memref<9x512xf32, #tpu.memory_space<vmem>>, vector<1x128xf32>
    %c7 = arith.constant 7 : index
    %c0_14 = arith.constant 0 : index
    %12 = vector.load %arg3[%c7, %c0_14] : memref<9x512xf32, #tpu.memory_space<vmem>>, vector<1x128xf32>
    %c8_15 = arith.constant 8 : index
    %c0_16 = arith.constant 0 : index
    %13 = vector.load %arg3[%c8_15, %c0_16] : memref<9x512xf32, #tpu.memory_space<vmem>>, vector<1x1xf32>
    %14 = vector.shape_cast %6 : vector<1x512xf32> to vector<1x512xf32>
    %15 = vector.broadcast %14 : vector<1x512xf32> to vector<8x512xf32>
    %c0_17 = arith.constant 0 : index
    %c0_18 = arith.constant 0 : index
    %16 = vector.load %arg0[%c0_17, %c0_18] : memref<80x8xf32, #tpu.memory_space<vmem>>, vector<80x8xf32>
    %cst = arith.constant dense<0.000000e+00> : vector<80x512xf32>
    %17 = tpu.matmul %16, %0, %cst {dimension_numbers = #tpu.dot_dimension_numbers<[1], [0], [0], [1], [0, 0, 1, 1], [], []>} : vector<80x8xf32>, vector<8x512xf32>, vector<80x512xf32> -> vector<80x512xf32>
    %18 = vector.broadcast %5 : vector<1x512xf32> to vector<80x512xf32>
    %19 = arith.addf %17, %18 : vector<80x512xf32>
    %c0_19 = arith.constant 0 : index
    %c0_20 = arith.constant 0 : index
    %20 = vector.load %arg5[%c0_19, %c0_20] : memref<80x512xf32, #tpu.memory_space<vmem>>, vector<80x512xf32>
    tpu.vector_store %arg5[%c0_19, %c0_20], %19 {strides = array<i32>} : memref<80x512xf32, #tpu.memory_space<vmem>>, vector<80x512xf32>,
    %cst_21 = arith.constant 0.000000e+00 : f32
    %21 = vector.broadcast %cst_21 : f32 to vector<8x128xf32>
    %cst_22 = arith.constant 0.000000e+00 : f32
    %22 = vector.broadcast %cst_22 : f32 to vector<8x128xf32>
    %cst_23 = arith.constant 0.000000e+00 : f32
    %23 = vector.broadcast %cst_23 : f32 to vector<8x128xf32>
    %cst_24 = arith.constant 0.000000e+00 : f32
    %24 = vector.broadcast %cst_24 : f32 to vector<8x512xf32>
    %c0_25 = arith.constant 0 : index
    %c0_26 = arith.constant 0 : index
    %25 = vector.load %arg5[%c0_25, %c0_26] : memref<80x512xf32, #tpu.memory_space<vmem>>, vector<8x512xf32>
    %26 = arith.addf %25, %24 : vector<8x512xf32>
    %27 = vector.extract_strided_slice %26 {offsets = [0, 0], sizes = [8, 384], strides = [1, 1]} : vector<8x512xf32> to vector<8x384xf32>
    %28 = arith.negf %27 : vector<8x384xf32>
    %29 = math.exp %28 : vector<8x384xf32>
    %cst_27 = arith.constant 1.000000e+00 : f32
    %30 = vector.broadcast %cst_27 : f32 to vector<8x384xf32>
    %31 = arith.addf %30, %29 : vector<8x384xf32>
    %32 = arith.divf %30, %31 : vector<8x384xf32>
    %33 = vector.extract_strided_slice %32 {offsets = [0, 0], sizes = [8, 128], strides = [1, 1]} : vector<8x384xf32> to vector<8x128xf32>
    %34 = vector.extract_strided_slice %32 {offsets = [0, 128], sizes = [8, 128], strides = [1, 1]} : vector<8x384xf32> to vector<8x128xf32>
    %35 = vector.extract_strided_slice %32 {offsets = [0, 256], sizes = [8, 128], strides = [1, 1]} : vector<8x384xf32> to vector<8x128xf32>
    %36 = vector.extract_strided_slice %26 {offsets = [0, 384], sizes = [8, 128], strides = [1, 1]} : vector<8x512xf32> to vector<8x128xf32>
    %37 = math.tanh %36 : vector<8x128xf32>
    %38 = arith.mulf %34, %21 : vector<8x128xf32>
    %39 = arith.mulf %33, %37 : vector<8x128xf32>
    %40 = arith.addf %38, %39 : vector<8x128xf32>
    %41 = math.tanh %40 : vector<8x128xf32>
    %42 = arith.mulf %35, %41 : vector<8x128xf32>
    %43 = tpu.concatenate %42, %23 in 1 : vector<8x128xf32>, vector<8x128xf32> -> vector<8x256xf32>
    %cst_28 = arith.constant dense<0.000000e+00> : vector<8x1024xf32>
    %44 = tpu.matmul %43, %1, %cst_28 {dimension_numbers = #tpu.dot_dimension_numbers<[1], [0], [0], [1], [0, 0, 1, 1], [], []>} : vector<8x256xf32>, vector<256x1024xf32>, vector<8x1024xf32> -> vector<8x1024xf32>
    %45 = vector.extract_strided_slice %44 {offsets = [0, 0], sizes = [8, 512], strides = [1, 1]} : vector<8x1024xf32> to vector<8x512xf32>
    %46 = vector.extract_strided_slice %44 {offsets = [0, 512], sizes = [8, 512], strides = [1, 1]} : vector<8x1024xf32> to vector<8x512xf32>
    %47 = arith.addf %46, %15 : vector<8x512xf32>
    %48 = vector.extract_strided_slice %47 {offsets = [0, 0], sizes = [8, 384], strides = [1, 1]} : vector<8x512xf32> to vector<8x384xf32>
    %49 = arith.negf %48 : vector<8x384xf32>
    %50 = math.exp %49 : vector<8x384xf32>
    %cst_29 = arith.constant 1.000000e+00 : f32
    %51 = vector.broadcast %cst_29 : f32 to vector<8x384xf32>
    %52 = arith.addf %51, %50 : vector<8x384xf32>
    %53 = arith.divf %51, %52 : vector<8x384xf32>
    %54 = vector.extract_strided_slice %53 {offsets = [0, 0], sizes = [8, 128], strides = [1, 1]} : vector<8x384xf32> to vector<8x128xf32>
    %55 = vector.extract_strided_slice %53 {offsets = [0, 128], sizes = [8, 128], strides = [1, 1]} : vector<8x384xf32> to vector<8x128xf32>
    %56 = vector.extract_strided_slice %53 {offsets = [0, 256], sizes = [8, 128], strides = [1, 1]} : vector<8x384xf32> to vector<8x128xf32>
    %57 = vector.extract_strided_slice %47 {offsets = [0, 384], sizes = [8, 128], strides = [1, 1]} : vector<8x512xf32> to vector<8x128xf32>
    %58 = math.tanh %57 : vector<8x128xf32>
    %59 = arith.mulf %55, %22 : vector<8x128xf32>
    %60 = arith.mulf %54, %58 : vector<8x128xf32>
    %61 = arith.addf %59, %60 : vector<8x128xf32>
    %62 = math.tanh %61 : vector<8x128xf32>
    %63 = arith.mulf %56, %62 : vector<8x128xf32>
    %c8_30 = arith.constant 8 : index
    %c0_31 = arith.constant 0 : index
    %64 = vector.load %arg5[%c8_30, %c0_31] : memref<80x512xf32, #tpu.memory_space<vmem>>, vector<8x512xf32>
    %65 = arith.addf %64, %45 : vector<8x512xf32>
    %66 = vector.extract_strided_slice %65 {offsets = [0, 0], sizes = [8, 384], strides = [1, 1]} : vector<8x512xf32> to vector<8x384xf32>
    %67 = arith.negf %66 : vector<8x384xf32>
    %68 = math.exp %67 : vector<8x384xf32>
    %cst_32 = arith.constant 1.000000e+00 : f32
    %69 = vector.broadcast %cst_32 : f32 to vector<8x384xf32>
    %70 = arith.addf %69, %68 : vector<8x384xf32>
    %71 = arith.divf %69, %70 : vector<8x384xf32>
    %72 = vector.extract_strided_slice %71 {offsets = [0, 0], sizes = [8, 128], strides = [1, 1]} : vector<8x384xf32> to vector<8x128xf32>
    %73 = vector.extract_strided_slice %71 {offsets = [0, 128], sizes = [8, 128], strides = [1, 1]} : vector<8x384xf32> to vector<8x128xf32>
    %74 = vector.extract_strided_slice %71 {offsets = [0, 256], sizes = [8, 128], strides = [1, 1]} : vector<8x384xf32> to vector<8x128xf32>
    %75 = vector.extract_strided_slice %65 {offsets = [0, 384], sizes = [8, 128], strides = [1, 1]} : vector<8x512xf32> to vector<8x128xf32>
    %76 = math.tanh %75 : vector<8x128xf32>
    %77 = arith.mulf %73, %40 : vector<8x128xf32>
    %78 = arith.mulf %72, %76 : vector<8x128xf32>
    %79 = arith.addf %77, %78 : vector<8x128xf32>
    %80 = math.tanh %79 : vector<8x128xf32>
    %81 = arith.mulf %74, %80 : vector<8x128xf32>
    %82 = tpu.concatenate %81, %63 in 1 : vector<8x128xf32>, vector<8x128xf32> -> vector<8x256xf32>
    %cst_33 = arith.constant dense<0.000000e+00> : vector<8x1024xf32>
    %83 = tpu.matmul %82, %1, %cst_33 {dimension_numbers = #tpu.dot_dimension_numbers<[1], [0], [0], [1], [0, 0, 1, 1], [], []>} : vector<8x256xf32>, vector<256x1024xf32>, vector<8x1024xf32> -> vector<8x1024xf32>
    %84 = vector.extract_strided_slice %83 {offsets = [0, 0], sizes = [8, 512], strides = [1, 1]} : vector<8x1024xf32> to vector<8x512xf32>
    %85 = vector.extract_strided_slice %83 {offsets = [0, 512], sizes = [8, 512], strides = [1, 1]} : vector<8x1024xf32> to vector<8x512xf32>
    %86 = arith.addf %85, %15 : vector<8x512xf32>
    %87 = vector.extract_strided_slice %86 {offsets = [0, 0], sizes = [8, 384], strides = [1, 1]} : vector<8x512xf32> to vector<8x384xf32>
    %88 = arith.negf %87 : vector<8x384xf32>
    %89 = math.exp %88 : vector<8x384xf32>
    %cst_34 = arith.constant 1.000000e+00 : f32
    %90 = vector.broadcast %cst_34 : f32 to vector<8x384xf32>
    %91 = arith.addf %90, %89 : vector<8x384xf32>
    %92 = arith.divf %90, %91 : vector<8x384xf32>
    %93 = vector.extract_strided_slice %92 {offsets = [0, 0], sizes = [8, 128], strides = [1, 1]} : vector<8x384xf32> to vector<8x128xf32>
    %94 = vector.extract_strided_slice %92 {offsets = [0, 128], sizes = [8, 128], strides = [1, 1]} : vector<8x384xf32> to vector<8x128xf32>
    %95 = vector.extract_strided_slice %92 {offsets = [0, 256], sizes = [8, 128], strides = [1, 1]} : vector<8x384xf32> to vector<8x128xf32>
    %96 = vector.extract_strided_slice %86 {offsets = [0, 384], sizes = [8, 128], strides = [1, 1]} : vector<8x512xf32> to vector<8x128xf32>
    %97 = math.tanh %96 : vector<8x128xf32>
    %98 = arith.mulf %94, %61 : vector<8x128xf32>
    %99 = arith.mulf %93, %97 : vector<8x128xf32>
    %100 = arith.addf %98, %99 : vector<8x128xf32>
    %101 = math.tanh %100 : vector<8x128xf32>
    %102 = arith.mulf %95, %101 : vector<8x128xf32>
    %c16 = arith.constant 16 : index
    %c0_35 = arith.constant 0 : index
    %103 = vector.load %arg5[%c16, %c0_35] : memref<80x512xf32, #tpu.memory_space<vmem>>, vector<8x512xf32>
    %104 = arith.addf %103, %84 : vector<8x512xf32>
    %105 = vector.extract_strided_slice %104 {offsets = [0, 0], sizes = [8, 384], strides = [1, 1]} : vector<8x512xf32> to vector<8x384xf32>
    %106 = arith.negf %105 : vector<8x384xf32>
    %107 = math.exp %106 : vector<8x384xf32>
    %cst_36 = arith.constant 1.000000e+00 : f32
    %108 = vector.broadcast %cst_36 : f32 to vector<8x384xf32>
    %109 = arith.addf %108, %107 : vector<8x384xf32>
    %110 = arith.divf %108, %109 : vector<8x384xf32>
    %111 = vector.extract_strided_slice %110 {offsets = [0, 0], sizes = [8, 128], strides = [1, 1]} : vector<8x384xf32> to vector<8x128xf32>
    %112 = vector.extract_strided_slice %110 {offsets = [0, 128], sizes = [8, 128], strides = [1, 1]} : vector<8x384xf32> to vector<8x128xf32>
    %113 = vector.extract_strided_slice %110 {offsets = [0, 256], sizes = [8, 128], strides = [1, 1]} : vector<8x384xf32> to vector<8x128xf32>
    %114 = vector.extract_strided_slice %104 {offsets = [0, 384], sizes = [8, 128], strides = [1, 1]} : vector<8x512xf32> to vector<8x128xf32>
    %115 = math.tanh %114 : vector<8x128xf32>
    %116 = arith.mulf %112, %79 : vector<8x128xf32>
    %117 = arith.mulf %111, %115 : vector<8x128xf32>
    %118 = arith.addf %116, %117 : vector<8x128xf32>
    %119 = math.tanh %118 : vector<8x128xf32>
    %120 = arith.mulf %113, %119 : vector<8x128xf32>
    %121 = tpu.concatenate %120, %102 in 1 : vector<8x128xf32>, vector<8x128xf32> -> vector<8x256xf32>
    %cst_37 = arith.constant dense<0.000000e+00> : vector<8x1024xf32>
    %122 = tpu.matmul %121, %1, %cst_37 {dimension_numbers = #tpu.dot_dimension_numbers<[1], [0], [0], [1], [0, 0, 1, 1], [], []>} : vector<8x256xf32>, vector<256x1024xf32>, vector<8x1024xf32> -> vector<8x1024xf32>
    %123 = vector.extract_strided_slice %122 {offsets = [0, 0], sizes = [8, 512], strides = [1, 1]} : vector<8x1024xf32> to vector<8x512xf32>
    %124 = vector.extract_strided_slice %122 {offsets = [0, 512], sizes = [8, 512], strides = [1, 1]} : vector<8x1024xf32> to vector<8x512xf32>
    %125 = arith.addf %124, %15 : vector<8x512xf32>
    %126 = vector.extract_strided_slice %125 {offsets = [0, 0], sizes = [8, 384], strides = [1, 1]} : vector<8x512xf32> to vector<8x384xf32>
    %127 = arith.negf %126 : vector<8x384xf32>
    %128 = math.exp %127 : vector<8x384xf32>
    %cst_38 = arith.constant 1.000000e+00 : f32
    %129 = vector.broadcast %cst_38 : f32 to vector<8x384xf32>
    %130 = arith.addf %129, %128 : vector<8x384xf32>
    %131 = arith.divf %129, %130 : vector<8x384xf32>
    %132 = vector.extract_strided_slice %131 {offsets = [0, 0], sizes = [8, 128], strides = [1, 1]} : vector<8x384xf32> to vector<8x128xf32>
    %133 = vector.extract_strided_slice %131 {offsets = [0, 128], sizes = [8, 128], strides = [1, 1]} : vector<8x384xf32> to vector<8x128xf32>
    %134 = vector.extract_strided_slice %131 {offsets = [0, 256], sizes = [8, 128], strides = [1, 1]} : vector<8x384xf32> to vector<8x128xf32>
    %135 = vector.extract_strided_slice %125 {offsets = [0, 384], sizes = [8, 128], strides = [1, 1]} : vector<8x512xf32> to vector<8x128xf32>
    %136 = math.tanh %135 : vector<8x128xf32>
    %137 = arith.mulf %133, %100 : vector<8x128xf32>
    %138 = arith.mulf %132, %136 : vector<8x128xf32>
    %139 = arith.addf %137, %138 : vector<8x128xf32>
    %140 = math.tanh %139 : vector<8x128xf32>
    %141 = arith.mulf %134, %140 : vector<8x128xf32>
    %c24 = arith.constant 24 : index
    %c0_39 = arith.constant 0 : index
    %142 = vector.load %arg5[%c24, %c0_39] : memref<80x512xf32, #tpu.memory_space<vmem>>, vector<8x512xf32>
    %143 = arith.addf %142, %123 : vector<8x512xf32>
    %144 = vector.extract_strided_slice %143 {offsets = [0, 0], sizes = [8, 384], strides = [1, 1]} : vector<8x512xf32> to vector<8x384xf32>
    %145 = arith.negf %144 : vector<8x384xf32>
    %146 = math.exp %145 : vector<8x384xf32>
    %cst_40 = arith.constant 1.000000e+00 : f32
    %147 = vector.broadcast %cst_40 : f32 to vector<8x384xf32>
    %148 = arith.addf %147, %146 : vector<8x384xf32>
    %149 = arith.divf %147, %148 : vector<8x384xf32>
    %150 = vector.extract_strided_slice %149 {offsets = [0, 0], sizes = [8, 128], strides = [1, 1]} : vector<8x384xf32> to vector<8x128xf32>
    %151 = vector.extract_strided_slice %149 {offsets = [0, 128], sizes = [8, 128], strides = [1, 1]} : vector<8x384xf32> to vector<8x128xf32>
    %152 = vector.extract_strided_slice %149 {offsets = [0, 256], sizes = [8, 128], strides = [1, 1]} : vector<8x384xf32> to vector<8x128xf32>
    %153 = vector.extract_strided_slice %143 {offsets = [0, 384], sizes = [8, 128], strides = [1, 1]} : vector<8x512xf32> to vector<8x128xf32>
    %154 = math.tanh %153 : vector<8x128xf32>
    %155 = arith.mulf %151, %118 : vector<8x128xf32>
    %156 = arith.mulf %150, %154 : vector<8x128xf32>
    %157 = arith.addf %155, %156 : vector<8x128xf32>
    %158 = math.tanh %157 : vector<8x128xf32>
    %159 = arith.mulf %152, %158 : vector<8x128xf32>
    %160 = tpu.concatenate %159, %141 in 1 : vector<8x128xf32>, vector<8x128xf32> -> vector<8x256xf32>
    %cst_41 = arith.constant dense<0.000000e+00> : vector<8x1024xf32>
    %161 = tpu.matmul %160, %1, %cst_41 {dimension_numbers = #tpu.dot_dimension_numbers<[1], [0], [0], [1], [0, 0, 1, 1], [], []>} : vector<8x256xf32>, vector<256x1024xf32>, vector<8x1024xf32> -> vector<8x1024xf32>
    %162 = vector.extract_strided_slice %161 {offsets = [0, 0], sizes = [8, 512], strides = [1, 1]} : vector<8x1024xf32> to vector<8x512xf32>
    %163 = vector.extract_strided_slice %161 {offsets = [0, 512], sizes = [8, 512], strides = [1, 1]} : vector<8x1024xf32> to vector<8x512xf32>
    %164 = arith.addf %163, %15 : vector<8x512xf32>
    %165 = vector.extract_strided_slice %164 {offsets = [0, 0], sizes = [8, 384], strides = [1, 1]} : vector<8x512xf32> to vector<8x384xf32>
    %166 = arith.negf %165 : vector<8x384xf32>
    %167 = math.exp %166 : vector<8x384xf32>
    %cst_42 = arith.constant 1.000000e+00 : f32
    %168 = vector.broadcast %cst_42 : f32 to vector<8x384xf32>
    %169 = arith.addf %168, %167 : vector<8x384xf32>
    %170 = arith.divf %168, %169 : vector<8x384xf32>
    %171 = vector.extract_strided_slice %170 {offsets = [0, 0], sizes = [8, 128], strides = [1, 1]} : vector<8x384xf32> to vector<8x128xf32>
    %172 = vector.extract_strided_slice %170 {offsets = [0, 128], sizes = [8, 128], strides = [1, 1]} : vector<8x384xf32> to vector<8x128xf32>
    %173 = vector.extract_strided_slice %170 {offsets = [0, 256], sizes = [8, 128], strides = [1, 1]} : vector<8x384xf32> to vector<8x128xf32>
    %174 = vector.extract_strided_slice %164 {offsets = [0, 384], sizes = [8, 128], strides = [1, 1]} : vector<8x512xf32> to vector<8x128xf32>
    %175 = math.tanh %174 : vector<8x128xf32>
    %176 = arith.mulf %172, %139 : vector<8x128xf32>
    %177 = arith.mulf %171, %175 : vector<8x128xf32>
    %178 = arith.addf %176, %177 : vector<8x128xf32>
    %179 = math.tanh %178 : vector<8x128xf32>
    %180 = arith.mulf %173, %179 : vector<8x128xf32>
    %c32 = arith.constant 32 : index
    %c0_43 = arith.constant 0 : index
    %181 = vector.load %arg5[%c32, %c0_43] : memref<80x512xf32, #tpu.memory_space<vmem>>, vector<8x512xf32>
    %182 = arith.addf %181, %162 : vector<8x512xf32>
    %183 = vector.extract_strided_slice %182 {offsets = [0, 0], sizes = [8, 384], strides = [1, 1]} : vector<8x512xf32> to vector<8x384xf32>
    %184 = arith.negf %183 : vector<8x384xf32>
    %185 = math.exp %184 : vector<8x384xf32>
    %cst_44 = arith.constant 1.000000e+00 : f32
    %186 = vector.broadcast %cst_44 : f32 to vector<8x384xf32>
    %187 = arith.addf %186, %185 : vector<8x384xf32>
    %188 = arith.divf %186, %187 : vector<8x384xf32>
    %189 = vector.extract_strided_slice %188 {offsets = [0, 0], sizes = [8, 128], strides = [1, 1]} : vector<8x384xf32> to vector<8x128xf32>
    %190 = vector.extract_strided_slice %188 {offsets = [0, 128], sizes = [8, 128], strides = [1, 1]} : vector<8x384xf32> to vector<8x128xf32>
    %191 = vector.extract_strided_slice %188 {offsets = [0, 256], sizes = [8, 128], strides = [1, 1]} : vector<8x384xf32> to vector<8x128xf32>
    %192 = vector.extract_strided_slice %182 {offsets = [0, 384], sizes = [8, 128], strides = [1, 1]} : vector<8x512xf32> to vector<8x128xf32>
    %193 = math.tanh %192 : vector<8x128xf32>
    %194 = arith.mulf %190, %157 : vector<8x128xf32>
    %195 = arith.mulf %189, %193 : vector<8x128xf32>
    %196 = arith.addf %194, %195 : vector<8x128xf32>
    %197 = math.tanh %196 : vector<8x128xf32>
    %198 = arith.mulf %191, %197 : vector<8x128xf32>
    %199 = tpu.concatenate %198, %180 in 1 : vector<8x128xf32>, vector<8x128xf32> -> vector<8x256xf32>
    %cst_45 = arith.constant dense<0.000000e+00> : vector<8x1024xf32>
    %200 = tpu.matmul %199, %1, %cst_45 {dimension_numbers = #tpu.dot_dimension_numbers<[1], [0], [0], [1], [0, 0, 1, 1], [], []>} : vector<8x256xf32>, vector<256x1024xf32>, vector<8x1024xf32> -> vector<8x1024xf32>
    %201 = vector.extract_strided_slice %200 {offsets = [0, 0], sizes = [8, 512], strides = [1, 1]} : vector<8x1024xf32> to vector<8x512xf32>
    %202 = vector.extract_strided_slice %200 {offsets = [0, 512], sizes = [8, 512], strides = [1, 1]} : vector<8x1024xf32> to vector<8x512xf32>
    %203 = arith.addf %202, %15 : vector<8x512xf32>
    %204 = vector.extract_strided_slice %203 {offsets = [0, 0], sizes = [8, 384], strides = [1, 1]} : vector<8x512xf32> to vector<8x384xf32>
    %205 = arith.negf %204 : vector<8x384xf32>
    %206 = math.exp %205 : vector<8x384xf32>
    %cst_46 = arith.constant 1.000000e+00 : f32
    %207 = vector.broadcast %cst_46 : f32 to vector<8x384xf32>
    %208 = arith.addf %207, %206 : vector<8x384xf32>
    %209 = arith.divf %207, %208 : vector<8x384xf32>
    %210 = vector.extract_strided_slice %209 {offsets = [0, 0], sizes = [8, 128], strides = [1, 1]} : vector<8x384xf32> to vector<8x128xf32>
    %211 = vector.extract_strided_slice %209 {offsets = [0, 128], sizes = [8, 128], strides = [1, 1]} : vector<8x384xf32> to vector<8x128xf32>
    %212 = vector.extract_strided_slice %209 {offsets = [0, 256], sizes = [8, 128], strides = [1, 1]} : vector<8x384xf32> to vector<8x128xf32>
    %213 = vector.extract_strided_slice %203 {offsets = [0, 384], sizes = [8, 128], strides = [1, 1]} : vector<8x512xf32> to vector<8x128xf32>
    %214 = math.tanh %213 : vector<8x128xf32>
    %215 = arith.mulf %211, %178 : vector<8x128xf32>
    %216 = arith.mulf %210, %214 : vector<8x128xf32>
    %217 = arith.addf %215, %216 : vector<8x128xf32>
    %218 = math.tanh %217 : vector<8x128xf32>
    %219 = arith.mulf %212, %218 : vector<8x128xf32>
    %c40 = arith.constant 40 : index
    %c0_47 = arith.constant 0 : index
    %220 = vector.load %arg5[%c40, %c0_47] : memref<80x512xf32, #tpu.memory_space<vmem>>, vector<8x512xf32>
    %221 = arith.addf %220, %201 : vector<8x512xf32>
    %222 = vector.extract_strided_slice %221 {offsets = [0, 0], sizes = [8, 384], strides = [1, 1]} : vector<8x512xf32> to vector<8x384xf32>
    %223 = arith.negf %222 : vector<8x384xf32>
    %224 = math.exp %223 : vector<8x384xf32>
    %cst_48 = arith.constant 1.000000e+00 : f32
    %225 = vector.broadcast %cst_48 : f32 to vector<8x384xf32>
    %226 = arith.addf %225, %224 : vector<8x384xf32>
    %227 = arith.divf %225, %226 : vector<8x384xf32>
    %228 = vector.extract_strided_slice %227 {offsets = [0, 0], sizes = [8, 128], strides = [1, 1]} : vector<8x384xf32> to vector<8x128xf32>
    %229 = vector.extract_strided_slice %227 {offsets = [0, 128], sizes = [8, 128], strides = [1, 1]} : vector<8x384xf32> to vector<8x128xf32>
    %230 = vector.extract_strided_slice %227 {offsets = [0, 256], sizes = [8, 128], strides = [1, 1]} : vector<8x384xf32> to vector<8x128xf32>
    %231 = vector.extract_strided_slice %221 {offsets = [0, 384], sizes = [8, 128], strides = [1, 1]} : vector<8x512xf32> to vector<8x128xf32>
    %232 = math.tanh %231 : vector<8x128xf32>
    %233 = arith.mulf %229, %196 : vector<8x128xf32>
    %234 = arith.mulf %228, %232 : vector<8x128xf32>
    %235 = arith.addf %233, %234 : vector<8x128xf32>
    %236 = math.tanh %235 : vector<8x128xf32>
    %237 = arith.mulf %230, %236 : vector<8x128xf32>
    %238 = tpu.concatenate %237, %219 in 1 : vector<8x128xf32>, vector<8x128xf32> -> vector<8x256xf32>
    %cst_49 = arith.constant dense<0.000000e+00> : vector<8x1024xf32>
    %239 = tpu.matmul %238, %1, %cst_49 {dimension_numbers = #tpu.dot_dimension_numbers<[1], [0], [0], [1], [0, 0, 1, 1], [], []>} : vector<8x256xf32>, vector<256x1024xf32>, vector<8x1024xf32> -> vector<8x1024xf32>
    %240 = vector.extract_strided_slice %239 {offsets = [0, 0], sizes = [8, 512], strides = [1, 1]} : vector<8x1024xf32> to vector<8x512xf32>
    %241 = vector.extract_strided_slice %239 {offsets = [0, 512], sizes = [8, 512], strides = [1, 1]} : vector<8x1024xf32> to vector<8x512xf32>
    %242 = arith.addf %241, %15 : vector<8x512xf32>
    %243 = vector.extract_strided_slice %242 {offsets = [0, 0], sizes = [8, 384], strides = [1, 1]} : vector<8x512xf32> to vector<8x384xf32>
    %244 = arith.negf %243 : vector<8x384xf32>
    %245 = math.exp %244 : vector<8x384xf32>
    %cst_50 = arith.constant 1.000000e+00 : f32
    %246 = vector.broadcast %cst_50 : f32 to vector<8x384xf32>
    %247 = arith.addf %246, %245 : vector<8x384xf32>
    %248 = arith.divf %246, %247 : vector<8x384xf32>
    %249 = vector.extract_strided_slice %248 {offsets = [0, 0], sizes = [8, 128], strides = [1, 1]} : vector<8x384xf32> to vector<8x128xf32>
    %250 = vector.extract_strided_slice %248 {offsets = [0, 128], sizes = [8, 128], strides = [1, 1]} : vector<8x384xf32> to vector<8x128xf32>
    %251 = vector.extract_strided_slice %248 {offsets = [0, 256], sizes = [8, 128], strides = [1, 1]} : vector<8x384xf32> to vector<8x128xf32>
    %252 = vector.extract_strided_slice %242 {offsets = [0, 384], sizes = [8, 128], strides = [1, 1]} : vector<8x512xf32> to vector<8x128xf32>
    %253 = math.tanh %252 : vector<8x128xf32>
    %254 = arith.mulf %250, %217 : vector<8x128xf32>
    %255 = arith.mulf %249, %253 : vector<8x128xf32>
    %256 = arith.addf %254, %255 : vector<8x128xf32>
    %257 = math.tanh %256 : vector<8x128xf32>
    %258 = arith.mulf %251, %257 : vector<8x128xf32>
    %c48 = arith.constant 48 : index
    %c0_51 = arith.constant 0 : index
    %259 = vector.load %arg5[%c48, %c0_51] : memref<80x512xf32, #tpu.memory_space<vmem>>, vector<8x512xf32>
    %260 = arith.addf %259, %240 : vector<8x512xf32>
    %261 = vector.extract_strided_slice %260 {offsets = [0, 0], sizes = [8, 384], strides = [1, 1]} : vector<8x512xf32> to vector<8x384xf32>
    %262 = arith.negf %261 : vector<8x384xf32>
    %263 = math.exp %262 : vector<8x384xf32>
    %cst_52 = arith.constant 1.000000e+00 : f32
    %264 = vector.broadcast %cst_52 : f32 to vector<8x384xf32>
    %265 = arith.addf %264, %263 : vector<8x384xf32>
    %266 = arith.divf %264, %265 : vector<8x384xf32>
    %267 = vector.extract_strided_slice %266 {offsets = [0, 0], sizes = [8, 128], strides = [1, 1]} : vector<8x384xf32> to vector<8x128xf32>
    %268 = vector.extract_strided_slice %266 {offsets = [0, 128], sizes = [8, 128], strides = [1, 1]} : vector<8x384xf32> to vector<8x128xf32>
    %269 = vector.extract_strided_slice %266 {offsets = [0, 256], sizes = [8, 128], strides = [1, 1]} : vector<8x384xf32> to vector<8x128xf32>
    %270 = vector.extract_strided_slice %260 {offsets = [0, 384], sizes = [8, 128], strides = [1, 1]} : vector<8x512xf32> to vector<8x128xf32>
    %271 = math.tanh %270 : vector<8x128xf32>
    %272 = arith.mulf %268, %235 : vector<8x128xf32>
    %273 = arith.mulf %267, %271 : vector<8x128xf32>
    %274 = arith.addf %272, %273 : vector<8x128xf32>
    %275 = math.tanh %274 : vector<8x128xf32>
    %276 = arith.mulf %269, %275 : vector<8x128xf32>
    %277 = tpu.concatenate %276, %258 in 1 : vector<8x128xf32>, vector<8x128xf32> -> vector<8x256xf32>
    %cst_53 = arith.constant dense<0.000000e+00> : vector<8x1024xf32>
    %278 = tpu.matmul %277, %1, %cst_53 {dimension_numbers = #tpu.dot_dimension_numbers<[1], [0], [0], [1], [0, 0, 1, 1], [], []>} : vector<8x256xf32>, vector<256x1024xf32>, vector<8x1024xf32> -> vector<8x1024xf32>
    %279 = vector.extract_strided_slice %278 {offsets = [0, 0], sizes = [8, 512], strides = [1, 1]} : vector<8x1024xf32> to vector<8x512xf32>
    %280 = vector.extract_strided_slice %278 {offsets = [0, 512], sizes = [8, 512], strides = [1, 1]} : vector<8x1024xf32> to vector<8x512xf32>
    %281 = arith.addf %280, %15 : vector<8x512xf32>
    %282 = vector.extract_strided_slice %281 {offsets = [0, 0], sizes = [8, 384], strides = [1, 1]} : vector<8x512xf32> to vector<8x384xf32>
    %283 = arith.negf %282 : vector<8x384xf32>
    %284 = math.exp %283 : vector<8x384xf32>
    %cst_54 = arith.constant 1.000000e+00 : f32
    %285 = vector.broadcast %cst_54 : f32 to vector<8x384xf32>
    %286 = arith.addf %285, %284 : vector<8x384xf32>
    %287 = arith.divf %285, %286 : vector<8x384xf32>
    %288 = vector.extract_strided_slice %287 {offsets = [0, 0], sizes = [8, 128], strides = [1, 1]} : vector<8x384xf32> to vector<8x128xf32>
    %289 = vector.extract_strided_slice %287 {offsets = [0, 128], sizes = [8, 128], strides = [1, 1]} : vector<8x384xf32> to vector<8x128xf32>
    %290 = vector.extract_strided_slice %287 {offsets = [0, 256], sizes = [8, 128], strides = [1, 1]} : vector<8x384xf32> to vector<8x128xf32>
    %291 = vector.extract_strided_slice %281 {offsets = [0, 384], sizes = [8, 128], strides = [1, 1]} : vector<8x512xf32> to vector<8x128xf32>
    %292 = math.tanh %291 : vector<8x128xf32>
    %293 = arith.mulf %289, %256 : vector<8x128xf32>
    %294 = arith.mulf %288, %292 : vector<8x128xf32>
    %295 = arith.addf %293, %294 : vector<8x128xf32>
    %296 = math.tanh %295 : vector<8x128xf32>
    %297 = arith.mulf %290, %296 : vector<8x128xf32>
    %c56 = arith.constant 56 : index
    %c0_55 = arith.constant 0 : index
    %298 = vector.load %arg5[%c56, %c0_55] : memref<80x512xf32, #tpu.memory_space<vmem>>, vector<8x512xf32>
    %299 = arith.addf %298, %279 : vector<8x512xf32>
    %300 = vector.extract_strided_slice %299 {offsets = [0, 0], sizes = [8, 384], strides = [1, 1]} : vector<8x512xf32> to vector<8x384xf32>
    %301 = arith.negf %300 : vector<8x384xf32>
    %302 = math.exp %301 : vector<8x384xf32>
    %cst_56 = arith.constant 1.000000e+00 : f32
    %303 = vector.broadcast %cst_56 : f32 to vector<8x384xf32>
    %304 = arith.addf %303, %302 : vector<8x384xf32>
    %305 = arith.divf %303, %304 : vector<8x384xf32>
    %306 = vector.extract_strided_slice %305 {offsets = [0, 0], sizes = [8, 128], strides = [1, 1]} : vector<8x384xf32> to vector<8x128xf32>
    %307 = vector.extract_strided_slice %305 {offsets = [0, 128], sizes = [8, 128], strides = [1, 1]} : vector<8x384xf32> to vector<8x128xf32>
    %308 = vector.extract_strided_slice %305 {offsets = [0, 256], sizes = [8, 128], strides = [1, 1]} : vector<8x384xf32> to vector<8x128xf32>
    %309 = vector.extract_strided_slice %299 {offsets = [0, 384], sizes = [8, 128], strides = [1, 1]} : vector<8x512xf32> to vector<8x128xf32>
    %310 = math.tanh %309 : vector<8x128xf32>
    %311 = arith.mulf %307, %274 : vector<8x128xf32>
    %312 = arith.mulf %306, %310 : vector<8x128xf32>
    %313 = arith.addf %311, %312 : vector<8x128xf32>
    %314 = math.tanh %313 : vector<8x128xf32>
    %315 = arith.mulf %308, %314 : vector<8x128xf32>
    %316 = tpu.concatenate %315, %297 in 1 : vector<8x128xf32>, vector<8x128xf32> -> vector<8x256xf32>
    %cst_57 = arith.constant dense<0.000000e+00> : vector<8x1024xf32>
    %317 = tpu.matmul %316, %1, %cst_57 {dimension_numbers = #tpu.dot_dimension_numbers<[1], [0], [0], [1], [0, 0, 1, 1], [], []>} : vector<8x256xf32>, vector<256x1024xf32>, vector<8x1024xf32> -> vector<8x1024xf32>
    %318 = vector.extract_strided_slice %317 {offsets = [0, 0], sizes = [8, 512], strides = [1, 1]} : vector<8x1024xf32> to vector<8x512xf32>
    %319 = vector.extract_strided_slice %317 {offsets = [0, 512], sizes = [8, 512], strides = [1, 1]} : vector<8x1024xf32> to vector<8x512xf32>
    %320 = arith.addf %319, %15 : vector<8x512xf32>
    %321 = vector.extract_strided_slice %320 {offsets = [0, 0], sizes = [8, 384], strides = [1, 1]} : vector<8x512xf32> to vector<8x384xf32>
    %322 = arith.negf %321 : vector<8x384xf32>
    %323 = math.exp %322 : vector<8x384xf32>
    %cst_58 = arith.constant 1.000000e+00 : f32
    %324 = vector.broadcast %cst_58 : f32 to vector<8x384xf32>
    %325 = arith.addf %324, %323 : vector<8x384xf32>
    %326 = arith.divf %324, %325 : vector<8x384xf32>
    %327 = vector.extract_strided_slice %326 {offsets = [0, 0], sizes = [8, 128], strides = [1, 1]} : vector<8x384xf32> to vector<8x128xf32>
    %328 = vector.extract_strided_slice %326 {offsets = [0, 128], sizes = [8, 128], strides = [1, 1]} : vector<8x384xf32> to vector<8x128xf32>
    %329 = vector.extract_strided_slice %326 {offsets = [0, 256], sizes = [8, 128], strides = [1, 1]} : vector<8x384xf32> to vector<8x128xf32>
    %330 = vector.extract_strided_slice %320 {offsets = [0, 384], sizes = [8, 128], strides = [1, 1]} : vector<8x512xf32> to vector<8x128xf32>
    %331 = math.tanh %330 : vector<8x128xf32>
    %332 = arith.mulf %328, %295 : vector<8x128xf32>
    %333 = arith.mulf %327, %331 : vector<8x128xf32>
    %334 = arith.addf %332, %333 : vector<8x128xf32>
    %335 = math.tanh %334 : vector<8x128xf32>
    %336 = arith.mulf %329, %335 : vector<8x128xf32>
    %c64 = arith.constant 64 : index
    %c0_59 = arith.constant 0 : index
    %337 = vector.load %arg5[%c64, %c0_59] : memref<80x512xf32, #tpu.memory_space<vmem>>, vector<8x512xf32>
    %338 = arith.addf %337, %318 : vector<8x512xf32>
    %339 = vector.extract_strided_slice %338 {offsets = [0, 0], sizes = [8, 384], strides = [1, 1]} : vector<8x512xf32> to vector<8x384xf32>
    %340 = arith.negf %339 : vector<8x384xf32>
    %341 = math.exp %340 : vector<8x384xf32>
    %cst_60 = arith.constant 1.000000e+00 : f32
    %342 = vector.broadcast %cst_60 : f32 to vector<8x384xf32>
    %343 = arith.addf %342, %341 : vector<8x384xf32>
    %344 = arith.divf %342, %343 : vector<8x384xf32>
    %345 = vector.extract_strided_slice %344 {offsets = [0, 0], sizes = [8, 128], strides = [1, 1]} : vector<8x384xf32> to vector<8x128xf32>
    %346 = vector.extract_strided_slice %344 {offsets = [0, 128], sizes = [8, 128], strides = [1, 1]} : vector<8x384xf32> to vector<8x128xf32>
    %347 = vector.extract_strided_slice %344 {offsets = [0, 256], sizes = [8, 128], strides = [1, 1]} : vector<8x384xf32> to vector<8x128xf32>
    %348 = vector.extract_strided_slice %338 {offsets = [0, 384], sizes = [8, 128], strides = [1, 1]} : vector<8x512xf32> to vector<8x128xf32>
    %349 = math.tanh %348 : vector<8x128xf32>
    %350 = arith.mulf %346, %313 : vector<8x128xf32>
    %351 = arith.mulf %345, %349 : vector<8x128xf32>
    %352 = arith.addf %350, %351 : vector<8x128xf32>
    %353 = math.tanh %352 : vector<8x128xf32>
    %354 = arith.mulf %347, %353 : vector<8x128xf32>
    %355 = tpu.concatenate %354, %336 in 1 : vector<8x128xf32>, vector<8x128xf32> -> vector<8x256xf32>
    %cst_61 = arith.constant dense<0.000000e+00> : vector<8x1024xf32>
    %356 = tpu.matmul %355, %1, %cst_61 {dimension_numbers = #tpu.dot_dimension_numbers<[1], [0], [0], [1], [0, 0, 1, 1], [], []>} : vector<8x256xf32>, vector<256x1024xf32>, vector<8x1024xf32> -> vector<8x1024xf32>
    %357 = vector.extract_strided_slice %356 {offsets = [0, 0], sizes = [8, 512], strides = [1, 1]} : vector<8x1024xf32> to vector<8x512xf32>
    %358 = vector.extract_strided_slice %356 {offsets = [0, 512], sizes = [8, 512], strides = [1, 1]} : vector<8x1024xf32> to vector<8x512xf32>
    %359 = arith.addf %358, %15 : vector<8x512xf32>
    %360 = vector.extract_strided_slice %359 {offsets = [0, 0], sizes = [8, 384], strides = [1, 1]} : vector<8x512xf32> to vector<8x384xf32>
    %361 = arith.negf %360 : vector<8x384xf32>
    %362 = math.exp %361 : vector<8x384xf32>
    %cst_62 = arith.constant 1.000000e+00 : f32
    %363 = vector.broadcast %cst_62 : f32 to vector<8x384xf32>
    %364 = arith.addf %363, %362 : vector<8x384xf32>
    %365 = arith.divf %363, %364 : vector<8x384xf32>
    %366 = vector.extract_strided_slice %365 {offsets = [0, 0], sizes = [8, 128], strides = [1, 1]} : vector<8x384xf32> to vector<8x128xf32>
    %367 = vector.extract_strided_slice %365 {offsets = [0, 128], sizes = [8, 128], strides = [1, 1]} : vector<8x384xf32> to vector<8x128xf32>
    %368 = vector.extract_strided_slice %365 {offsets = [0, 256], sizes = [8, 128], strides = [1, 1]} : vector<8x384xf32> to vector<8x128xf32>
    %369 = vector.extract_strided_slice %359 {offsets = [0, 384], sizes = [8, 128], strides = [1, 1]} : vector<8x512xf32> to vector<8x128xf32>
    %370 = math.tanh %369 : vector<8x128xf32>
    %371 = arith.mulf %367, %334 : vector<8x128xf32>
    %372 = arith.mulf %366, %370 : vector<8x128xf32>
    %373 = arith.addf %371, %372 : vector<8x128xf32>
    %374 = math.tanh %373 : vector<8x128xf32>
    %375 = arith.mulf %368, %374 : vector<8x128xf32>
    %c72 = arith.constant 72 : index
    %c0_63 = arith.constant 0 : index
    %376 = vector.load %arg5[%c72, %c0_63] : memref<80x512xf32, #tpu.memory_space<vmem>>, vector<8x512xf32>
    %377 = arith.addf %376, %357 : vector<8x512xf32>
    %378 = vector.extract_strided_slice %377 {offsets = [0, 0], sizes = [8, 384], strides = [1, 1]} : vector<8x512xf32> to vector<8x384xf32>
    %379 = arith.negf %378 : vector<8x384xf32>
    %380 = math.exp %379 : vector<8x384xf32>
    %cst_64 = arith.constant 1.000000e+00 : f32
    %381 = vector.broadcast %cst_64 : f32 to vector<8x384xf32>
    %382 = arith.addf %381, %380 : vector<8x384xf32>
    %383 = arith.divf %381, %382 : vector<8x384xf32>
    %384 = vector.extract_strided_slice %383 {offsets = [0, 0], sizes = [8, 128], strides = [1, 1]} : vector<8x384xf32> to vector<8x128xf32>
    %385 = vector.extract_strided_slice %383 {offsets = [0, 128], sizes = [8, 128], strides = [1, 1]} : vector<8x384xf32> to vector<8x128xf32>
    %386 = vector.extract_strided_slice %383 {offsets = [0, 256], sizes = [8, 128], strides = [1, 1]} : vector<8x384xf32> to vector<8x128xf32>
    %387 = vector.extract_strided_slice %377 {offsets = [0, 384], sizes = [8, 128], strides = [1, 1]} : vector<8x512xf32> to vector<8x128xf32>
    %388 = math.tanh %387 : vector<8x128xf32>
    %389 = arith.mulf %385, %352 : vector<8x128xf32>
    %390 = arith.mulf %384, %388 : vector<8x128xf32>
    %391 = arith.addf %389, %390 : vector<8x128xf32>
    %392 = math.tanh %391 : vector<8x128xf32>
    %393 = arith.mulf %386, %392 : vector<8x128xf32>
    %394 = tpu.concatenate %393, %375 in 1 : vector<8x128xf32>, vector<8x128xf32> -> vector<8x256xf32>
    %cst_65 = arith.constant dense<0.000000e+00> : vector<8x1024xf32>
    %395 = tpu.matmul %394, %1, %cst_65 {dimension_numbers = #tpu.dot_dimension_numbers<[1], [0], [0], [1], [0, 0, 1, 1], [], []>} : vector<8x256xf32>, vector<256x1024xf32>, vector<8x1024xf32> -> vector<8x1024xf32>
    %396 = vector.extract_strided_slice %395 {offsets = [0, 512], sizes = [8, 512], strides = [1, 1]} : vector<8x1024xf32> to vector<8x512xf32>
    %397 = arith.addf %396, %15 : vector<8x512xf32>
    %398 = vector.extract_strided_slice %397 {offsets = [0, 0], sizes = [8, 384], strides = [1, 1]} : vector<8x512xf32> to vector<8x384xf32>
    %399 = arith.negf %398 : vector<8x384xf32>
    %400 = math.exp %399 : vector<8x384xf32>
    %cst_66 = arith.constant 1.000000e+00 : f32
    %401 = vector.broadcast %cst_66 : f32 to vector<8x384xf32>
    %402 = arith.addf %401, %400 : vector<8x384xf32>
    %403 = arith.divf %401, %402 : vector<8x384xf32>
    %404 = vector.extract_strided_slice %403 {offsets = [0, 0], sizes = [8, 128], strides = [1, 1]} : vector<8x384xf32> to vector<8x128xf32>
    %405 = vector.extract_strided_slice %403 {offsets = [0, 128], sizes = [8, 128], strides = [1, 1]} : vector<8x384xf32> to vector<8x128xf32>
    %406 = vector.extract_strided_slice %403 {offsets = [0, 256], sizes = [8, 128], strides = [1, 1]} : vector<8x384xf32> to vector<8x128xf32>
    %407 = vector.extract_strided_slice %397 {offsets = [0, 384], sizes = [8, 128], strides = [1, 1]} : vector<8x512xf32> to vector<8x128xf32>
    %408 = math.tanh %407 : vector<8x128xf32>
    %409 = arith.mulf %405, %373 : vector<8x128xf32>
    %410 = arith.mulf %404, %408 : vector<8x128xf32>
    %411 = arith.addf %409, %410 : vector<8x128xf32>
    %412 = math.tanh %411 : vector<8x128xf32>
    %413 = arith.mulf %406, %412 : vector<8x128xf32>
    %cst_67 = arith.constant dense<0.000000e+00> : vector<8x128xf32>
    %414 = tpu.matmul %413, %2, %cst_67 {dimension_numbers = #tpu.dot_dimension_numbers<[1], [0], [0], [1], [0, 0, 1, 1], [], []>} : vector<8x128xf32>, vector<128x128xf32>, vector<8x128xf32> -> vector<8x128xf32>
    %415 = vector.broadcast %7 : vector<1x128xf32> to vector<8x128xf32>
    %416 = arith.addf %414, %415 : vector<8x128xf32>
    %cst_68 = arith.constant dense<0.000000e+00> : vector<128xf32>
    %417 = vector.multi_reduction <add>, %416, %cst_68 [0] : vector<8x128xf32> to vector<128xf32>
    %418 = vector.shape_cast %417 : vector<128xf32> to vector<1x128xf32>
    %cst_69 = arith.constant 8.000000e+00 : f32
    %419 = vector.broadcast %cst_69 : f32 to vector<1x128xf32>
    %420 = arith.divf %418, %419 : vector<1x128xf32>
    %421 = vector.broadcast %420 : vector<1x128xf32> to vector<8x128xf32>
    %422 = arith.subf %416, %421 : vector<8x128xf32>
    %423 = arith.mulf %422, %422 : vector<8x128xf32>
    %cst_70 = arith.constant dense<0.000000e+00> : vector<128xf32>
    %424 = vector.multi_reduction <add>, %423, %cst_70 [0] : vector<8x128xf32> to vector<128xf32>
    %425 = vector.shape_cast %424 : vector<128xf32> to vector<1x128xf32>
    %cst_71 = arith.constant 8.000000e+00 : f32
    %426 = vector.broadcast %cst_71 : f32 to vector<1x128xf32>
    %427 = arith.divf %425, %426 : vector<1x128xf32>
    %428 = vector.broadcast %420 : vector<1x128xf32> to vector<8x128xf32>
    %429 = arith.subf %416, %428 : vector<8x128xf32>
    %cst_72 = arith.constant 9.99999974E-6 : f32
    %430 = vector.broadcast %cst_72 : f32 to vector<1x128xf32>
    %431 = arith.addf %427, %430 : vector<1x128xf32>
    %432 = math.rsqrt %431 : vector<1x128xf32>
    %433 = vector.broadcast %432 : vector<1x128xf32> to vector<8x128xf32>
    %434 = arith.mulf %429, %433 : vector<8x128xf32>
    %435 = vector.broadcast %8 : vector<1x128xf32> to vector<8x128xf32>
    %436 = arith.mulf %434, %435 : vector<8x128xf32>
    %437 = vector.broadcast %9 : vector<1x128xf32> to vector<8x128xf32>
    %438 = arith.addf %436, %437 : vector<8x128xf32>
    %cst_73 = arith.constant 0.000000e+00 : f32
    %439 = vector.broadcast %cst_73 : f32 to vector<8x128xf32>
    %440 = arith.maximumf %438, %439 : vector<8x128xf32>
    %cst_74 = arith.constant dense<0.000000e+00> : vector<8x128xf32>
    %441 = tpu.matmul %440, %3, %cst_74 {dimension_numbers = #tpu.dot_dimension_numbers<[1], [0], [0], [1], [0, 0, 1, 1], [], []>} : vector<8x128xf32>, vector<128x128xf32>, vector<8x128xf32> -> vector<8x128xf32>
    %442 = vector.broadcast %10 : vector<1x128xf32> to vector<8x128xf32>
    %443 = arith.addf %441, %442 : vector<8x128xf32>
    %cst_75 = arith.constant dense<0.000000e+00> : vector<128xf32>
    %444 = vector.multi_reduction <add>, %443, %cst_75 [0] : vector<8x128xf32> to vector<128xf32>
    %445 = vector.shape_cast %444 : vector<128xf32> to vector<1x128xf32>
    %cst_76 = arith.constant 8.000000e+00 : f32
    %446 = vector.broadcast %cst_76 : f32 to vector<1x128xf32>
    %447 = arith.divf %445, %446 : vector<1x128xf32>
    %448 = vector.broadcast %447 : vector<1x128xf32> to vector<8x128xf32>
    %449 = arith.subf %443, %448 : vector<8x128xf32>
    %450 = arith.mulf %449, %449 : vector<8x128xf32>
    %cst_77 = arith.constant dense<0.000000e+00> : vector<128xf32>
    %451 = vector.multi_reduction <add>, %450, %cst_77 [0] : vector<8x128xf32> to vector<128xf32>
    %452 = vector.shape_cast %451 : vector<128xf32> to vector<1x128xf32>
    %cst_78 = arith.constant 8.000000e+00 : f32
    %453 = vector.broadcast %cst_78 : f32 to vector<1x128xf32>
    %454 = arith.divf %452, %453 : vector<1x128xf32>
    %455 = vector.broadcast %447 : vector<1x128xf32> to vector<8x128xf32>
    %456 = arith.subf %443, %455 : vector<8x128xf32>
    %cst_79 = arith.constant 9.99999974E-6 : f32
    %457 = vector.broadcast %cst_79 : f32 to vector<1x128xf32>
    %458 = arith.addf %454, %457 : vector<1x128xf32>
    %459 = math.rsqrt %458 : vector<1x128xf32>
    %460 = vector.broadcast %459 : vector<1x128xf32> to vector<8x128xf32>
    %461 = arith.mulf %456, %460 : vector<8x128xf32>
    %462 = vector.broadcast %11 : vector<1x128xf32> to vector<8x128xf32>
    %463 = arith.mulf %461, %462 : vector<8x128xf32>
    %464 = vector.broadcast %12 : vector<1x128xf32> to vector<8x128xf32>
    %465 = arith.addf %463, %464 : vector<8x128xf32>
    %cst_80 = arith.constant 0.000000e+00 : f32
    %466 = vector.broadcast %cst_80 : f32 to vector<8x128xf32>
    %467 = arith.maximumf %465, %466 : vector<8x128xf32>
    %cst_81 = arith.constant dense<0.000000e+00> : vector<8x128xf32>
    %468 = tpu.matmul %467, %4, %cst_81 {dimension_numbers = #tpu.dot_dimension_numbers<[1], [0], [0], [1], [0, 0, 1, 1], [], []>} : vector<8x128xf32>, vector<128x128xf32>, vector<8x128xf32> -> vector<8x128xf32>
    %469 = vector.extract_strided_slice %468 {offsets = [0, 0], sizes = [8, 1], strides = [1, 1]} : vector<8x128xf32> to vector<8x1xf32>
    %470 = vector.broadcast %13 : vector<1x1xf32> to vector<8x1xf32>
    %471 = arith.addf %469, %470 : vector<8x1xf32>
    %c0_82 = arith.constant 0 : index
    %c0_83 = arith.constant 0 : index
    %472 = vector.load %arg4[%c0_82, %c0_83] : memref<8x1xf32, #tpu.memory_space<vmem>>, vector<8x1xf32>
    tpu.vector_store %arg4[%c0_82, %c0_83], %471 {strides = array<i32>} : memref<8x1xf32, #tpu.memory_space<vmem>>, vector<8x1xf32>,
    return
  }
}

</mosaic_0001>

<llo_original>
// kernel: tpu_custom_call.1
$region0: #{tpu_custom_call.1}
  #allocation0 [shape = 'u32[]', space=smem, size = 0x4, offset = 0x4, fixed_abs, tag = 'smem constant byte address 0x4 - core index']
  #allocation1 [shape = 'u32[144,128]{1,0:T(1,128)}', space=vmem, size = 0x12000, scoped, tag = 'internal scratch']
  #allocation2 [shape = 'f32[80,512]{1,0:T(8,128)}', space=vmem, size = 0x28000, scoped, tag = 'scratch operand']
  %s0 = inlined_call_operand.vmem [shape: f32[80,8], index: 0, kind: input, shape index: {}]
  %s1 = inlined_call_operand.hbm [shape: f32[264,1024], index: 1, kind: input, shape index: {}]
  %s2 = inlined_call_operand.hbm [shape: f32[384,128], index: 2, kind: input, shape index: {}]
  %s3 = inlined_call_operand.hbm [shape: f32[9,512], index: 3, kind: input, shape index: {}]
  %s4 = inlined_call_operand.vmem [shape: f32[8,1], index: 4, kind: output, shape index: {}]
  %s5 = sld [smem:[#allocation0]]
  $region38: #{tpu_custom_call.1} parent=0
    _
  %s7 = ssub.s32 1, %s5
  %s8 = scalar_select 0, %s7, %s5
  $region1: #{tpu_custom_call.1} parent=0
    #allocation3 [shape = 'u8[1081344]{0}', space=vmem, size = 0x108000, scoped, tag = 'input window, operand 1, single buffered']
    #allocation4 [shape = 's32[1]{0}', space=sflag, size = 0x4, scoped, tag = 'scoped memory for tpu_custom_call.1']
    #allocation5 [shape = 'u8[196608]{0}', space=vmem, size = 0x30000, scoped, tag = 'input window, operand 2, single buffered']
    #allocation6 [shape = 's32[1]{0}', space=sflag, size = 0x4, scoped, tag = 'scoped memory for tpu_custom_call.1']
    #allocation7 [shape = 'u8[32768]{0}', space=vmem, size = 0x8000, scoped, tag = 'input window, operand 3, single buffered']
    %9 = vsyncpa [#allocation4], 0
    %10 = vsyncpa [#allocation6], 0
    // Predicated region
    $region2: #{tpu_custom_call.1} parent=1 // pred_check
      _
    $region3: #{tpu_custom_call.1} parent=1 // pred_check_branch
      %12 = sbr.rel (0) target = $region5
    $region4: #{tpu_custom_call.1} parent=1 // pred_region
      _
    $region5: #{tpu_custom_call.1} parent=1 // pred_fallthru
      _
    // Predicated region
    $region6: #{tpu_custom_call.1} parent=1 // pred_check
      _
    $region7: #{tpu_custom_call.1} parent=1 // pred_check_branch
      %14 = sbr.rel (0) target = $region9
    $region8: #{tpu_custom_call.1} parent=1 // pred_region
      %s16 = ssub.s32 33792, 33792
      %17 = vsyncadd [#allocation4], %s16
      %s18 = sshll.u32 [#allocation3], 4
      %s19 = int_to_ptr.vmem [resolvable:$true] %s18
      %24 = dma.hbm_to_vmem [thread:$0]  %s1, 33792, %s19, [#allocation4], 1024, 1024, 64
    $region9: #{tpu_custom_call.1} parent=1 // pred_fallthru
      _
    // Predicated region
    $region10: #{tpu_custom_call.1} parent=1 // pred_check
      _
    $region11: #{tpu_custom_call.1} parent=1 // pred_check_branch
      %26 = sbr.rel (0) target = $region13
    $region12: #{tpu_custom_call.1} parent=1 // pred_region
      %s28 = ssub.s32 6144, 6144
      %29 = vsyncadd [#allocation6], %s28
      %s30 = sshll.u32 [#allocation5], 4
      %s31 = int_to_ptr.vmem [resolvable:$true] %s30
      %36 = dma.hbm_to_vmem [thread:$0]  %s2, 6144, %s31, [#allocation6], 128, 128, 8
    $region13: #{tpu_custom_call.1} parent=1 // pred_fallthru
      _
    // Predicated region
    $region14: #{tpu_custom_call.1} parent=1 // pred_check
      _
    $region15: #{tpu_custom_call.1} parent=1 // pred_check_branch
      %38 = sbr.rel (0) target = $region17
    $region16: #{tpu_custom_call.1} parent=1 // pred_region
      %s40 = ssub.s32 1024, 1024
      %41 = vsyncadd [#allocation6], %s40
      %s42 = sshll.u32 [#allocation7], 4
      %s43 = int_to_ptr.vmem [resolvable:$true] %s42
      %48 = dma.hbm_to_vmem [thread:$0]  %s3, 1024, %s43, [#allocation6], 512, 512, 32
    $region17: #{tpu_custom_call.1} parent=1 // pred_fallthru
      _
    // Predicated region
    $region18: #{tpu_custom_call.1} parent=1 // pred_check
      _
    $region19: #{tpu_custom_call.1} parent=1 // pred_check_branch
      %50 = sbr.rel (0) target = $region21
    $region20: #{tpu_custom_call.1} parent=1 // pred_region
      %51 = dma.done [#allocation4], 33792
    $region21: #{tpu_custom_call.1} parent=1 // pred_fallthru
      _
    // Predicated region
    $region22: #{tpu_custom_call.1} parent=1 // pred_check
      _
    $region23: #{tpu_custom_call.1} parent=1 // pred_check_branch
      %53 = sbr.rel (0) target = $region25
    $region24: #{tpu_custom_call.1} parent=1 // pred_region
      %54 = dma.done [#allocation6], 6144
    $region25: #{tpu_custom_call.1} parent=1 // pred_fallthru
      _
    // Predicated region
    $region26: #{tpu_custom_call.1} parent=1 // pred_check
      _
    $region27: #{tpu_custom_call.1} parent=1 // pred_check_branch
      %56 = sbr.rel (0) target = $region29
    $region28: #{tpu_custom_call.1} parent=1 // pred_region
      %57 = dma.done [#allocation6], 1024
    $region29: #{tpu_custom_call.1} parent=1 // pred_fallthru
      _
    %v58 = vld [vmem:[#allocation3] sm:$0xff]
    %v59 = vld [vmem:[#allocation3 + $0x8] sm:$0xff]
    %v60 = vld [vmem:[#allocation3 + $0x10] sm:$0xff]
    %v61 = vld [vmem:[#allocation3 + $0x18] sm:$0xff]
    %v62 = vld [vmem:[#allocation3 + $0x40] sm:$0xff]
    %v63 = vld [vmem:[#allocation3 + $0x48] sm:$0xff]
    %v64 = vld [vmem:[#allocation3 + $0x50] sm:$0xff]
    %v65 = vld [vmem:[#allocation3 + $0x58] sm:$0xff]
    %v66 = vld [vmem:[#allocation3 + $0x60] sm:$0xff]
    %v67 = vld [vmem:[#allocation3 + $0x68] sm:$0xff]
    %v68 = vld [vmem:[#allocation3 + $0x70] sm:$0xff]
    %v69 = vld [vmem:[#allocation3 + $0x78] sm:$0xff]
    %v70 = vld [vmem:[#allocation3 + $0x80] sm:$0xff]
    %v71 = vld [vmem:[#allocation3 + $0x88] sm:$0xff]
    %v72 = vld [vmem:[#allocation3 + $0x90] sm:$0xff]
    %v73 = vld [vmem:[#allocation3 + $0x98] sm:$0xff]
    %v74 = vld [vmem:[#allocation3 + $0xa0] sm:$0xff]
    %v75 = vld [vmem:[#allocation3 + $0xa8] sm:$0xff]
    %v76 = vld [vmem:[#allocation3 + $0xb0] sm:$0xff]
    %v77 = vld [vmem:[#allocation3 + $0xb8] sm:$0xff]
    %v78 = vld [vmem:[#allocation3 + $0xc0] sm:$0xff]
    %v79 = vld [vmem:[#allocation3 + $0xc8] sm:$0xff]
    %v80 = vld [vmem:[#allocation3 + $0xd0] sm:$0xff]
    %v81 = vld [vmem:[#allocation3 + $0xd8] sm:$0xff]
    %v82 = vld [vmem:[#allocation3 + $0xe0] sm:$0xff]
    %v83 = vld [vmem:[#allocation3 + $0xe8] sm:$0xff]
    %v84 = vld [vmem:[#allocation3 + $0xf0] sm:$0xff]
    %v85 = vld [vmem:[#allocation3 + $0xf8] sm:$0xff]
    %v86 = vld [vmem:[#allocation3 + $0x100] sm:$0xff]
    %v87 = vld [vmem:[#allocation3 + $0x108] sm:$0xff]
    %v88 = vld [vmem:[#allocation3 + $0x110] sm:$0xff]
    %v89 = vld [vmem:[#allocation3 + $0x118] sm:$0xff]
    %v90 = vld [vmem:[#allocation3 + $0x120] sm:$0xff]
    %v91 = vld [vmem:[#allocation3 + $0x128] sm:$0xff]
    %v92 = vld [vmem:[#allocation3 + $0x130] sm:$0xff]
    %v93 = vld [vmem:[#allocation3 + $0x138] sm:$0xff]
    %v94 = vld [vmem:[#allocation3 + $0x140] sm:$0xff]
    %v95 = vld [vmem:[#allocation3 + $0x148] sm:$0xff]
    %v96 = vld [vmem:[#allocation3 + $0x150] sm:$0xff]
    %v97 = vld [vmem:[#allocation3 + $0x158] sm:$0xff]
    %v98 = vld [vmem:[#allocation3 + $0x160] sm:$0xff]
    %v99 = vld [vmem:[#allocation3 + $0x168] sm:$0xff]
    %v100 = vld [vmem:[#allocation3 + $0x170] sm:$0xff]
    %v101 = vld [vmem:[#allocation3 + $0x178] sm:$0xff]
    %v102 = vld [vmem:[#allocation3 + $0x180] sm:$0xff]
    %v103 = vld [vmem:[#allocation3 + $0x188] sm:$0xff]
    %v104 = vld [vmem:[#allocation3 + $0x190] sm:$0xff]
    %v105 = vld [vmem:[#allocation3 + $0x198] sm:$0xff]
    %v106 = vld [vmem:[#allocation3 + $0x1a0] sm:$0xff]
    %v107 = vld [vmem:[#allocation3 + $0x1a8] sm:$0xff]
    %v108 = vld [vmem:[#allocation3 + $0x1b0] sm:$0xff]
    %v109 = vld [vmem:[#allocation3 + $0x1b8] sm:$0xff]
    %v110 = vld [vmem:[#allocation3 + $0x1c0] sm:$0xff]
    %v111 = vld [vmem:[#allocation3 + $0x1c8] sm:$0xff]
    %v112 = vld [vmem:[#allocation3 + $0x1d0] sm:$0xff]
    %v113 = vld [vmem:[#allocation3 + $0x1d8] sm:$0xff]
    %v114 = vld [vmem:[#allocation3 + $0x1e0] sm:$0xff]
    %v115 = vld [vmem:[#allocation3 + $0x1e8] sm:$0xff]
    %v116 = vld [vmem:[#allocation3 + $0x1f0] sm:$0xff]
    %v117 = vld [vmem:[#allocation3 + $0x1f8] sm:$0xff]
    %v118 = vld [vmem:[#allocation3 + $0x200] sm:$0xff]
    %v119 = vld [vmem:[#allocation3 + $0x208] sm:$0xff]
    %v120 = vld [vmem:[#allocation3 + $0x210] sm:$0xff]
    %v121 = vld [vmem:[#allocation3 + $0x218] sm:$0xff]
    %v122 = vld [vmem:[#allocation3 + $0x220] sm:$0xff]
    %v123 = vld [vmem:[#allocation3 + $0x228] sm:$0xff]
    %v124 = vld [vmem:[#allocation3 + $0x230] sm:$0xff]
    %v125 = vld [vmem:[#allocation3 + $0x238] sm:$0xff]
    %v126 = vld [vmem:[#allocation3 + $0x240] sm:$0xff]
    %v127 = vld [vmem:[#allocation3 + $0x248] sm:$0xff]
    %v128 = vld [vmem:[#allocation3 + $0x250] sm:$0xff]
    %v129 = vld [vmem:[#allocation3 + $0x258] sm:$0xff]
    %v130 = vld [vmem:[#allocation3 + $0x260] sm:$0xff]
    %v131 = vld [vmem:[#allocation3 + $0x268] sm:$0xff]
    %v132 = vld [vmem:[#allocation3 + $0x270] sm:$0xff]
    %v133 = vld [vmem:[#allocation3 + $0x278] sm:$0xff]
    %v134 = vld [vmem:[#allocation3 + $0x280] sm:$0xff]
    %v135 = vld [vmem:[#allocation3 + $0x288] sm:$0xff]
    %v136 = vld [vmem:[#allocation3 + $0x290] sm:$0xff]
    %v137 = vld [vmem:[#allocation3 + $0x298] sm:$0xff]
    %v138 = vld [vmem:[#allocation3 + $0x2a0] sm:$0xff]
    %v139 = vld [vmem:[#allocation3 + $0x2a8] sm:$0xff]
    %v140 = vld [vmem:[#allocation3 + $0x2b0] sm:$0xff]
    %v141 = vld [vmem:[#allocation3 + $0x2b8] sm:$0xff]
    %v142 = vld [vmem:[#allocation3 + $0x2c0] sm:$0xff]
    %v143 = vld [vmem:[#allocation3 + $0x2c8] sm:$0xff]
    %v144 = vld [vmem:[#allocation3 + $0x2d0] sm:$0xff]
    %v145 = vld [vmem:[#allocation3 + $0x2d8] sm:$0xff]
    %v146 = vld [vmem:[#allocation3 + $0x2e0] sm:$0xff]
    %v147 = vld [vmem:[#allocation3 + $0x2e8] sm:$0xff]
    %v148 = vld [vmem:[#allocation3 + $0x2f0] sm:$0xff]
    %v149 = vld [vmem:[#allocation3 + $0x2f8] sm:$0xff]
    %v150 = vld [vmem:[#allocation3 + $0x300] sm:$0xff]
    %v151 = vld [vmem:[#allocation3 + $0x308] sm:$0xff]
    %v152 = vld [vmem:[#allocation3 + $0x310] sm:$0xff]
    %v153 = vld [vmem:[#allocation3 + $0x318] sm:$0xff]
    %v154 = vld [vmem:[#allocation3 + $0x320] sm:$0xff]
    %v155 = vld [vmem:[#allocation3 + $0x328] sm:$0xff]
    %v156 = vld [vmem:[#allocation3 + $0x330] sm:$0xff]
    %v157 = vld [vmem:[#allocation3 + $0x338] sm:$0xff]
    %v158 = vld [vmem:[#allocation3 + $0x340] sm:$0xff]
    %v159 = vld [vmem:[#allocation3 + $0x348] sm:$0xff]
    %v160 = vld [vmem:[#allocation3 + $0x350] sm:$0xff]
    %v161 = vld [vmem:[#allocation3 + $0x358] sm:$0xff]
    %v162 = vld [vmem:[#allocation3 + $0x360] sm:$0xff]
    %v163 = vld [vmem:[#allocation3 + $0x368] sm:$0xff]
    %v164 = vld [vmem:[#allocation3 + $0x370] sm:$0xff]
    %v165 = vld [vmem:[#allocation3 + $0x378] sm:$0xff]
    %v166 = vld [vmem:[#allocation3 + $0x380] sm:$0xff]
    %v167 = vld [vmem:[#allocation3 + $0x388] sm:$0xff]
    %v168 = vld [vmem:[#allocation3 + $0x390] sm:$0xff]
    %v169 = vld [vmem:[#allocation3 + $0x398] sm:$0xff]
    %v170 = vld [vmem:[#allocation3 + $0x3a0] sm:$0xff]
    %v171 = vld [vmem:[#allocation3 + $0x3a8] sm:$0xff]
    %v172 = vld [vmem:[#allocation3 + $0x3b0] sm:$0xff]
    %v173 = vld [vmem:[#allocation3 + $0x3b8] sm:$0xff]
    %v174 = vld [vmem:[#allocation3 + $0x3c0] sm:$0xff]
    %v175 = vld [vmem:[#allocation3 + $0x3c8] sm:$0xff]
    %v176 = vld [vmem:[#allocation3 + $0x3d0] sm:$0xff]
    %v177 = vld [vmem:[#allocation3 + $0x3d8] sm:$0xff]
    %v178 = vld [vmem:[#allocation3 + $0x3e0] sm:$0xff]
    %v179 = vld [vmem:[#allocation3 + $0x3e8] sm:$0xff]
    %v180 = vld [vmem:[#allocation3 + $0x3f0] sm:$0xff]
    %v181 = vld [vmem:[#allocation3 + $0x3f8] sm:$0xff]
    %v182 = vld [vmem:[#allocation3 + $0x400] sm:$0xff]
    %v183 = vld [vmem:[#allocation3 + $0x408] sm:$0xff]
    %v184 = vld [vmem:[#allocation3 + $0x410] sm:$0xff]
    %v185 = vld [vmem:[#allocation3 + $0x418] sm:$0xff]
    %v186 = vld [vmem:[#allocation3 + $0x420] sm:$0xff]
    %v187 = vld [vmem:[#allocation3 + $0x428] sm:$0xff]
    %v188 = vld [vmem:[#allocation3 + $0x430] sm:$0xff]
    %v189 = vld [vmem:[#allocation3 + $0x438] sm:$0xff]
    %v190 = vld [vmem:[#allocation3 + $0x440] sm:$0xff]
    %v191 = vld [vmem:[#allocation3 + $0x448] sm:$0xff]
    %v192 = vld [vmem:[#allocation3 + $0x450] sm:$0xff]
    %v193 = vld [vmem:[#allocation3 + $0x458] sm:$0xff]
    %v194 = vld [vmem:[#allocation3 + $0x460] sm:$0xff]
    %v195 = vld [vmem:[#allocation3 + $0x468] sm:$0xff]
    %v196 = vld [vmem:[#allocation3 + $0x470] sm:$0xff]
    %v197 = vld [vmem:[#allocation3 + $0x478] sm:$0xff]
    %v198 = vld [vmem:[#allocation3 + $0x480] sm:$0xff]
    %v199 = vld [vmem:[#allocation3 + $0x488] sm:$0xff]
    %v200 = vld [vmem:[#allocation3 + $0x490] sm:$0xff]
    %v201 = vld [vmem:[#allocation3 + $0x498] sm:$0xff]
    %v202 = vld [vmem:[#allocation3 + $0x4a0] sm:$0xff]
    %v203 = vld [vmem:[#allocation3 + $0x4a8] sm:$0xff]
    %v204 = vld [vmem:[#allocation3 + $0x4b0] sm:$0xff]
    %v205 = vld [vmem:[#allocation3 + $0x4b8] sm:$0xff]
    %v206 = vld [vmem:[#allocation3 + $0x4c0] sm:$0xff]
    %v207 = vld [vmem:[#allocation3 + $0x4c8] sm:$0xff]
    %v208 = vld [vmem:[#allocation3 + $0x4d0] sm:$0xff]
    %v209 = vld [vmem:[#allocation3 + $0x4d8] sm:$0xff]
    %v210 = vld [vmem:[#allocation3 + $0x4e0] sm:$0xff]
    %v211 = vld [vmem:[#allocation3 + $0x4e8] sm:$0xff]
    %v212 = vld [vmem:[#allocation3 + $0x4f0] sm:$0xff]
    %v213 = vld [vmem:[#allocation3 + $0x4f8] sm:$0xff]
    %v214 = vld [vmem:[#allocation3 + $0x500] sm:$0xff]
    %v215 = vld [vmem:[#allocation3 + $0x508] sm:$0xff]
    %v216 = vld [vmem:[#allocation3 + $0x510] sm:$0xff]
    %v217 = vld [vmem:[#allocation3 + $0x518] sm:$0xff]
    %v218 = vld [vmem:[#allocation3 + $0x520] sm:$0xff]
    %v219 = vld [vmem:[#allocation3 + $0x528] sm:$0xff]
    %v220 = vld [vmem:[#allocation3 + $0x530] sm:$0xff]
    %v221 = vld [vmem:[#allocation3 + $0x538] sm:$0xff]
    %v222 = vld [vmem:[#allocation3 + $0x540] sm:$0xff]
    %v223 = vld [vmem:[#allocation3 + $0x548] sm:$0xff]
    %v224 = vld [vmem:[#allocation3 + $0x550] sm:$0xff]
    %v225 = vld [vmem:[#allocation3 + $0x558] sm:$0xff]
    %v226 = vld [vmem:[#allocation3 + $0x560] sm:$0xff]
    %v227 = vld [vmem:[#allocation3 + $0x568] sm:$0xff]
    %v228 = vld [vmem:[#allocation3 + $0x570] sm:$0xff]
    %v229 = vld [vmem:[#allocation3 + $0x578] sm:$0xff]
    %v230 = vld [vmem:[#allocation3 + $0x580] sm:$0xff]
    %v231 = vld [vmem:[#allocation3 + $0x588] sm:$0xff]
    %v232 = vld [vmem:[#allocation3 + $0x590] sm:$0xff]
    %v233 = vld [vmem:[#allocation3 + $0x598] sm:$0xff]
    %v234 = vld [vmem:[#allocation3 + $0x5a0] sm:$0xff]
    %v235 = vld [vmem:[#allocation3 + $0x5a8] sm:$0xff]
    %v236 = vld [vmem:[#allocation3 + $0x5b0] sm:$0xff]
    %v237 = vld [vmem:[#allocation3 + $0x5b8] sm:$0xff]
    %v238 = vld [vmem:[#allocation3 + $0x5c0] sm:$0xff]
    %v239 = vld [vmem:[#allocation3 + $0x5c8] sm:$0xff]
    %v240 = vld [vmem:[#allocation3 + $0x5d0] sm:$0xff]
    %v241 = vld [vmem:[#allocation3 + $0x5d8] sm:$0xff]
    %v242 = vld [vmem:[#allocation3 + $0x5e0] sm:$0xff]
    %v243 = vld [vmem:[#allocation3 + $0x5e8] sm:$0xff]
    %v244 = vld [vmem:[#allocation3 + $0x5f0] sm:$0xff]
    %v245 = vld [vmem:[#allocation3 + $0x5f8] sm:$0xff]
    %v246 = vld [vmem:[#allocation3 + $0x600] sm:$0xff]
    %v247 = vld [vmem:[#allocation3 + $0x608] sm:$0xff]
    %v248 = vld [vmem:[#allocation3 + $0x610] sm:$0xff]
    %v249 = vld [vmem:[#allocation3 + $0x618] sm:$0xff]
    %v250 = vld [vmem:[#allocation3 + $0x620] sm:$0xff]
    %v251 = vld [vmem:[#allocation3 + $0x628] sm:$0xff]
    %v252 = vld [vmem:[#allocation3 + $0x630] sm:$0xff]
    %v253 = vld [vmem:[#allocation3 + $0x638] sm:$0xff]
    %v254 = vld [vmem:[#allocation3 + $0x640] sm:$0xff]
    %v255 = vld [vmem:[#allocation3 + $0x648] sm:$0xff]
    %v256 = vld [vmem:[#allocation3 + $0x650] sm:$0xff]
    %v257 = vld [vmem:[#allocation3 + $0x658] sm:$0xff]
    %v258 = vld [vmem:[#allocation3 + $0x660] sm:$0xff]
    %v259 = vld [vmem:[#allocation3 + $0x668] sm:$0xff]
    %v260 = vld [vmem:[#allocation3 + $0x670] sm:$0xff]
    %v261 = vld [vmem:[#allocation3 + $0x678] sm:$0xff]
    %v262 = vld [vmem:[#allocation3 + $0x680] sm:$0xff]
    %v263 = vld [vmem:[#allocation3 + $0x688] sm:$0xff]
    %v264 = vld [vmem:[#allocation3 + $0x690] sm:$0xff]
    %v265 = vld [vmem:[#allocation3 + $0x698] sm:$0xff]
    %v266 = vld [vmem:[#allocation3 + $0x6a0] sm:$0xff]
    %v267 = vld [vmem:[#allocation3 + $0x6a8] sm:$0xff]
    %v268 = vld [vmem:[#allocation3 + $0x6b0] sm:$0xff]
    %v269 = vld [vmem:[#allocation3 + $0x6b8] sm:$0xff]
    %v270 = vld [vmem:[#allocation3 + $0x6c0] sm:$0xff]
    %v271 = vld [vmem:[#allocation3 + $0x6c8] sm:$0xff]
    %v272 = vld [vmem:[#allocation3 + $0x6d0] sm:$0xff]
    %v273 = vld [vmem:[#allocation3 + $0x6d8] sm:$0xff]
    %v274 = vld [vmem:[#allocation3 + $0x6e0] sm:$0xff]
    %v275 = vld [vmem:[#allocation3 + $0x6e8] sm:$0xff]
    %v276 = vld [vmem:[#allocation3 + $0x6f0] sm:$0xff]
    %v277 = vld [vmem:[#allocation3 + $0x6f8] sm:$0xff]
    %v278 = vld [vmem:[#allocation3 + $0x700] sm:$0xff]
    %v279 = vld [vmem:[#allocation3 + $0x708] sm:$0xff]
    %v280 = vld [vmem:[#allocation3 + $0x710] sm:$0xff]
    %v281 = vld [vmem:[#allocation3 + $0x718] sm:$0xff]
    %v282 = vld [vmem:[#allocation3 + $0x720] sm:$0xff]
    %v283 = vld [vmem:[#allocation3 + $0x728] sm:$0xff]
    %v284 = vld [vmem:[#allocation3 + $0x730] sm:$0xff]
    %v285 = vld [vmem:[#allocation3 + $0x738] sm:$0xff]
    %v286 = vld [vmem:[#allocation3 + $0x740] sm:$0xff]
    %v287 = vld [vmem:[#allocation3 + $0x748] sm:$0xff]
    %v288 = vld [vmem:[#allocation3 + $0x750] sm:$0xff]
    %v289 = vld [vmem:[#allocation3 + $0x758] sm:$0xff]
    %v290 = vld [vmem:[#allocation3 + $0x760] sm:$0xff]
    %v291 = vld [vmem:[#allocation3 + $0x768] sm:$0xff]
    %v292 = vld [vmem:[#allocation3 + $0x770] sm:$0xff]
    %v293 = vld [vmem:[#allocation3 + $0x778] sm:$0xff]
    %v294 = vld [vmem:[#allocation3 + $0x780] sm:$0xff]
    %v295 = vld [vmem:[#allocation3 + $0x788] sm:$0xff]
    %v296 = vld [vmem:[#allocation3 + $0x790] sm:$0xff]
    %v297 = vld [vmem:[#allocation3 + $0x798] sm:$0xff]
    %v298 = vld [vmem:[#allocation3 + $0x7a0] sm:$0xff]
    %v299 = vld [vmem:[#allocation3 + $0x7a8] sm:$0xff]
    %v300 = vld [vmem:[#allocation3 + $0x7b0] sm:$0xff]
    %v301 = vld [vmem:[#allocation3 + $0x7b8] sm:$0xff]
    %v302 = vld [vmem:[#allocation3 + $0x7c0] sm:$0xff]
    %v303 = vld [vmem:[#allocation3 + $0x7c8] sm:$0xff]
    %v304 = vld [vmem:[#allocation3 + $0x7d0] sm:$0xff]
    %v305 = vld [vmem:[#allocation3 + $0x7d8] sm:$0xff]
    %v306 = vld [vmem:[#allocation3 + $0x7e0] sm:$0xff]
    %v307 = vld [vmem:[#allocation3 + $0x7e8] sm:$0xff]
    %v308 = vld [vmem:[#allocation3 + $0x7f0] sm:$0xff]
    %v309 = vld [vmem:[#allocation3 + $0x7f8] sm:$0xff]
    %v310 = vld [vmem:[#allocation3 + $0x800] sm:$0xff]
    %v311 = vld [vmem:[#allocation3 + $0x808] sm:$0xff]
    %v312 = vld [vmem:[#allocation3 + $0x810] sm:$0xff]
    %v313 = vld [vmem:[#allocation3 + $0x818] sm:$0xff]
    %v314 = vld [vmem:[#allocation3 + $0x820] sm:$0xff]
    %v315 = vld [vmem:[#allocation3 + $0x828] sm:$0xff]
    %v316 = vld [vmem:[#allocation3 + $0x830] sm:$0xff]
    %v317 = vld [vmem:[#allocation3 + $0x838] sm:$0xff]
    %v318 = vld [vmem:[#allocation5] sm:$0xff]
    %v319 = vld [vmem:[#allocation5 + $0x8] sm:$0xff]
    %v320 = vld [vmem:[#allocation5 + $0x10] sm:$0xff]
    %v321 = vld [vmem:[#allocation5 + $0x18] sm:$0xff]
    %v322 = vld [vmem:[#allocation5 + $0x20] sm:$0xff]
    %v323 = vld [vmem:[#allocation5 + $0x28] sm:$0xff]
    %v324 = vld [vmem:[#allocation5 + $0x30] sm:$0xff]
    %v325 = vld [vmem:[#allocation5 + $0x38] sm:$0xff]
    %v326 = vld [vmem:[#allocation5 + $0x40] sm:$0xff]
    %v327 = vld [vmem:[#allocation5 + $0x48] sm:$0xff]
    %v328 = vld [vmem:[#allocation5 + $0x50] sm:$0xff]
    %v329 = vld [vmem:[#allocation5 + $0x58] sm:$0xff]
    %v330 = vld [vmem:[#allocation5 + $0x60] sm:$0xff]
    %v331 = vld [vmem:[#allocation5 + $0x68] sm:$0xff]
    %v332 = vld [vmem:[#allocation5 + $0x70] sm:$0xff]
    %v333 = vld [vmem:[#allocation5 + $0x78] sm:$0xff]
    %v334 = vld [vmem:[#allocation5 + $0x80] sm:$0xff]
    %v335 = vld [vmem:[#allocation5 + $0x88] sm:$0xff]
    %v336 = vld [vmem:[#allocation5 + $0x90] sm:$0xff]
    %v337 = vld [vmem:[#allocation5 + $0x98] sm:$0xff]
    %v338 = vld [vmem:[#allocation5 + $0xa0] sm:$0xff]
    %v339 = vld [vmem:[#allocation5 + $0xa8] sm:$0xff]
    %v340 = vld [vmem:[#allocation5 + $0xb0] sm:$0xff]
    %v341 = vld [vmem:[#allocation5 + $0xb8] sm:$0xff]
    %v342 = vld [vmem:[#allocation5 + $0xc0] sm:$0xff]
    %v343 = vld [vmem:[#allocation5 + $0xc8] sm:$0xff]
    %v344 = vld [vmem:[#allocation5 + $0xd0] sm:$0xff]
    %v345 = vld [vmem:[#allocation5 + $0xd8] sm:$0xff]
    %v346 = vld [vmem:[#allocation5 + $0xe0] sm:$0xff]
    %v347 = vld [vmem:[#allocation5 + $0xe8] sm:$0xff]
    %v348 = vld [vmem:[#allocation5 + $0xf0] sm:$0xff]
    %v349 = vld [vmem:[#allocation5 + $0xf8] sm:$0xff]
    %v350 = vld [vmem:[#allocation5 + $0x100] sm:$0xff]
    %v351 = vld [vmem:[#allocation5 + $0x108] sm:$0xff]
    %v352 = vld [vmem:[#allocation5 + $0x110] sm:$0xff]
    %v353 = vld [vmem:[#allocation5 + $0x118] sm:$0xff]
    %v354 = vld [vmem:[#allocation5 + $0x120] sm:$0xff]
    %v355 = vld [vmem:[#allocation5 + $0x128] sm:$0xff]
    %v356 = vld [vmem:[#allocation5 + $0x130] sm:$0xff]
    %v357 = vld [vmem:[#allocation5 + $0x138] sm:$0xff]
    %v358 = vld [vmem:[#allocation5 + $0x140] sm:$0xff]
    %v359 = vld [vmem:[#allocation5 + $0x148] sm:$0xff]
    %v360 = vld [vmem:[#allocation5 + $0x150] sm:$0xff]
    %v361 = vld [vmem:[#allocation5 + $0x158] sm:$0xff]
    %v362 = vld [vmem:[#allocation5 + $0x160] sm:$0xff]
    %v363 = vld [vmem:[#allocation5 + $0x168] sm:$0xff]
    %v364 = vld [vmem:[#allocation5 + $0x170] sm:$0xff]
    %v365 = vld [vmem:[#allocation5 + $0x178] sm:$0xff]
    %v366 = vld [vmem:[#allocation7] ss:$8 sm:$0xf]
    %s367 = scalar_lea.vmem [#allocation7], 1
    %v368 = vld [vmem:[%s367] ss:$8 sm:$0xf]
    %v369 = vld [vmem:[#allocation7 + $0x2] ss:$0 sm:$0xff]
    %v370 = vld [vmem:[#allocation7 + $0x3] ss:$0 sm:$0xff]
    %v371 = vld [vmem:[#allocation7 + $0x4] ss:$0 sm:$0xff]
    %v372 = vld [vmem:[#allocation7 + $0x5] ss:$0 sm:$0xff]
    %v373 = vld [vmem:[#allocation7 + $0x6] ss:$0 sm:$0xff]
    %v374 = vld [vmem:[#allocation7 + $0x7] ss:$0 sm:$0xff]
    %v375 = vld [vmem:[#allocation7 + $0x20] ss:$0 sm:$0xff]
    %v377 = vlaneseq
    %v378 = vshrl.u32 %v377, 7
    %v379 = vsub.s32 0, %v378
    %v380 = vrot.slane %v368, %v379
    %v381 = vlaneseq
    %v382 = vshrl.u32 %v381, 7
    %v383 = vsub.s32 1, %v382
    %v384 = vrot.slane %v368, %v383
    %v385 = vlaneseq
    %v386 = vshrl.u32 %v385, 7
    %v387 = vsub.s32 2, %v386
    %v388 = vrot.slane %v368, %v387
    %v389 = vlaneseq
    %v390 = vshrl.u32 %v389, 7
    %v391 = vsub.s32 3, %v390
    %v392 = vrot.slane %v368, %v391
    %v397 = vld [vmem:[%s0] sm:$0xff]
    %v398 = vld [vmem:[%s0 + $0x8] sm:$0xff]
    %v399 = vld [vmem:[%s0 + $0x10] sm:$0xff]
    %v400 = vld [vmem:[%s0 + $0x18] sm:$0xff]
    %v401 = vld [vmem:[%s0 + $0x20] sm:$0xff]
    %v402 = vld [vmem:[%s0 + $0x28] sm:$0xff]
    %v403 = vld [vmem:[%s0 + $0x30] sm:$0xff]
    %v404 = vld [vmem:[%s0 + $0x38] sm:$0xff]
    %v405 = vld [vmem:[%s0 + $0x40] sm:$0xff]
    %v406 = vld [vmem:[%s0 + $0x48] sm:$0xff]
    %v408 = vlaneseq
    %v409 = vshrl.u32 %v408, 7
    %v410 = vsub.s32 0, %v409
    %v411 = vrot.slane %v366, %v410
    %v412 = vlaneseq
    %v413 = vshrl.u32 %v412, 7
    %v414 = vsub.s32 1, %v413
    %v415 = vrot.slane %v366, %v414
    %v416 = vlaneseq
    %v417 = vshrl.u32 %v416, 7
    %v418 = vsub.s32 2, %v417
    %v419 = vrot.slane %v366, %v418
    %v420 = vlaneseq
    %v421 = vshrl.u32 %v420, 7
    %v422 = vsub.s32 3, %v421
    %v423 = vrot.slane %v366, %v422
    %vm428 = vcmask 64512
    %v430 = vsel %vm428, %v397, 0
    %v433 = vsel %vm428, %v398, 0
    %v436 = vsel %vm428, %v399, 0
    %v439 = vsel %vm428, %v400, 0
    %v442 = vsel %vm428, %v401, 0
    %v445 = vsel %vm428, %v402, 0
    %v448 = vsel %vm428, %v403, 0
    %v451 = vsel %vm428, %v404, 0
    %v454 = vsel %vm428, %v405, 0
    %v457 = vsel %vm428, %v406, 0
    %459 = vmatprep.subr.mxu0 0.0
    %460 = vmatpush1.msra.mxu0 0.0
    %461 = vmatprep.subr.mxu0 0.0
    %462 = vmatpush1.msra.mxu0 0.0
    %463 = vmatprep.subr.mxu0 0.0
    %464 = vmatpush1.msra.mxu0 0.0
    %465 = vmatprep.subr.mxu0 0.0
    %466 = vmatpush1.msra.mxu0 0.0
    %467 = vmatprep.subr.mxu0 0.0
    %468 = vmatpush1.msra.mxu0 0.0
    %469 = vmatprep.subr.mxu0 0.0
    %470 = vmatpush1.msra.mxu0 0.0
    %471 = vmatprep.subr.mxu0 0.0
    %472 = vmatpush1.msra.mxu0 0.0
    %473 = vmatprep.subr.mxu0 0.0
    %474 = vmatpush1.msra.mxu0 0.0
    %475 = vmatprep.subr.mxu0 0.0
    %476 = vmatpush1.msra.mxu0 0.0
    %477 = vmatprep.subr.mxu0 0.0
    %478 = vmatpush1.msra.mxu0 0.0
    %479 = vmatprep.subr.mxu0 0.0
    %480 = vmatpush1.msra.mxu0 0.0
    %481 = vmatprep.subr.mxu0 0.0
    %482 = vmatpush1.msra.mxu0 0.0
    %483 = vmatprep.subr.mxu0 0.0
    %484 = vmatpush1.msra.mxu0 0.0
    %485 = vmatprep.subr.mxu0 0.0
    %486 = vmatpush1.msra.mxu0 0.0
    %487 = vmatprep.subr.mxu0 0.0
    %488 = vmatpush1.msra.mxu0 0.0
    %489 = vmatprep.subr.mxu0 %v59
    %490 = vmatpush1.msra.mxu0 %v58
    %491 = vmatprep.subr.mxu0 0.0
    %492 = vmatpush2.msra.mxu0 0.0
    %493 = vmatprep.subr.mxu0 0.0
    %494 = vmatpush2.msra.mxu0 0.0
    %495 = vmatprep.subr.mxu0 0.0
    %496 = vmatpush2.msra.mxu0 0.0
    %497 = vmatprep.subr.mxu0 0.0
    %498 = vmatpush2.msra.mxu0 0.0
    %499 = vmatprep.subr.mxu0 0.0
    %500 = vmatpush2.msra.mxu0 0.0
    %501 = vmatprep.subr.mxu0 0.0
    %502 = vmatpush2.msra.mxu0 0.0
    %503 = vmatprep.subr.mxu0 0.0
    %504 = vmatpush2.msra.mxu0 0.0
    %505 = vmatprep.subr.mxu0 0.0
    %506 = vmatpush2.msra.mxu0 0.0
    %507 = vmatprep.subr.mxu0 0.0
    %508 = vmatpush2.msra.mxu0 0.0
    %509 = vmatprep.subr.mxu0 0.0
    %510 = vmatpush2.msra.mxu0 0.0
    %511 = vmatprep.subr.mxu0 0.0
    %512 = vmatpush2.msra.mxu0 0.0
    %513 = vmatprep.subr.mxu0 0.0
    %514 = vmatpush2.msra.mxu0 0.0
    %515 = vmatprep.subr.mxu0 0.0
    %516 = vmatpush2.msra.mxu0 0.0
    %517 = vmatprep.subr.mxu0 0.0
    %518 = vmatpush2.msra.mxu0 0.0
    %519 = vmatprep.subr.mxu0 0.0
    %520 = vmatpush2.msra.mxu0 0.0
    %521 = vmatprep.subr.mxu0 0.0
    %522 = vmatpush2.msra.mxu0 0.0
    %523 = vmatprep.mubr.f32.mxu0 0.0
    %524 = vmatmul.mubr.f32.gmra.mxu0 %v430
    %v525 = vpop.f32.mrf.mxu0
    %v526 = vadd.f32 %v411, %v525
    %v527 = vpop.f32.mrf.mxu0
    %v528 = vadd.f32 %v415, %v527
    %529 = vmatprep.mubr.f32.mxu0 0.0
    %530 = vmatmul.mubr.f32.gmra.mxu0 %v433
    %v531 = vpop.f32.mrf.mxu0
    %v532 = vadd.f32 %v411, %v531
    %v533 = vpop.f32.mrf.mxu0
    %v534 = vadd.f32 %v415, %v533
    %535 = vmatprep.mubr.f32.mxu0 0.0
    %536 = vmatmul.mubr.f32.gmra.mxu0 %v436
    %v537 = vpop.f32.mrf.mxu0
    %v538 = vadd.f32 %v411, %v537
    %v539 = vpop.f32.mrf.mxu0
    %v540 = vadd.f32 %v415, %v539
    %541 = vmatprep.mubr.f32.mxu0 0.0
    %542 = vmatmul.mubr.f32.gmra.mxu0 %v439
    %v543 = vpop.f32.mrf.mxu0
    %v544 = vadd.f32 %v411, %v543
    %v545 = vpop.f32.mrf.mxu0
    %v546 = vadd.f32 %v415, %v545
    %547 = vmatprep.mubr.f32.mxu0 0.0
    %548 = vmatmul.mubr.f32.gmra.mxu0 %v442
    %v549 = vpop.f32.mrf.mxu0
    %v550 = vadd.f32 %v411, %v549
    %v551 = vpop.f32.mrf.mxu0
    %v552 = vadd.f32 %v415, %v551
    %553 = vmatprep.mubr.f32.mxu0 0.0
    %554 = vmatmul.mubr.f32.gmra.mxu0 %v445
    %v555 = vpop.f32.mrf.mxu0
    %v556 = vadd.f32 %v411, %v555
    %v557 = vpop.f32.mrf.mxu0
    %v558 = vadd.f32 %v415, %v557
    %559 = vmatprep.mubr.f32.mxu0 0.0
    %560 = vmatmul.mubr.f32.gmra.mxu0 %v448
    %v561 = vpop.f32.mrf.mxu0
    %v562 = vadd.f32 %v411, %v561
    %v563 = vpop.f32.mrf.mxu0
    %v564 = vadd.f32 %v415, %v563
    %565 = vmatprep.mubr.f32.mxu0 0.0
    %566 = vmatmul.mubr.f32.gmra.mxu0 %v451
    %v567 = vpop.f32.mrf.mxu0
    %v568 = vadd.f32 %v411, %v567
    %v569 = vpop.f32.mrf.mxu0
    %v570 = vadd.f32 %v415, %v569
    %571 = vmatprep.mubr.f32.mxu0 0.0
    %572 = vmatmul.mubr.f32.gmra.mxu0 %v454
    %v573 = vpop.f32.mrf.mxu0
    %v574 = vadd.f32 %v411, %v573
    %v575 = vpop.f32.mrf.mxu0
    %v576 = vadd.f32 %v415, %v575
    %577 = vmatprep.mubr.f32.mxu0 0.0
    %578 = vmatmul.mubr.f32.gmra.mxu0 %v457
    %v579 = vpop.f32.mrf.mxu0
    %v580 = vadd.f32 %v411, %v579
    %v581 = vpop.f32.mrf.mxu0
    %v582 = vadd.f32 %v415, %v581
    %583 = vdwg.mxu0
    %584 = vmatprep.subr.mxu0 0.0
    %585 = vmatpush1.msra.mxu0 0.0
    %586 = vmatprep.subr.mxu0 0.0
    %587 = vmatpush1.msra.mxu0 0.0
    %588 = vmatprep.subr.mxu0 0.0
    %589 = vmatpush1.msra.mxu0 0.0
    %590 = vmatprep.subr.mxu0 0.0
    %591 = vmatpush1.msra.mxu0 0.0
    %592 = vmatprep.subr.mxu0 0.0
    %593 = vmatpush1.msra.mxu0 0.0
    %594 = vmatprep.subr.mxu0 0.0
    %595 = vmatpush1.msra.mxu0 0.0
    %596 = vmatprep.subr.mxu0 0.0
    %597 = vmatpush1.msra.mxu0 0.0
    %598 = vmatprep.subr.mxu0 0.0
    %599 = vmatpush1.msra.mxu0 0.0
    %600 = vmatprep.subr.mxu0 0.0
    %601 = vmatpush1.msra.mxu0 0.0
    %602 = vmatprep.subr.mxu0 0.0
    %603 = vmatpush1.msra.mxu0 0.0
    %604 = vmatprep.subr.mxu0 0.0
    %605 = vmatpush1.msra.mxu0 0.0
    %606 = vmatprep.subr.mxu0 0.0
    %607 = vmatpush1.msra.mxu0 0.0
    %608 = vmatprep.subr.mxu0 0.0
    %609 = vmatpush1.msra.mxu0 0.0
    %610 = vmatprep.subr.mxu0 0.0
    %611 = vmatpush1.msra.mxu0 0.0
    %612 = vmatprep.subr.mxu0 0.0
    %613 = vmatpush1.msra.mxu0 0.0
    %614 = vmatprep.subr.mxu0 %v61
    %615 = vmatpush1.msra.mxu0 %v60
    %616 = vmatprep.subr.mxu0 0.0
    %617 = vmatpush2.msra.mxu0 0.0
    %618 = vmatprep.subr.mxu0 0.0
    %619 = vmatpush2.msra.mxu0 0.0
    %620 = vmatprep.subr.mxu0 0.0
    %621 = vmatpush2.msra.mxu0 0.0
    %622 = vmatprep.subr.mxu0 0.0
    %623 = vmatpush2.msra.mxu0 0.0
    %624 = vmatprep.subr.mxu0 0.0
    %625 = vmatpush2.msra.mxu0 0.0
    %626 = vmatprep.subr.mxu0 0.0
    %627 = vmatpush2.msra.mxu0 0.0
    %628 = vmatprep.subr.mxu0 0.0
    %629 = vmatpush2.msra.mxu0 0.0
    %630 = vmatprep.subr.mxu0 0.0
    %631 = vmatpush2.msra.mxu0 0.0
    %632 = vmatprep.subr.mxu0 0.0
    %633 = vmatpush2.msra.mxu0 0.0
    %634 = vmatprep.subr.mxu0 0.0
    %635 = vmatpush2.msra.mxu0 0.0
    %636 = vmatprep.subr.mxu0 0.0
    %637 = vmatpush2.msra.mxu0 0.0
    %638 = vmatprep.subr.mxu0 0.0
    %639 = vmatpush2.msra.mxu0 0.0
    %640 = vmatprep.subr.mxu0 0.0
    %641 = vmatpush2.msra.mxu0 0.0
    %642 = vmatprep.subr.mxu0 0.0
    %643 = vmatpush2.msra.mxu0 0.0
    %644 = vmatprep.subr.mxu0 0.0
    %645 = vmatpush2.msra.mxu0 0.0
    %646 = vmatprep.subr.mxu0 0.0
    %647 = vmatpush2.msra.mxu0 0.0
    %648 = vmatprep.mubr.f32.mxu0 0.0
    %649 = vmatmul.mubr.f32.gmra.mxu0 %v430
    %v650 = vpop.f32.mrf.mxu0
    %v651 = vadd.f32 %v419, %v650
    %v652 = vpop.f32.mrf.mxu0
    %v653 = vadd.f32 %v423, %v652
    %654 = vmatprep.mubr.f32.mxu0 0.0
    %655 = vmatmul.mubr.f32.gmra.mxu0 %v433
    %v656 = vpop.f32.mrf.mxu0
    %v657 = vadd.f32 %v419, %v656
    %v658 = vpop.f32.mrf.mxu0
    %v659 = vadd.f32 %v423, %v658
    %660 = vmatprep.mubr.f32.mxu0 0.0
    %661 = vmatmul.mubr.f32.gmra.mxu0 %v436
    %v662 = vpop.f32.mrf.mxu0
    %v663 = vadd.f32 %v419, %v662
    %v664 = vpop.f32.mrf.mxu0
    %v665 = vadd.f32 %v423, %v664
    %666 = vmatprep.mubr.f32.mxu0 0.0
    %667 = vmatmul.mubr.f32.gmra.mxu0 %v439
    %v668 = vpop.f32.mrf.mxu0
    %v669 = vadd.f32 %v419, %v668
    %v670 = vpop.f32.mrf.mxu0
    %v671 = vadd.f32 %v423, %v670
    %672 = vmatprep.mubr.f32.mxu0 0.0
    %673 = vmatmul.mubr.f32.gmra.mxu0 %v442
    %v674 = vpop.f32.mrf.mxu0
    %v675 = vadd.f32 %v419, %v674
    %v676 = vpop.f32.mrf.mxu0
    %v677 = vadd.f32 %v423, %v676
    %678 = vmatprep.mubr.f32.mxu0 0.0
    %679 = vmatmul.mubr.f32.gmra.mxu0 %v445
    %v680 = vpop.f32.mrf.mxu0
    %v681 = vadd.f32 %v419, %v680
    %v682 = vpop.f32.mrf.mxu0
    %v683 = vadd.f32 %v423, %v682
    %684 = vmatprep.mubr.f32.mxu0 0.0
    %685 = vmatmul.mubr.f32.gmra.mxu0 %v448
    %v686 = vpop.f32.mrf.mxu0
    %v687 = vadd.f32 %v419, %v686
    %v688 = vpop.f32.mrf.mxu0
    %v689 = vadd.f32 %v423, %v688
    %690 = vmatprep.mubr.f32.mxu0 0.0
    %691 = vmatmul.mubr.f32.gmra.mxu0 %v451
    %v692 = vpop.f32.mrf.mxu0
    %v693 = vadd.f32 %v419, %v692
    %v694 = vpop.f32.mrf.mxu0
    %v695 = vadd.f32 %v423, %v694
    %696 = vmatprep.mubr.f32.mxu0 0.0
    %697 = vmatmul.mubr.f32.gmra.mxu0 %v454
    %v698 = vpop.f32.mrf.mxu0
    %v699 = vadd.f32 %v419, %v698
    %v700 = vpop.f32.mrf.mxu0
    %v701 = vadd.f32 %v423, %v700
    %702 = vmatprep.mubr.f32.mxu0 0.0
    %703 = vmatmul.mubr.f32.gmra.mxu0 %v457
    %v704 = vpop.f32.mrf.mxu0
    %v705 = vadd.f32 %v419, %v704
    %v706 = vpop.f32.mrf.mxu0
    %v707 = vadd.f32 %v423, %v706
    %708 = vdwg.mxu0
    %709 = vst [vmem:[#allocation2] sm:$0xff] %v526
    %710 = vst [vmem:[#allocation2 + $0x8] sm:$0xff] %v528
    %711 = vst [vmem:[#allocation2 + $0x10] sm:$0xff] %v651
    %712 = vst [vmem:[#allocation2 + $0x18] sm:$0xff] %v653
    %713 = vst [vmem:[#allocation2 + $0x20] sm:$0xff] %v532
    %714 = vst [vmem:[#allocation2 + $0x28] sm:$0xff] %v534
    %715 = vst [vmem:[#allocation2 + $0x30] sm:$0xff] %v657
    %716 = vst [vmem:[#allocation2 + $0x38] sm:$0xff] %v659
    %717 = vst [vmem:[#allocation2 + $0x40] sm:$0xff] %v538
    %718 = vst [vmem:[#allocation2 + $0x48] sm:$0xff] %v540
    %719 = vst [vmem:[#allocation2 + $0x50] sm:$0xff] %v663
    %720 = vst [vmem:[#allocation2 + $0x58] sm:$0xff] %v665
    %721 = vst [vmem:[#allocation2 + $0x60] sm:$0xff] %v544
    %722 = vst [vmem:[#allocation2 + $0x68] sm:$0xff] %v546
    %723 = vst [vmem:[#allocation2 + $0x70] sm:$0xff] %v669
    %724 = vst [vmem:[#allocation2 + $0x78] sm:$0xff] %v671
    %725 = vst [vmem:[#allocation2 + $0x80] sm:$0xff] %v550
    %726 = vst [vmem:[#allocation2 + $0x88] sm:$0xff] %v552
    %727 = vst [vmem:[#allocation2 + $0x90] sm:$0xff] %v675
    %728 = vst [vmem:[#allocation2 + $0x98] sm:$0xff] %v677
    %729 = vst [vmem:[#allocation2 + $0xa0] sm:$0xff] %v556
    %730 = vst [vmem:[#allocation2 + $0xa8] sm:$0xff] %v558
    %731 = vst [vmem:[#allocation2 + $0xb0] sm:$0xff] %v681
    %732 = vst [vmem:[#allocation2 + $0xb8] sm:$0xff] %v683
    %733 = vst [vmem:[#allocation2 + $0xc0] sm:$0xff] %v562
    %734 = vst [vmem:[#allocation2 + $0xc8] sm:$0xff] %v564
    %735 = vst [vmem:[#allocation2 + $0xd0] sm:$0xff] %v687
    %736 = vst [vmem:[#allocation2 + $0xd8] sm:$0xff] %v689
    %737 = vst [vmem:[#allocation2 + $0xe0] sm:$0xff] %v568
    %738 = vst [vmem:[#allocation2 + $0xe8] sm:$0xff] %v570
    %739 = vst [vmem:[#allocation2 + $0xf0] sm:$0xff] %v693
    %740 = vst [vmem:[#allocation2 + $0xf8] sm:$0xff] %v695
    %741 = vst [vmem:[#allocation2 + $0x100] sm:$0xff] %v574
    %742 = vst [vmem:[#allocation2 + $0x108] sm:$0xff] %v576
    %743 = vst [vmem:[#allocation2 + $0x110] sm:$0xff] %v699
    %744 = vst [vmem:[#allocation2 + $0x118] sm:$0xff] %v701
    %745 = vst [vmem:[#allocation2 + $0x120] sm:$0xff] %v580
    %746 = vst [vmem:[#allocation2 + $0x128] sm:$0xff] %v582
    %747 = vst [vmem:[#allocation2 + $0x130] sm:$0xff] %v705
    %748 = vst [vmem:[#allocation2 + $0x138] sm:$0xff] %v707
    %v749 = vld [vmem:[#allocation2] sm:$0xff]
    %v750 = vld [vmem:[#allocation2 + $0x8] sm:$0xff]
    %v751 = vld [vmem:[#allocation2 + $0x10] sm:$0xff]
    %v752 = vld [vmem:[#allocation2 + $0x18] sm:$0xff]
    %v753 = vadd.f32 %v749, 0.0
    %v754 = vadd.f32 %v750, 0.0
    %v755 = vadd.f32 %v751, 0.0
    %v756 = vadd.f32 %v752, 0.0
    %v757 = vxor.u32 %v753, 2147483648
    %v758 = vxor.u32 %v754, 2147483648
    %v759 = vxor.u32 %v755, 2147483648
    %v760 = vmul.f32 %v757, 1.442695
    %v761 = vpow.pop %v760
    %v762 = vmul.f32 %v758, 1.442695
    %v763 = vpow.pop %v762
    %v764 = vmul.f32 %v759, 1.442695
    %v765 = vpow.pop %v764
    %v766 = vadd.f32 %v761, 1.0
    %v767 = vadd.f32 %v763, 1.0
    %v768 = vadd.f32 %v765, 1.0
    %v769 = vrcp.pop %v766
    %v770 = vmul.f32 1.0, %v769
    %v771 = vrcp.pop %v767
    %v772 = vmul.f32 1.0, %v771
    %v773 = vrcp.pop %v768
    %v774 = vmul.f32 1.0, %v773
    %v775 = vtanh.pop %v756
    %v776 = vmul.f32 %v772, 0.0
    %v777 = vmul.f32 %v770, %v775
    %v778 = vadd.f32 %v776, %v777
    %v779 = vtanh.pop %v778
    %v780 = vmul.f32 %v774, %v779
    %781 = vmatprep.subr.mxu0 %v183
    %782 = vmatpush1.msra.mxu0 %v182
    %783 = vmatprep.subr.mxu0 %v175
    %784 = vmatpush1.msra.mxu0 %v174
    %785 = vmatprep.subr.mxu0 %v167
    %786 = vmatpush1.msra.mxu0 %v166
    %787 = vmatprep.subr.mxu0 %v159
    %788 = vmatpush1.msra.mxu0 %v158
    %789 = vmatprep.subr.mxu0 %v151
    %790 = vmatpush1.msra.mxu0 %v150
    %791 = vmatprep.subr.mxu0 %v143
    %792 = vmatpush1.msra.mxu0 %v142
    %793 = vmatprep.subr.mxu0 %v135
    %794 = vmatpush1.msra.mxu0 %v134
    %795 = vmatprep.subr.mxu0 %v127
    %796 = vmatpush1.msra.mxu0 %v126
    %797 = vmatprep.subr.mxu0 %v119
    %798 = vmatpush1.msra.mxu0 %v118
    %799 = vmatprep.subr.mxu0 %v111
    %800 = vmatpush1.msra.mxu0 %v110
    %801 = vmatprep.subr.mxu0 %v103
    %802 = vmatpush1.msra.mxu0 %v102
    %803 = vmatprep.subr.mxu0 %v95
    %804 = vmatpush1.msra.mxu0 %v94
    %805 = vmatprep.subr.mxu0 %v87
    %806 = vmatpush1.msra.mxu0 %v86
    %807 = vmatprep.subr.mxu0 %v79
    %808 = vmatpush1.msra.mxu0 %v78
    %809 = vmatprep.subr.mxu0 %v71
    %810 = vmatpush1.msra.mxu0 %v70
    %811 = vmatprep.subr.mxu0 %v63
    %812 = vmatpush1.msra.mxu0 %v62
    %813 = vmatprep.subr.mxu0 %v311
    %814 = vmatpush2.msra.mxu0 %v310
    %815 = vmatprep.subr.mxu0 %v303
    %816 = vmatpush2.msra.mxu0 %v302
    %817 = vmatprep.subr.mxu0 %v295
    %818 = vmatpush2.msra.mxu0 %v294
    %819 = vmatprep.subr.mxu0 %v287
    %820 = vmatpush2.msra.mxu0 %v286
    %821 = vmatprep.subr.mxu0 %v279
    %822 = vmatpush2.msra.mxu0 %v278
    %823 = vmatprep.subr.mxu0 %v271
    %824 = vmatpush2.msra.mxu0 %v270
    %825 = vmatprep.subr.mxu0 %v263
    %826 = vmatpush2.msra.mxu0 %v262
    %827 = vmatprep.subr.mxu0 %v255
    %828 = vmatpush2.msra.mxu0 %v254
    %829 = vmatprep.subr.mxu0 %v247
    %830 = vmatpush2.msra.mxu0 %v246
    %831 = vmatprep.subr.mxu0 %v239
    %832 = vmatpush2.msra.mxu0 %v238
    %833 = vmatprep.subr.mxu0 %v231
    %834 = vmatpush2.msra.mxu0 %v230
    %835 = vmatprep.subr.mxu0 %v223
    %836 = vmatpush2.msra.mxu0 %v222
    %837 = vmatprep.subr.mxu0 %v215
    %838 = vmatpush2.msra.mxu0 %v214
    %839 = vmatprep.subr.mxu0 %v207
    %840 = vmatpush2.msra.mxu0 %v206
    %841 = vmatprep.subr.mxu0 %v199
    %842 = vmatpush2.msra.mxu0 %v198
    %843 = vmatprep.subr.mxu0 %v191
    %844 = vmatpush2.msra.mxu0 %v190
    %845 = vmatprep.mubr.f32.mxu0 0.0
    %846 = vmatmul.mubr.f32.gmra.mxu0 %v780
    %v847 = vpop.f32.mrf.mxu0
    %v848 = vadd.f32 0.0, %v847
    %v849 = vpop.f32.mrf.mxu0
    %v850 = vadd.f32 0.0, %v849
    %851 = vdwg.mxu0
    %852 = vmatprep.subr.mxu0 %v185
    %853 = vmatpush1.msra.mxu0 %v184
    %854 = vmatprep.subr.mxu0 %v177
    %855 = vmatpush1.msra.mxu0 %v176
    %856 = vmatprep.subr.mxu0 %v169
    %857 = vmatpush1.msra.mxu0 %v168
    %858 = vmatprep.subr.mxu0 %v161
    %859 = vmatpush1.msra.mxu0 %v160
    %860 = vmatprep.subr.mxu0 %v153
    %861 = vmatpush1.msra.mxu0 %v152
    %862 = vmatprep.subr.mxu0 %v145
    %863 = vmatpush1.msra.mxu0 %v144
    %864 = vmatprep.subr.mxu0 %v137
    %865 = vmatpush1.msra.mxu0 %v136
    %866 = vmatprep.subr.mxu0 %v129
    %867 = vmatpush1.msra.mxu0 %v128
    %868 = vmatprep.subr.mxu0 %v121
    %869 = vmatpush1.msra.mxu0 %v120
    %870 = vmatprep.subr.mxu0 %v113
    %871 = vmatpush1.msra.mxu0 %v112
    %872 = vmatprep.subr.mxu0 %v105
    %873 = vmatpush1.msra.mxu0 %v104
    %874 = vmatprep.subr.mxu0 %v97
    %875 = vmatpush1.msra.mxu0 %v96
    %876 = vmatprep.subr.mxu0 %v89
    %877 = vmatpush1.msra.mxu0 %v88
    %878 = vmatprep.subr.mxu0 %v81
    %879 = vmatpush1.msra.mxu0 %v80
    %880 = vmatprep.subr.mxu0 %v73
    %881 = vmatpush1.msra.mxu0 %v72
    %882 = vmatprep.subr.mxu0 %v65
    %883 = vmatpush1.msra.mxu0 %v64
    %884 = vmatprep.subr.mxu0 %v313
    %885 = vmatpush2.msra.mxu0 %v312
    %886 = vmatprep.subr.mxu0 %v305
    %887 = vmatpush2.msra.mxu0 %v304
    %888 = vmatprep.subr.mxu0 %v297
    %889 = vmatpush2.msra.mxu0 %v296
    %890 = vmatprep.subr.mxu0 %v289
    %891 = vmatpush2.msra.mxu0 %v288
    %892 = vmatprep.subr.mxu0 %v281
    %893 = vmatpush2.msra.mxu0 %v280
    %894 = vmatprep.subr.mxu0 %v273
    %895 = vmatpush2.msra.mxu0 %v272
    %896 = vmatprep.subr.mxu0 %v265
    %897 = vmatpush2.msra.mxu0 %v264
    %898 = vmatprep.subr.mxu0 %v257
    %899 = vmatpush2.msra.mxu0 %v256
    %900 = vmatprep.subr.mxu0 %v249
    %901 = vmatpush2.msra.mxu0 %v248
    %902 = vmatprep.subr.mxu0 %v241
    %903 = vmatpush2.msra.mxu0 %v240
    %904 = vmatprep.subr.mxu0 %v233
    %905 = vmatpush2.msra.mxu0 %v232
    %906 = vmatprep.subr.mxu0 %v225
    %907 = vmatpush2.msra.mxu0 %v224
    %908 = vmatprep.subr.mxu0 %v217
    %909 = vmatpush2.msra.mxu0 %v216
    %910 = vmatprep.subr.mxu0 %v209
    %911 = vmatpush2.msra.mxu0 %v208
    %912 = vmatprep.subr.mxu0 %v201
    %913 = vmatpush2.msra.mxu0 %v200
    %914 = vmatprep.subr.mxu0 %v193
    %915 = vmatpush2.msra.mxu0 %v192
    %916 = vmatprep.mubr.f32.mxu0 0.0
    %917 = vmatmul.mubr.f32.gmra.mxu0 %v780
    %v918 = vpop.f32.mrf.mxu0
    %v919 = vadd.f32 0.0, %v918
    %v920 = vpop.f32.mrf.mxu0
    %v921 = vadd.f32 0.0, %v920
    %922 = vdwg.mxu0
    %923 = vmatprep.subr.mxu0 %v187
    %924 = vmatpush1.msra.mxu0 %v186
    %925 = vmatprep.subr.mxu0 %v179
    %926 = vmatpush1.msra.mxu0 %v178
    %927 = vmatprep.subr.mxu0 %v171
    %928 = vmatpush1.msra.mxu0 %v170
    %929 = vmatprep.subr.mxu0 %v163
    %930 = vmatpush1.msra.mxu0 %v162
    %931 = vmatprep.subr.mxu0 %v155
    %932 = vmatpush1.msra.mxu0 %v154
    %933 = vmatprep.subr.mxu0 %v147
    %934 = vmatpush1.msra.mxu0 %v146
    %935 = vmatprep.subr.mxu0 %v139
    %936 = vmatpush1.msra.mxu0 %v138
    %937 = vmatprep.subr.mxu0 %v131
    %938 = vmatpush1.msra.mxu0 %v130
    %939 = vmatprep.subr.mxu0 %v123
    %940 = vmatpush1.msra.mxu0 %v122
    %941 = vmatprep.subr.mxu0 %v115
    %942 = vmatpush1.msra.mxu0 %v114
    %943 = vmatprep.subr.mxu0 %v107
    %944 = vmatpush1.msra.mxu0 %v106
    %945 = vmatprep.subr.mxu0 %v99
    %946 = vmatpush1.msra.mxu0 %v98
    %947 = vmatprep.subr.mxu0 %v91
    %948 = vmatpush1.msra.mxu0 %v90
    %949 = vmatprep.subr.mxu0 %v83
    %950 = vmatpush1.msra.mxu0 %v82
    %951 = vmatprep.subr.mxu0 %v75
    %952 = vmatpush1.msra.mxu0 %v74
    %953 = vmatprep.subr.mxu0 %v67
    %954 = vmatpush1.msra.mxu0 %v66
    %955 = vmatprep.subr.mxu0 %v315
    %956 = vmatpush2.msra.mxu0 %v314
    %957 = vmatprep.subr.mxu0 %v307
    %958 = vmatpush2.msra.mxu0 %v306
    %959 = vmatprep.subr.mxu0 %v299
    %960 = vmatpush2.msra.mxu0 %v298
    %961 = vmatprep.subr.mxu0 %v291
    %962 = vmatpush2.msra.mxu0 %v290
    %963 = vmatprep.subr.mxu0 %v283
    %964 = vmatpush2.msra.mxu0 %v282
    %965 = vmatprep.subr.mxu0 %v275
    %966 = vmatpush2.msra.mxu0 %v274
    %967 = vmatprep.subr.mxu0 %v267
    %968 = vmatpush2.msra.mxu0 %v266
    %969 = vmatprep.subr.mxu0 %v259
    %970 = vmatpush2.msra.mxu0 %v258
    %971 = vmatprep.subr.mxu0 %v251
    %972 = vmatpush2.msra.mxu0 %v250
    %973 = vmatprep.subr.mxu0 %v243
    %974 = vmatpush2.msra.mxu0 %v242
    %975 = vmatprep.subr.mxu0 %v235
    %976 = vmatpush2.msra.mxu0 %v234
    %977 = vmatprep.subr.mxu0 %v227
    %978 = vmatpush2.msra.mxu0 %v226
    %979 = vmatprep.subr.mxu0 %v219
    %980 = vmatpush2.msra.mxu0 %v218
    %981 = vmatprep.subr.mxu0 %v211
    %982 = vmatpush2.msra.mxu0 %v210
    %983 = vmatprep.subr.mxu0 %v203
    %984 = vmatpush2.msra.mxu0 %v202
    %985 = vmatprep.subr.mxu0 %v195
    %986 = vmatpush2.msra.mxu0 %v194
    %987 = vmatprep.mubr.f32.mxu0 0.0
    %988 = vmatmul.mubr.f32.gmra.mxu0 %v780
    %v989 = vpop.f32.mrf.mxu0
    %v990 = vadd.f32 0.0, %v989
    %v991 = vpop.f32.mrf.mxu0
    %v992 = vadd.f32 0.0, %v991
    %993 = vdwg.mxu0
    %994 = vmatprep.subr.mxu0 %v189
    %995 = vmatpush1.msra.mxu0 %v188
    %996 = vmatprep.subr.mxu0 %v181
    %997 = vmatpush1.msra.mxu0 %v180
    %998 = vmatprep.subr.mxu0 %v173
    %999 = vmatpush1.msra.mxu0 %v172
    %1000 = vmatprep.subr.mxu0 %v165
    %1001 = vmatpush1.msra.mxu0 %v164
    %1002 = vmatprep.subr.mxu0 %v157
    %1003 = vmatpush1.msra.mxu0 %v156
    %1004 = vmatprep.subr.mxu0 %v149
    %1005 = vmatpush1.msra.mxu0 %v148
    %1006 = vmatprep.subr.mxu0 %v141
    %1007 = vmatpush1.msra.mxu0 %v140
    %1008 = vmatprep.subr.mxu0 %v133
    %1009 = vmatpush1.msra.mxu0 %v132
    %1010 = vmatprep.subr.mxu0 %v125
    %1011 = vmatpush1.msra.mxu0 %v124
    %1012 = vmatprep.subr.mxu0 %v117
    %1013 = vmatpush1.msra.mxu0 %v116
    %1014 = vmatprep.subr.mxu0 %v109
    %1015 = vmatpush1.msra.mxu0 %v108
    %1016 = vmatprep.subr.mxu0 %v101
    %1017 = vmatpush1.msra.mxu0 %v100
    %1018 = vmatprep.subr.mxu0 %v93
    %1019 = vmatpush1.msra.mxu0 %v92
    %1020 = vmatprep.subr.mxu0 %v85
    %1021 = vmatpush1.msra.mxu0 %v84
    %1022 = vmatprep.subr.mxu0 %v77
    %1023 = vmatpush1.msra.mxu0 %v76
    %1024 = vmatprep.subr.mxu0 %v69
    %1025 = vmatpush1.msra.mxu0 %v68
    %1026 = vmatprep.subr.mxu0 %v317
    %1027 = vmatpush2.msra.mxu0 %v316
    %1028 = vmatprep.subr.mxu0 %v309
    %1029 = vmatpush2.msra.mxu0 %v308
    %1030 = vmatprep.subr.mxu0 %v301
    %1031 = vmatpush2.msra.mxu0 %v300
    %1032 = vmatprep.subr.mxu0 %v293
    %1033 = vmatpush2.msra.mxu0 %v292
    %1034 = vmatprep.subr.mxu0 %v285
    %1035 = vmatpush2.msra.mxu0 %v284
    %1036 = vmatprep.subr.mxu0 %v277
    %1037 = vmatpush2.msra.mxu0 %v276
    %1038 = vmatprep.subr.mxu0 %v269
    %1039 = vmatpush2.msra.mxu0 %v268
    %1040 = vmatprep.subr.mxu0 %v261
    %1041 = vmatpush2.msra.mxu0 %v260
    %1042 = vmatprep.subr.mxu0 %v253
    %1043 = vmatpush2.msra.mxu0 %v252
    %1044 = vmatprep.subr.mxu0 %v245
    %1045 = vmatpush2.msra.mxu0 %v244
    %1046 = vmatprep.subr.mxu0 %v237
    %1047 = vmatpush2.msra.mxu0 %v236
    %1048 = vmatprep.subr.mxu0 %v229
    %1049 = vmatpush2.msra.mxu0 %v228
    %1050 = vmatprep.subr.mxu0 %v221
    %1051 = vmatpush2.msra.mxu0 %v220
    %1052 = vmatprep.subr.mxu0 %v213
    %1053 = vmatpush2.msra.mxu0 %v212
    %1054 = vmatprep.subr.mxu0 %v205
    %1055 = vmatpush2.msra.mxu0 %v204
    %1056 = vmatprep.subr.mxu0 %v197
    %1057 = vmatpush2.msra.mxu0 %v196
    %1058 = vmatprep.mubr.f32.mxu0 0.0
    %1059 = vmatmul.mubr.f32.gmra.mxu0 %v780
    %v1060 = vpop.f32.mrf.mxu0
    %v1061 = vadd.f32 0.0, %v1060
    %v1062 = vpop.f32.mrf.mxu0
    %v1063 = vadd.f32 0.0, %v1062
    %1064 = vdwg.mxu0
    %v1065 = vadd.f32 %v990, %v380
    %v1066 = vadd.f32 %v992, %v384
    %v1067 = vadd.f32 %v1061, %v388
    %v1068 = vadd.f32 %v1063, %v392
    %v1069 = vxor.u32 %v1065, 2147483648
    %v1070 = vxor.u32 %v1066, 2147483648
    %v1071 = vxor.u32 %v1067, 2147483648
    %v1072 = vmul.f32 %v1069, 1.442695
    %v1073 = vpow.pop %v1072
    %v1074 = vmul.f32 %v1070, 1.442695
    %v1075 = vpow.pop %v1074
    %v1076 = vmul.f32 %v1071, 1.442695
    %v1077 = vpow.pop %v1076
    %v1078 = vadd.f32 %v1073, 1.0
    %v1079 = vadd.f32 %v1075, 1.0
    %v1080 = vadd.f32 %v1077, 1.0
    %v1081 = vrcp.pop %v1078
    %v1082 = vmul.f32 1.0, %v1081
    %v1083 = vrcp.pop %v1079
    %v1084 = vmul.f32 1.0, %v1083
    %v1085 = vrcp.pop %v1080
    %v1086 = vmul.f32 1.0, %v1085
    %v1087 = vtanh.pop %v1068
    %v1088 = vmul.f32 %v1084, 0.0
    %v1089 = vmul.f32 %v1082, %v1087
    %v1090 = vadd.f32 %v1088, %v1089
    %v1091 = vtanh.pop %v1090
    %v1092 = vmul.f32 %v1086, %v1091
    %v1093 = vld [vmem:[#allocation2 + $0x20] sm:$0xff]
    %v1094 = vld [vmem:[#allocation2 + $0x28] sm:$0xff]
    %v1095 = vld [vmem:[#allocation2 + $0x30] sm:$0xff]
    %v1096 = vld [vmem:[#allocation2 + $0x38] sm:$0xff]
    %v1097 = vadd.f32 %v1093, %v848
    %v1098 = vadd.f32 %v1094, %v850
    %v1099 = vadd.f32 %v1095, %v919
    %v1100 = vadd.f32 %v1096, %v921
    %v1101 = vxor.u32 %v1097, 2147483648
    %v1102 = vxor.u32 %v1098, 2147483648
    %v1103 = vxor.u32 %v1099, 2147483648
    %v1104 = vmul.f32 %v1101, 1.442695
    %v1105 = vpow.pop %v1104
    %v1106 = vmul.f32 %v1102, 1.442695
    %v1107 = vpow.pop %v1106
    %v1108 = vmul.f32 %v1103, 1.442695
    %v1109 = vpow.pop %v1108
    %v1110 = vadd.f32 %v1105, 1.0
    %v1111 = vadd.f32 %v1107, 1.0
    %v1112 = vadd.f32 %v1109, 1.0
    %v1113 = vrcp.pop %v1110
    %v1114 = vmul.f32 1.0, %v1113
    %v1115 = vrcp.pop %v1111
    %v1116 = vmul.f32 1.0, %v1115
    %v1117 = vrcp.pop %v1112
    %v1118 = vmul.f32 1.0, %v1117
    %v1119 = vtanh.pop %v1100
    %v1120 = vmul.f32 %v1116, %v778
    %v1121 = vmul.f32 %v1114, %v1119
    %v1122 = vadd.f32 %v1120, %v1121
    %v1123 = vtanh.pop %v1122
    %v1124 = vmul.f32 %v1118, %v1123
    %1125 = vmatprep.subr.mxu0 %v183
    %1126 = vmatpush1.msra.mxu0 %v182
    %1127 = vmatprep.subr.mxu0 %v175
    %1128 = vmatpush1.msra.mxu0 %v174
    %1129 = vmatprep.subr.mxu0 %v167
    %1130 = vmatpush1.msra.mxu0 %v166
    %1131 = vmatprep.subr.mxu0 %v159
    %1132 = vmatpush1.msra.mxu0 %v158
    %1133 = vmatprep.subr.mxu0 %v151
    %1134 = vmatpush1.msra.mxu0 %v150
    %1135 = vmatprep.subr.mxu0 %v143
    %1136 = vmatpush1.msra.mxu0 %v142
    %1137 = vmatprep.subr.mxu0 %v135
    %1138 = vmatpush1.msra.mxu0 %v134
    %1139 = vmatprep.subr.mxu0 %v127
    %1140 = vmatpush1.msra.mxu0 %v126
    %1141 = vmatprep.subr.mxu0 %v119
    %1142 = vmatpush1.msra.mxu0 %v118
    %1143 = vmatprep.subr.mxu0 %v111
    %1144 = vmatpush1.msra.mxu0 %v110
    %1145 = vmatprep.subr.mxu0 %v103
    %1146 = vmatpush1.msra.mxu0 %v102
    %1147 = vmatprep.subr.mxu0 %v95
    %1148 = vmatpush1.msra.mxu0 %v94
    %1149 = vmatprep.subr.mxu0 %v87
    %1150 = vmatpush1.msra.mxu0 %v86
    %1151 = vmatprep.subr.mxu0 %v79
    %1152 = vmatpush1.msra.mxu0 %v78
    %1153 = vmatprep.subr.mxu0 %v71
    %1154 = vmatpush1.msra.mxu0 %v70
    %1155 = vmatprep.subr.mxu0 %v63
    %1156 = vmatpush1.msra.mxu0 %v62
    %1157 = vmatprep.subr.mxu0 %v311
    %1158 = vmatpush2.msra.mxu0 %v310
    %1159 = vmatprep.subr.mxu0 %v303
    %1160 = vmatpush2.msra.mxu0 %v302
    %1161 = vmatprep.subr.mxu0 %v295
    %1162 = vmatpush2.msra.mxu0 %v294
    %1163 = vmatprep.subr.mxu0 %v287
    %1164 = vmatpush2.msra.mxu0 %v286
    %1165 = vmatprep.subr.mxu0 %v279
    %1166 = vmatpush2.msra.mxu0 %v278
    %1167 = vmatprep.subr.mxu0 %v271
    %1168 = vmatpush2.msra.mxu0 %v270
    %1169 = vmatprep.subr.mxu0 %v263
    %1170 = vmatpush2.msra.mxu0 %v262
    %1171 = vmatprep.subr.mxu0 %v255
    %1172 = vmatpush2.msra.mxu0 %v254
    %1173 = vmatprep.subr.mxu0 %v247
    %1174 = vmatpush2.msra.mxu0 %v246
    %1175 = vmatprep.subr.mxu0 %v239
    %1176 = vmatpush2.msra.mxu0 %v238
    %1177 = vmatprep.subr.mxu0 %v231
    %1178 = vmatpush2.msra.mxu0 %v230
    %1179 = vmatprep.subr.mxu0 %v223
    %1180 = vmatpush2.msra.mxu0 %v222
    %1181 = vmatprep.subr.mxu0 %v215
    %1182 = vmatpush2.msra.mxu0 %v214
    %1183 = vmatprep.subr.mxu0 %v207
    %1184 = vmatpush2.msra.mxu0 %v206
    %1185 = vmatprep.subr.mxu0 %v199
    %1186 = vmatpush2.msra.mxu0 %v198
    %1187 = vmatprep.subr.mxu0 %v191
    %1188 = vmatpush2.msra.mxu0 %v190
    %1189 = vmatprep.mubr.f32.mxu0 %v1092
    %1190 = vmatmul.mubr.f32.gmra.mxu0 %v1124
    %v1191 = vpop.f32.mrf.mxu0
    %v1192 = vadd.f32 0.0, %v1191
    %v1193 = vpop.f32.mrf.mxu0
    %v1194 = vadd.f32 0.0, %v1193
    %1195 = vdwg.mxu0
    %1196 = vmatprep.subr.mxu0 %v185
    %1197 = vmatpush1.msra.mxu0 %v184
    %1198 = vmatprep.subr.mxu0 %v177
    %1199 = vmatpush1.msra.mxu0 %v176
    %1200 = vmatprep.subr.mxu0 %v169
    %1201 = vmatpush1.msra.mxu0 %v168
    %1202 = vmatprep.subr.mxu0 %v161
    %1203 = vmatpush1.msra.mxu0 %v160
    %1204 = vmatprep.subr.mxu0 %v153
    %1205 = vmatpush1.msra.mxu0 %v152
    %1206 = vmatprep.subr.mxu0 %v145
    %1207 = vmatpush1.msra.mxu0 %v144
    %1208 = vmatprep.subr.mxu0 %v137
    %1209 = vmatpush1.msra.mxu0 %v136
    %1210 = vmatprep.subr.mxu0 %v129
    %1211 = vmatpush1.msra.mxu0 %v128
    %1212 = vmatprep.subr.mxu0 %v121
    %1213 = vmatpush1.msra.mxu0 %v120
    %1214 = vmatprep.subr.mxu0 %v113
    %1215 = vmatpush1.msra.mxu0 %v112
    %1216 = vmatprep.subr.mxu0 %v105
    %1217 = vmatpush1.msra.mxu0 %v104
    %1218 = vmatprep.subr.mxu0 %v97
    %1219 = vmatpush1.msra.mxu0 %v96
    %1220 = vmatprep.subr.mxu0 %v89
    %1221 = vmatpush1.msra.mxu0 %v88
    %1222 = vmatprep.subr.mxu0 %v81
    %1223 = vmatpush1.msra.mxu0 %v80
    %1224 = vmatprep.subr.mxu0 %v73
    %1225 = vmatpush1.msra.mxu0 %v72
    %1226 = vmatprep.subr.mxu0 %v65
    %1227 = vmatpush1.msra.mxu0 %v64
    %1228 = vmatprep.subr.mxu0 %v313
    %1229 = vmatpush2.msra.mxu0 %v312
    %1230 = vmatprep.subr.mxu0 %v305
    %1231 = vmatpush2.msra.mxu0 %v304
    %1232 = vmatprep.subr.mxu0 %v297
    %1233 = vmatpush2.msra.mxu0 %v296
    %1234 = vmatprep.subr.mxu0 %v289
    %1235 = vmatpush2.msra.mxu0 %v288
    %1236 = vmatprep.subr.mxu0 %v281
    %1237 = vmatpush2.msra.mxu0 %v280
    %1238 = vmatprep.subr.mxu0 %v273
    %1239 = vmatpush2.msra.mxu0 %v272
    %1240 = vmatprep.subr.mxu0 %v265
    %1241 = vmatpush2.msra.mxu0 %v264
    %1242 = vmatprep.subr.mxu0 %v257
    %1243 = vmatpush2.msra.mxu0 %v256
    %1244 = vmatprep.subr.mxu0 %v249
    %1245 = vmatpush2.msra.mxu0 %v248
    %1246 = vmatprep.subr.mxu0 %v241
    %1247 = vmatpush2.msra.mxu0 %v240
    %1248 = vmatprep.subr.mxu0 %v233
    %1249 = vmatpush2.msra.mxu0 %v232
    %1250 = vmatprep.subr.mxu0 %v225
    %1251 = vmatpush2.msra.mxu0 %v224
    %1252 = vmatprep.subr.mxu0 %v217
    %1253 = vmatpush2.msra.mxu0 %v216
    %1254 = vmatprep.subr.mxu0 %v209
    %1255 = vmatpush2.msra.mxu0 %v208
    %1256 = vmatprep.subr.mxu0 %v201
    %1257 = vmatpush2.msra.mxu0 %v200
    %1258 = vmatprep.subr.mxu0 %v193
    %1259 = vmatpush2.msra.mxu0 %v192
    %1260 = vmatprep.mubr.f32.mxu0 %v1092
    %1261 = vmatmul.mubr.f32.gmra.mxu0 %v1124
    %v1262 = vpop.f32.mrf.mxu0
    %v1263 = vadd.f32 0.0, %v1262
    %v1264 = vpop.f32.mrf.mxu0
    %v1265 = vadd.f32 0.0, %v1264
    %1266 = vdwg.mxu0
    %1267 = vmatprep.subr.mxu0 %v187
    %1268 = vmatpush1.msra.mxu0 %v186
    %1269 = vmatprep.subr.mxu0 %v179
    %1270 = vmatpush1.msra.mxu0 %v178
    %1271 = vmatprep.subr.mxu0 %v171
    %1272 = vmatpush1.msra.mxu0 %v170
    %1273 = vmatprep.subr.mxu0 %v163
    %1274 = vmatpush1.msra.mxu0 %v162
    %1275 = vmatprep.subr.mxu0 %v155
    %1276 = vmatpush1.msra.mxu0 %v154
    %1277 = vmatprep.subr.mxu0 %v147
    %1278 = vmatpush1.msra.mxu0 %v146
    %1279 = vmatprep.subr.mxu0 %v139
    %1280 = vmatpush1.msra.mxu0 %v138
    %1281 = vmatprep.subr.mxu0 %v131
    %1282 = vmatpush1.msra.mxu0 %v130
    %1283 = vmatprep.subr.mxu0 %v123
    %1284 = vmatpush1.msra.mxu0 %v122
    %1285 = vmatprep.subr.mxu0 %v115
    %1286 = vmatpush1.msra.mxu0 %v114
    %1287 = vmatprep.subr.mxu0 %v107
    %1288 = vmatpush1.msra.mxu0 %v106
    %1289 = vmatprep.subr.mxu0 %v99
    %1290 = vmatpush1.msra.mxu0 %v98
    %1291 = vmatprep.subr.mxu0 %v91
    %1292 = vmatpush1.msra.mxu0 %v90
    %1293 = vmatprep.subr.mxu0 %v83
    %1294 = vmatpush1.msra.mxu0 %v82
    %1295 = vmatprep.subr.mxu0 %v75
    %1296 = vmatpush1.msra.mxu0 %v74
    %1297 = vmatprep.subr.mxu0 %v67
    %1298 = vmatpush1.msra.mxu0 %v66
    %1299 = vmatprep.subr.mxu0 %v315
    %1300 = vmatpush2.msra.mxu0 %v314
    %1301 = vmatprep.subr.mxu0 %v307
    %1302 = vmatpush2.msra.mxu0 %v306
    %1303 = vmatprep.subr.mxu0 %v299
    %1304 = vmatpush2.msra.mxu0 %v298
    %1305 = vmatprep.subr.mxu0 %v291
    %1306 = vmatpush2.msra.mxu0 %v290
    %1307 = vmatprep.subr.mxu0 %v283
    %1308 = vmatpush2.msra.mxu0 %v282
    %1309 = vmatprep.subr.mxu0 %v275
    %1310 = vmatpush2.msra.mxu0 %v274
    %1311 = vmatprep.subr.mxu0 %v267
    %1312 = vmatpush2.msra.mxu0 %v266
    %1313 = vmatprep.subr.mxu0 %v259
    %1314 = vmatpush2.msra.mxu0 %v258
    %1315 = vmatprep.subr.mxu0 %v251
    %1316 = vmatpush2.msra.mxu0 %v250
    %1317 = vmatprep.subr.mxu0 %v243
    %1318 = vmatpush2.msra.mxu0 %v242
    %1319 = vmatprep.subr.mxu0 %v235
    %1320 = vmatpush2.msra.mxu0 %v234
    %1321 = vmatprep.subr.mxu0 %v227
    %1322 = vmatpush2.msra.mxu0 %v226
    %1323 = vmatprep.subr.mxu0 %v219
    %1324 = vmatpush2.msra.mxu0 %v218
    %1325 = vmatprep.subr.mxu0 %v211
    %1326 = vmatpush2.msra.mxu0 %v210
    %1327 = vmatprep.subr.mxu0 %v203
    %1328 = vmatpush2.msra.mxu0 %v202
    %1329 = vmatprep.subr.mxu0 %v195
    %1330 = vmatpush2.msra.mxu0 %v194
    %1331 = vmatprep.mubr.f32.mxu0 %v1092
    %1332 = vmatmul.mubr.f32.gmra.mxu0 %v1124
    %v1333 = vpop.f32.mrf.mxu0
    %v1334 = vadd.f32 0.0, %v1333
    %v1335 = vpop.f32.mrf.mxu0
    %v1336 = vadd.f32 0.0, %v1335
    %1337 = vdwg.mxu0
    %1338 = vmatprep.subr.mxu0 %v189
    %1339 = vmatpush1.msra.mxu0 %v188
    %1340 = vmatprep.subr.mxu0 %v181
    %1341 = vmatpush1.msra.mxu0 %v180
    %1342 = vmatprep.subr.mxu0 %v173
    %1343 = vmatpush1.msra.mxu0 %v172
    %1344 = vmatprep.subr.mxu0 %v165
    %1345 = vmatpush1.msra.mxu0 %v164
    %1346 = vmatprep.subr.mxu0 %v157
    %1347 = vmatpush1.msra.mxu0 %v156
    %1348 = vmatprep.subr.mxu0 %v149
    %1349 = vmatpush1.msra.mxu0 %v148
    %1350 = vmatprep.subr.mxu0 %v141
    %1351 = vmatpush1.msra.mxu0 %v140
    %1352 = vmatprep.subr.mxu0 %v133
    %1353 = vmatpush1.msra.mxu0 %v132
    %1354 = vmatprep.subr.mxu0 %v125
    %1355 = vmatpush1.msra.mxu0 %v124
    %1356 = vmatprep.subr.mxu0 %v117
    %1357 = vmatpush1.msra.mxu0 %v116
    %1358 = vmatprep.subr.mxu0 %v109
    %1359 = vmatpush1.msra.mxu0 %v108
    %1360 = vmatprep.subr.mxu0 %v101
    %1361 = vmatpush1.msra.mxu0 %v100
    %1362 = vmatprep.subr.mxu0 %v93
    %1363 = vmatpush1.msra.mxu0 %v92
    %1364 = vmatprep.subr.mxu0 %v85
    %1365 = vmatpush1.msra.mxu0 %v84
    %1366 = vmatprep.subr.mxu0 %v77
    %1367 = vmatpush1.msra.mxu0 %v76
    %1368 = vmatprep.subr.mxu0 %v69
    %1369 = vmatpush1.msra.mxu0 %v68
    %1370 = vmatprep.subr.mxu0 %v317
    %1371 = vmatpush2.msra.mxu0 %v316
    %1372 = vmatprep.subr.mxu0 %v309
    %1373 = vmatpush2.msra.mxu0 %v308
    %1374 = vmatprep.subr.mxu0 %v301
    %1375 = vmatpush2.msra.mxu0 %v300
    %1376 = vmatprep.subr.mxu0 %v293
    %1377 = vmatpush2.msra.mxu0 %v292
    %1378 = vmatprep.subr.mxu0 %v285
    %1379 = vmatpush2.msra.mxu0 %v284
    %1380 = vmatprep.subr.mxu0 %v277
    %1381 = vmatpush2.msra.mxu0 %v276
    %1382 = vmatprep.subr.mxu0 %v269
    %1383 = vmatpush2.msra.mxu0 %v268
    %1384 = vmatprep.subr.mxu0 %v261
    %1385 = vmatpush2.msra.mxu0 %v260
    %1386 = vmatprep.subr.mxu0 %v253
    %1387 = vmatpush2.msra.mxu0 %v252
    %1388 = vmatprep.subr.mxu0 %v245
    %1389 = vmatpush2.msra.mxu0 %v244
    %1390 = vmatprep.subr.mxu0 %v237
    %1391 = vmatpush2.msra.mxu0 %v236
    %1392 = vmatprep.subr.mxu0 %v229
    %1393 = vmatpush2.msra.mxu0 %v228
    %1394 = vmatprep.subr.mxu0 %v221
    %1395 = vmatpush2.msra.mxu0 %v220
    %1396 = vmatprep.subr.mxu0 %v213
    %1397 = vmatpush2.msra.mxu0 %v212
    %1398 = vmatprep.subr.mxu0 %v205
    %1399 = vmatpush2.msra.mxu0 %v204
    %1400 = vmatprep.subr.mxu0 %v197
    %1401 = vmatpush2.msra.mxu0 %v196
    %1402 = vmatprep.mubr.f32.mxu0 %v1092
    %1403 = vmatmul.mubr.f32.gmra.mxu0 %v1124
    %v1404 = vpop.f32.mrf.mxu0
    %v1405 = vadd.f32 0.0, %v1404
    %v1406 = vpop.f32.mrf.mxu0
    %v1407 = vadd.f32 0.0, %v1406
    %1408 = vdwg.mxu0
    %v1409 = vadd.f32 %v1334, %v380
    %v1410 = vadd.f32 %v1336, %v384
    %v1411 = vadd.f32 %v1405, %v388
    %v1412 = vadd.f32 %v1407, %v392
    %v1413 = vxor.u32 %v1409, 2147483648
    %v1414 = vxor.u32 %v1410, 2147483648
    %v1415 = vxor.u32 %v1411, 2147483648
    %v1416 = vmul.f32 %v1413, 1.442695
    %v1417 = vpow.pop %v1416
    %v1418 = vmul.f32 %v1414, 1.442695
    %v1419 = vpow.pop %v1418
    %v1420 = vmul.f32 %v1415, 1.442695
    %v1421 = vpow.pop %v1420
    %v1422 = vadd.f32 %v1417, 1.0
    %v1423 = vadd.f32 %v1419, 1.0
    %v1424 = vadd.f32 %v1421, 1.0
    %v1425 = vrcp.pop %v1422
    %v1426 = vmul.f32 1.0, %v1425
    %v1427 = vrcp.pop %v1423
    %v1428 = vmul.f32 1.0, %v1427
    %v1429 = vrcp.pop %v1424
    %v1430 = vmul.f32 1.0, %v1429
    %v1431 = vtanh.pop %v1412
    %v1432 = vmul.f32 %v1428, %v1090
    %v1433 = vmul.f32 %v1426, %v1431
    %v1434 = vadd.f32 %v1432, %v1433
    %v1435 = vtanh.pop %v1434
    %v1436 = vmul.f32 %v1430, %v1435
    %v1437 = vld [vmem:[#allocation2 + $0x40] sm:$0xff]
    %v1438 = vld [vmem:[#allocation2 + $0x48] sm:$0xff]
    %v1439 = vld [vmem:[#allocation2 + $0x50] sm:$0xff]
    %v1440 = vld [vmem:[#allocation2 + $0x58] sm:$0xff]
    %v1441 = vadd.f32 %v1437, %v1192
    %v1442 = vadd.f32 %v1438, %v1194
    %v1443 = vadd.f32 %v1439, %v1263
    %v1444 = vadd.f32 %v1440, %v1265
    %v1445 = vxor.u32 %v1441, 2147483648
    %v1446 = vxor.u32 %v1442, 2147483648
    %v1447 = vxor.u32 %v1443, 2147483648
    %v1448 = vmul.f32 %v1445, 1.442695
    %v1449 = vpow.pop %v1448
    %v1450 = vmul.f32 %v1446, 1.442695
    %v1451 = vpow.pop %v1450
    %v1452 = vmul.f32 %v1447, 1.442695
    %v1453 = vpow.pop %v1452
    %v1454 = vadd.f32 %v1449, 1.0
    %v1455 = vadd.f32 %v1451, 1.0
    %v1456 = vadd.f32 %v1453, 1.0
    %v1457 = vrcp.pop %v1454
    %v1458 = vmul.f32 1.0, %v1457
    %v1459 = vrcp.pop %v1455
    %v1460 = vmul.f32 1.0, %v1459
    %v1461 = vrcp.pop %v1456
    %v1462 = vmul.f32 1.0, %v1461
    %v1463 = vtanh.pop %v1444
    %v1464 = vmul.f32 %v1460, %v1122
    %v1465 = vmul.f32 %v1458, %v1463
    %v1466 = vadd.f32 %v1464, %v1465
    %v1467 = vtanh.pop %v1466
    %v1468 = vmul.f32 %v1462, %v1467
    %1469 = vmatprep.subr.mxu0 %v183
    %1470 = vmatpush1.msra.mxu0 %v182
    %1471 = vmatprep.subr.mxu0 %v175
    %1472 = vmatpush1.msra.mxu0 %v174
    %1473 = vmatprep.subr.mxu0 %v167
    %1474 = vmatpush1.msra.mxu0 %v166
    %1475 = vmatprep.subr.mxu0 %v159
    %1476 = vmatpush1.msra.mxu0 %v158
    %1477 = vmatprep.subr.mxu0 %v151
    %1478 = vmatpush1.msra.mxu0 %v150
    %1479 = vmatprep.subr.mxu0 %v143
    %1480 = vmatpush1.msra.mxu0 %v142
    %1481 = vmatprep.subr.mxu0 %v135
    %1482 = vmatpush1.msra.mxu0 %v134
    %1483 = vmatprep.subr.mxu0 %v127
    %1484 = vmatpush1.msra.mxu0 %v126
    %1485 = vmatprep.subr.mxu0 %v119
    %1486 = vmatpush1.msra.mxu0 %v118
    %1487 = vmatprep.subr.mxu0 %v111
    %1488 = vmatpush1.msra.mxu0 %v110
    %1489 = vmatprep.subr.mxu0 %v103
    %1490 = vmatpush1.msra.mxu0 %v102
    %1491 = vmatprep.subr.mxu0 %v95
    %1492 = vmatpush1.msra.mxu0 %v94
    %1493 = vmatprep.subr.mxu0 %v87
    %1494 = vmatpush1.msra.mxu0 %v86
    %1495 = vmatprep.subr.mxu0 %v79
    %1496 = vmatpush1.msra.mxu0 %v78
    %1497 = vmatprep.subr.mxu0 %v71
    %1498 = vmatpush1.msra.mxu0 %v70
    %1499 = vmatprep.subr.mxu0 %v63
    %1500 = vmatpush1.msra.mxu0 %v62
    %1501 = vmatprep.subr.mxu0 %v311
    %1502 = vmatpush2.msra.mxu0 %v310
    %1503 = vmatprep.subr.mxu0 %v303
    %1504 = vmatpush2.msra.mxu0 %v302
    %1505 = vmatprep.subr.mxu0 %v295
    %1506 = vmatpush2.msra.mxu0 %v294
    %1507 = vmatprep.subr.mxu0 %v287
    %1508 = vmatpush2.msra.mxu0 %v286
    %1509 = vmatprep.subr.mxu0 %v279
    %1510 = vmatpush2.msra.mxu0 %v278
    %1511 = vmatprep.subr.mxu0 %v271
    %1512 = vmatpush2.msra.mxu0 %v270
    %1513 = vmatprep.subr.mxu0 %v263
    %1514 = vmatpush2.msra.mxu0 %v262
    %1515 = vmatprep.subr.mxu0 %v255
    %1516 = vmatpush2.msra.mxu0 %v254
    %1517 = vmatprep.subr.mxu0 %v247
    %1518 = vmatpush2.msra.mxu0 %v246
    %1519 = vmatprep.subr.mxu0 %v239
    %1520 = vmatpush2.msra.mxu0 %v238
    %1521 = vmatprep.subr.mxu0 %v231
    %1522 = vmatpush2.msra.mxu0 %v230
    %1523 = vmatprep.subr.mxu0 %v223
    %1524 = vmatpush2.msra.mxu0 %v222
    %1525 = vmatprep.subr.mxu0 %v215
    %1526 = vmatpush2.msra.mxu0 %v214
    %1527 = vmatprep.subr.mxu0 %v207
    %1528 = vmatpush2.msra.mxu0 %v206
    %1529 = vmatprep.subr.mxu0 %v199
    %1530 = vmatpush2.msra.mxu0 %v198
    %1531 = vmatprep.subr.mxu0 %v191
    %1532 = vmatpush2.msra.mxu0 %v190
    %1533 = vmatprep.mubr.f32.mxu0 %v1436
    %1534 = vmatmul.mubr.f32.gmra.mxu0 %v1468
    %v1535 = vpop.f32.mrf.mxu0
    %v1536 = vadd.f32 0.0, %v1535
    %v1537 = vpop.f32.mrf.mxu0
    %v1538 = vadd.f32 0.0, %v1537
    %1539 = vdwg.mxu0
    %1540 = vmatprep.subr.mxu0 %v185
    %1541 = vmatpush1.msra.mxu0 %v184
    %1542 = vmatprep.subr.mxu0 %v177
    %1543 = vmatpush1.msra.mxu0 %v176
    %1544 = vmatprep.subr.mxu0 %v169
    %1545 = vmatpush1.msra.mxu0 %v168
    %1546 = vmatprep.subr.mxu0 %v161
    %1547 = vmatpush1.msra.mxu0 %v160
    %1548 = vmatprep.subr.mxu0 %v153
    %1549 = vmatpush1.msra.mxu0 %v152
    %1550 = vmatprep.subr.mxu0 %v145
    %1551 = vmatpush1.msra.mxu0 %v144
    %1552 = vmatprep.subr.mxu0 %v137
    %1553 = vmatpush1.msra.mxu0 %v136
    %1554 = vmatprep.subr.mxu0 %v129
    %1555 = vmatpush1.msra.mxu0 %v128
    %1556 = vmatprep.subr.mxu0 %v121
    %1557 = vmatpush1.msra.mxu0 %v120
    %1558 = vmatprep.subr.mxu0 %v113
    %1559 = vmatpush1.msra.mxu0 %v112
    %1560 = vmatprep.subr.mxu0 %v105
    %1561 = vmatpush1.msra.mxu0 %v104
    %1562 = vmatprep.subr.mxu0 %v97
    %1563 = vmatpush1.msra.mxu0 %v96
    %1564 = vmatprep.subr.mxu0 %v89
    %1565 = vmatpush1.msra.mxu0 %v88
    %1566 = vmatprep.subr.mxu0 %v81
    %1567 = vmatpush1.msra.mxu0 %v80
    %1568 = vmatprep.subr.mxu0 %v73
    %1569 = vmatpush1.msra.mxu0 %v72
    %1570 = vmatprep.subr.mxu0 %v65
    %1571 = vmatpush1.msra.mxu0 %v64
    %1572 = vmatprep.subr.mxu0 %v313
    %1573 = vmatpush2.msra.mxu0 %v312
    %1574 = vmatprep.subr.mxu0 %v305
    %1575 = vmatpush2.msra.mxu0 %v304
    %1576 = vmatprep.subr.mxu0 %v297
    %1577 = vmatpush2.msra.mxu0 %v296
    %1578 = vmatprep.subr.mxu0 %v289
    %1579 = vmatpush2.msra.mxu0 %v288
    %1580 = vmatprep.subr.mxu0 %v281
    %1581 = vmatpush2.msra.mxu0 %v280
    %1582 = vmatprep.subr.mxu0 %v273
    %1583 = vmatpush2.msra.mxu0 %v272
    %1584 = vmatprep.subr.mxu0 %v265
    %1585 = vmatpush2.msra.mxu0 %v264
    %1586 = vmatprep.subr.mxu0 %v257
    %1587 = vmatpush2.msra.mxu0 %v256
    %1588 = vmatprep.subr.mxu0 %v249
    %1589 = vmatpush2.msra.mxu0 %v248
    %1590 = vmatprep.subr.mxu0 %v241
    %1591 = vmatpush2.msra.mxu0 %v240
    %1592 = vmatprep.subr.mxu0 %v233
    %1593 = vmatpush2.msra.mxu0 %v232
    %1594 = vmatprep.subr.mxu0 %v225
    %1595 = vmatpush2.msra.mxu0 %v224
    %1596 = vmatprep.subr.mxu0 %v217
    %1597 = vmatpush2.msra.mxu0 %v216
    %1598 = vmatprep.subr.mxu0 %v209
    %1599 = vmatpush2.msra.mxu0 %v208
    %1600 = vmatprep.subr.mxu0 %v201
    %1601 = vmatpush2.msra.mxu0 %v200
    %1602 = vmatprep.subr.mxu0 %v193
    %1603 = vmatpush2.msra.mxu0 %v192
    %1604 = vmatprep.mubr.f32.mxu0 %v1436
    %1605 = vmatmul.mubr.f32.gmra.mxu0 %v1468
    %v1606 = vpop.f32.mrf.mxu0
    %v1607 = vadd.f32 0.0, %v1606
    %v1608 = vpop.f32.mrf.mxu0
    %v1609 = vadd.f32 0.0, %v1608
    %1610 = vdwg.mxu0
    %1611 = vmatprep.subr.mxu0 %v187
    %1612 = vmatpush1.msra.mxu0 %v186
    %1613 = vmatprep.subr.mxu0 %v179
    %1614 = vmatpush1.msra.mxu0 %v178
    %1615 = vmatprep.subr.mxu0 %v171
    %1616 = vmatpush1.msra.mxu0 %v170
    %1617 = vmatprep.subr.mxu0 %v163
    %1618 = vmatpush1.msra.mxu0 %v162
    %1619 = vmatprep.subr.mxu0 %v155
    %1620 = vmatpush1.msra.mxu0 %v154
    %1621 = vmatprep.subr.mxu0 %v147
    %1622 = vmatpush1.msra.mxu0 %v146
    %1623 = vmatprep.subr.mxu0 %v139
    %1624 = vmatpush1.msra.mxu0 %v138
    %1625 = vmatprep.subr.mxu0 %v131
    %1626 = vmatpush1.msra.mxu0 %v130
    %1627 = vmatprep.subr.mxu0 %v123
    %1628 = vmatpush1.msra.mxu0 %v122
    %1629 = vmatprep.subr.mxu0 %v115
    %1630 = vmatpush1.msra.mxu0 %v114
    %1631 = vmatprep.subr.mxu0 %v107
    %1632 = vmatpush1.msra.mxu0 %v106
    %1633 = vmatprep.subr.mxu0 %v99
    %1634 = vmatpush1.msra.mxu0 %v98
    %1635 = vmatprep.subr.mxu0 %v91
    %1636 = vmatpush1.msra.mxu0 %v90
    %1637 = vmatprep.subr.mxu0 %v83
    %1638 = vmatpush1.msra.mxu0 %v82
    %1639 = vmatprep.subr.mxu0 %v75
    %1640 = vmatpush1.msra.mxu0 %v74
    %1641 = vmatprep.subr.mxu0 %v67
    %1642 = vmatpush1.msra.mxu0 %v66
    %1643 = vmatprep.subr.mxu0 %v315
    %1644 = vmatpush2.msra.mxu0 %v314
    %1645 = vmatprep.subr.mxu0 %v307
    %1646 = vmatpush2.msra.mxu0 %v306
    %1647 = vmatprep.subr.mxu0 %v299
    %1648 = vmatpush2.msra.mxu0 %v298
    %1649 = vmatprep.subr.mxu0 %v291
    %1650 = vmatpush2.msra.mxu0 %v290
    %1651 = vmatprep.subr.mxu0 %v283
    %1652 = vmatpush2.msra.mxu0 %v282
    %1653 = vmatprep.subr.mxu0 %v275
    %1654 = vmatpush2.msra.mxu0 %v274
    %1655 = vmatprep.subr.mxu0 %v267
    %1656 = vmatpush2.msra.mxu0 %v266
    %1657 = vmatprep.subr.mxu0 %v259
    %1658 = vmatpush2.msra.mxu0 %v258
    %1659 = vmatprep.subr.mxu0 %v251
    %1660 = vmatpush2.msra.mxu0 %v250
    %1661 = vmatprep.subr.mxu0 %v243
    %1662 = vmatpush2.msra.mxu0 %v242
    %1663 = vmatprep.subr.mxu0 %v235
    %1664 = vmatpush2.msra.mxu0 %v234
    %1665 = vmatprep.subr.mxu0 %v227
    %1666 = vmatpush2.msra.mxu0 %v226
    %1667 = vmatprep.subr.mxu0 %v219
    %1668 = vmatpush2.msra.mxu0 %v218
    %1669 = vmatprep.subr.mxu0 %v211
    %1670 = vmatpush2.msra.mxu0 %v210
    %1671 = vmatprep.subr.mxu0 %v203
    %1672 = vmatpush2.msra.mxu0 %v202
    %1673 = vmatprep.subr.mxu0 %v195
    %1674 = vmatpush2.msra.mxu0 %v194
    %1675 = vmatprep.mubr.f32.mxu0 %v1436
    %1676 = vmatmul.mubr.f32.gmra.mxu0 %v1468
    %v1677 = vpop.f32.mrf.mxu0
    %v1678 = vadd.f32 0.0, %v1677
    %v1679 = vpop.f32.mrf.mxu0
    %v1680 = vadd.f32 0.0, %v1679
    %1681 = vdwg.mxu0
    %1682 = vmatprep.subr.mxu0 %v189
    %1683 = vmatpush1.msra.mxu0 %v188
    %1684 = vmatprep.subr.mxu0 %v181
    %1685 = vmatpush1.msra.mxu0 %v180
    %1686 = vmatprep.subr.mxu0 %v173
    %1687 = vmatpush1.msra.mxu0 %v172
    %1688 = vmatprep.subr.mxu0 %v165
    %1689 = vmatpush1.msra.mxu0 %v164
    %1690 = vmatprep.subr.mxu0 %v157
    %1691 = vmatpush1.msra.mxu0 %v156
    %1692 = vmatprep.subr.mxu0 %v149
    %1693 = vmatpush1.msra.mxu0 %v148
    %1694 = vmatprep.subr.mxu0 %v141
    %1695 = vmatpush1.msra.mxu0 %v140
    %1696 = vmatprep.subr.mxu0 %v133
    %1697 = vmatpush1.msra.mxu0 %v132
    %1698 = vmatprep.subr.mxu0 %v125
    %1699 = vmatpush1.msra.mxu0 %v124
    %1700 = vmatprep.subr.mxu0 %v117
    %1701 = vmatpush1.msra.mxu0 %v116
    %1702 = vmatprep.subr.mxu0 %v109
    %1703 = vmatpush1.msra.mxu0 %v108
    %1704 = vmatprep.subr.mxu0 %v101
    %1705 = vmatpush1.msra.mxu0 %v100
    %1706 = vmatprep.subr.mxu0 %v93
    %1707 = vmatpush1.msra.mxu0 %v92
    %1708 = vmatprep.subr.mxu0 %v85
    %1709 = vmatpush1.msra.mxu0 %v84
    %1710 = vmatprep.subr.mxu0 %v77
    %1711 = vmatpush1.msra.mxu0 %v76
    %1712 = vmatprep.subr.mxu0 %v69
    %1713 = vmatpush1.msra.mxu0 %v68
    %1714 = vmatprep.subr.mxu0 %v317
    %1715 = vmatpush2.msra.mxu0 %v316
    %1716 = vmatprep.subr.mxu0 %v309
    %1717 = vmatpush2.msra.mxu0 %v308
    %1718 = vmatprep.subr.mxu0 %v301
    %1719 = vmatpush2.msra.mxu0 %v300
    %1720 = vmatprep.subr.mxu0 %v293
    %1721 = vmatpush2.msra.mxu0 %v292
    %1722 = vmatprep.subr.mxu0 %v285
    %1723 = vmatpush2.msra.mxu0 %v284
    %1724 = vmatprep.subr.mxu0 %v277
    %1725 = vmatpush2.msra.mxu0 %v276
    %1726 = vmatprep.subr.mxu0 %v269
    %1727 = vmatpush2.msra.mxu0 %v268
    %1728 = vmatprep.subr.mxu0 %v261
    %1729 = vmatpush2.msra.mxu0 %v260
    %1730 = vmatprep.subr.mxu0 %v253
    %1731 = vmatpush2.msra.mxu0 %v252
    %1732 = vmatprep.subr.mxu0 %v245
    %1733 = vmatpush2.msra.mxu0 %v244
    %1734 = vmatprep.subr.mxu0 %v237
    %1735 = vmatpush2.msra.mxu0 %v236
    %1736 = vmatprep.subr.mxu0 %v229
    %1737 = vmatpush2.msra.mxu0 %v228
    %1738 = vmatprep.subr.mxu0 %v221
    %1739 = vmatpush2.msra.mxu0 %v220
    %1740 = vmatprep.subr.mxu0 %v213
    %1741 = vmatpush2.msra.mxu0 %v212
    %1742 = vmatprep.subr.mxu0 %v205
    %1743 = vmatpush2.msra.mxu0 %v204
    %1744 = vmatprep.subr.mxu0 %v197
    %1745 = vmatpush2.msra.mxu0 %v196
    %1746 = vmatprep.mubr.f32.mxu0 %v1436
    %1747 = vmatmul.mubr.f32.gmra.mxu0 %v1468
    %v1748 = vpop.f32.mrf.mxu0
    %v1749 = vadd.f32 0.0, %v1748
    %v1750 = vpop.f32.mrf.mxu0
    %v1751 = vadd.f32 0.0, %v1750
    %1752 = vdwg.mxu0
    %v1753 = vadd.f32 %v1678, %v380
    %v1754 = vadd.f32 %v1680, %v384
    %v1755 = vadd.f32 %v1749, %v388
    %v1756 = vadd.f32 %v1751, %v392
    %v1757 = vxor.u32 %v1753, 2147483648
    %v1758 = vxor.u32 %v1754, 2147483648
    %v1759 = vxor.u32 %v1755, 2147483648
    %v1760 = vmul.f32 %v1757, 1.442695
    %v1761 = vpow.pop %v1760
    %v1762 = vmul.f32 %v1758, 1.442695
    %v1763 = vpow.pop %v1762
    %v1764 = vmul.f32 %v1759, 1.442695
    %v1765 = vpow.pop %v1764
    %v1766 = vadd.f32 %v1761, 1.0
    %v1767 = vadd.f32 %v1763, 1.0
    %v1768 = vadd.f32 %v1765, 1.0
    %v1769 = vrcp.pop %v1766
    %v1770 = vmul.f32 1.0, %v1769
    %v1771 = vrcp.pop %v1767
    %v1772 = vmul.f32 1.0, %v1771
    %v1773 = vrcp.pop %v1768
    %v1774 = vmul.f32 1.0, %v1773
    %v1775 = vtanh.pop %v1756
    %v1776 = vmul.f32 %v1772, %v1434
    %v1777 = vmul.f32 %v1770, %v1775
    %v1778 = vadd.f32 %v1776, %v1777
    %v1779 = vtanh.pop %v1778
    %v1780 = vmul.f32 %v1774, %v1779
    %v1781 = vld [vmem:[#allocation2 + $0x60] sm:$0xff]
    %v1782 = vld [vmem:[#allocation2 + $0x68] sm:$0xff]
    %v1783 = vld [vmem:[#allocation2 + $0x70] sm:$0xff]
    %v1784 = vld [vmem:[#allocation2 + $0x78] sm:$0xff]
    %v1785 = vadd.f32 %v1781, %v1536
    %v1786 = vadd.f32 %v1782, %v1538
    %v1787 = vadd.f32 %v1783, %v1607
    %v1788 = vadd.f32 %v1784, %v1609
    %v1789 = vxor.u32 %v1785, 2147483648
    %v1790 = vxor.u32 %v1786, 2147483648
    %v1791 = vxor.u32 %v1787, 2147483648
    %v1792 = vmul.f32 %v1789, 1.442695
    %v1793 = vpow.pop %v1792
    %v1794 = vmul.f32 %v1790, 1.442695
    %v1795 = vpow.pop %v1794
    %v1796 = vmul.f32 %v1791, 1.442695
    %v1797 = vpow.pop %v1796
    %v1798 = vadd.f32 %v1793, 1.0
    %v1799 = vadd.f32 %v1795, 1.0
    %v1800 = vadd.f32 %v1797, 1.0
    %v1801 = vrcp.pop %v1798
    %v1802 = vmul.f32 1.0, %v1801
    %v1803 = vrcp.pop %v1799
    %v1804 = vmul.f32 1.0, %v1803
    %v1805 = vrcp.pop %v1800
    %v1806 = vmul.f32 1.0, %v1805
    %v1807 = vtanh.pop %v1788
    %v1808 = vmul.f32 %v1804, %v1466
    %v1809 = vmul.f32 %v1802, %v1807
    %v1810 = vadd.f32 %v1808, %v1809
    %v1811 = vtanh.pop %v1810
    %v1812 = vmul.f32 %v1806, %v1811
    %1813 = vmatprep.subr.mxu0 %v183
    %1814 = vmatpush1.msra.mxu0 %v182
    %1815 = vmatprep.subr.mxu0 %v175
    %1816 = vmatpush1.msra.mxu0 %v174
    %1817 = vmatprep.subr.mxu0 %v167
    %1818 = vmatpush1.msra.mxu0 %v166
    %1819 = vmatprep.subr.mxu0 %v159
    %1820 = vmatpush1.msra.mxu0 %v158
    %1821 = vmatprep.subr.mxu0 %v151
    %1822 = vmatpush1.msra.mxu0 %v150
    %1823 = vmatprep.subr.mxu0 %v143
    %1824 = vmatpush1.msra.mxu0 %v142
    %1825 = vmatprep.subr.mxu0 %v135
    %1826 = vmatpush1.msra.mxu0 %v134
    %1827 = vmatprep.subr.mxu0 %v127
    %1828 = vmatpush1.msra.mxu0 %v126
    %1829 = vmatprep.subr.mxu0 %v119
    %1830 = vmatpush1.msra.mxu0 %v118
    %1831 = vmatprep.subr.mxu0 %v111
    %1832 = vmatpush1.msra.mxu0 %v110
    %1833 = vmatprep.subr.mxu0 %v103
    %1834 = vmatpush1.msra.mxu0 %v102
    %1835 = vmatprep.subr.mxu0 %v95
    %1836 = vmatpush1.msra.mxu0 %v94
    %1837 = vmatprep.subr.mxu0 %v87
    %1838 = vmatpush1.msra.mxu0 %v86
    %1839 = vmatprep.subr.mxu0 %v79
    %1840 = vmatpush1.msra.mxu0 %v78
    %1841 = vmatprep.subr.mxu0 %v71
    %1842 = vmatpush1.msra.mxu0 %v70
    %1843 = vmatprep.subr.mxu0 %v63
    %1844 = vmatpush1.msra.mxu0 %v62
    %1845 = vmatprep.subr.mxu0 %v311
    %1846 = vmatpush2.msra.mxu0 %v310
    %1847 = vmatprep.subr.mxu0 %v303
    %1848 = vmatpush2.msra.mxu0 %v302
    %1849 = vmatprep.subr.mxu0 %v295
    %1850 = vmatpush2.msra.mxu0 %v294
    %1851 = vmatprep.subr.mxu0 %v287
    %1852 = vmatpush2.msra.mxu0 %v286
    %1853 = vmatprep.subr.mxu0 %v279
    %1854 = vmatpush2.msra.mxu0 %v278
    %1855 = vmatprep.subr.mxu0 %v271
    %1856 = vmatpush2.msra.mxu0 %v270
    %1857 = vmatprep.subr.mxu0 %v263
    %1858 = vmatpush2.msra.mxu0 %v262
    %1859 = vmatprep.subr.mxu0 %v255
    %1860 = vmatpush2.msra.mxu0 %v254
    %1861 = vmatprep.subr.mxu0 %v247
    %1862 = vmatpush2.msra.mxu0 %v246
    %1863 = vmatprep.subr.mxu0 %v239
    %1864 = vmatpush2.msra.mxu0 %v238
    %1865 = vmatprep.subr.mxu0 %v231
    %1866 = vmatpush2.msra.mxu0 %v230
    %1867 = vmatprep.subr.mxu0 %v223
    %1868 = vmatpush2.msra.mxu0 %v222
    %1869 = vmatprep.subr.mxu0 %v215
    %1870 = vmatpush2.msra.mxu0 %v214
    %1871 = vmatprep.subr.mxu0 %v207
    %1872 = vmatpush2.msra.mxu0 %v206
    %1873 = vmatprep.subr.mxu0 %v199
    %1874 = vmatpush2.msra.mxu0 %v198
    %1875 = vmatprep.subr.mxu0 %v191
    %1876 = vmatpush2.msra.mxu0 %v190
    %1877 = vmatprep.mubr.f32.mxu0 %v1780
    %1878 = vmatmul.mubr.f32.gmra.mxu0 %v1812
    %v1879 = vpop.f32.mrf.mxu0
    %v1880 = vadd.f32 0.0, %v1879
    %v1881 = vpop.f32.mrf.mxu0
    %v1882 = vadd.f32 0.0, %v1881
    %1883 = vdwg.mxu0
    %1884 = vmatprep.subr.mxu0 %v185
    %1885 = vmatpush1.msra.mxu0 %v184
    %1886 = vmatprep.subr.mxu0 %v177
    %1887 = vmatpush1.msra.mxu0 %v176
    %1888 = vmatprep.subr.mxu0 %v169
    %1889 = vmatpush1.msra.mxu0 %v168
    %1890 = vmatprep.subr.mxu0 %v161
    %1891 = vmatpush1.msra.mxu0 %v160
    %1892 = vmatprep.subr.mxu0 %v153
    %1893 = vmatpush1.msra.mxu0 %v152
    %1894 = vmatprep.subr.mxu0 %v145
    %1895 = vmatpush1.msra.mxu0 %v144
    %1896 = vmatprep.subr.mxu0 %v137
    %1897 = vmatpush1.msra.mxu0 %v136
    %1898 = vmatprep.subr.mxu0 %v129
    %1899 = vmatpush1.msra.mxu0 %v128
    %1900 = vmatprep.subr.mxu0 %v121
    %1901 = vmatpush1.msra.mxu0 %v120
    %1902 = vmatprep.subr.mxu0 %v113
    %1903 = vmatpush1.msra.mxu0 %v112
    %1904 = vmatprep.subr.mxu0 %v105
    %1905 = vmatpush1.msra.mxu0 %v104
    %1906 = vmatprep.subr.mxu0 %v97
    %1907 = vmatpush1.msra.mxu0 %v96
    %1908 = vmatprep.subr.mxu0 %v89
    %1909 = vmatpush1.msra.mxu0 %v88
    %1910 = vmatprep.subr.mxu0 %v81
    %1911 = vmatpush1.msra.mxu0 %v80
    %1912 = vmatprep.subr.mxu0 %v73
    %1913 = vmatpush1.msra.mxu0 %v72
    %1914 = vmatprep.subr.mxu0 %v65
    %1915 = vmatpush1.msra.mxu0 %v64
    %1916 = vmatprep.subr.mxu0 %v313
    %1917 = vmatpush2.msra.mxu0 %v312
    %1918 = vmatprep.subr.mxu0 %v305
    %1919 = vmatpush2.msra.mxu0 %v304
    %1920 = vmatprep.subr.mxu0 %v297
    %1921 = vmatpush2.msra.mxu0 %v296
    %1922 = vmatprep.subr.mxu0 %v289
    %1923 = vmatpush2.msra.mxu0 %v288
    %1924 = vmatprep.subr.mxu0 %v281
    %1925 = vmatpush2.msra.mxu0 %v280
    %1926 = vmatprep.subr.mxu0 %v273
    %1927 = vmatpush2.msra.mxu0 %v272
    %1928 = vmatprep.subr.mxu0 %v265
    %1929 = vmatpush2.msra.mxu0 %v264
    %1930 = vmatprep.subr.mxu0 %v257
    %1931 = vmatpush2.msra.mxu0 %v256
    %1932 = vmatprep.subr.mxu0 %v249
    %1933 = vmatpush2.msra.mxu0 %v248
    %1934 = vmatprep.subr.mxu0 %v241
    %1935 = vmatpush2.msra.mxu0 %v240
    %1936 = vmatprep.subr.mxu0 %v233
    %1937 = vmatpush2.msra.mxu0 %v232
    %1938 = vmatprep.subr.mxu0 %v225
    %1939 = vmatpush2.msra.mxu0 %v224
    %1940 = vmatprep.subr.mxu0 %v217
    %1941 = vmatpush2.msra.mxu0 %v216
    %1942 = vmatprep.subr.mxu0 %v209
    %1943 = vmatpush2.msra.mxu0 %v208
    %1944 = vmatprep.subr.mxu0 %v201
    %1945 = vmatpush2.msra.mxu0 %v200
    %1946 = vmatprep.subr.mxu0 %v193
    %1947 = vmatpush2.msra.mxu0 %v192
    %1948 = vmatprep.mubr.f32.mxu0 %v1780
    %1949 = vmatmul.mubr.f32.gmra.mxu0 %v1812
    %v1950 = vpop.f32.mrf.mxu0
    %v1951 = vadd.f32 0.0, %v1950
    %v1952 = vpop.f32.mrf.mxu0
    %v1953 = vadd.f32 0.0, %v1952
    %1954 = vdwg.mxu0
    %1955 = vmatprep.subr.mxu0 %v187
    %1956 = vmatpush1.msra.mxu0 %v186
    %1957 = vmatprep.subr.mxu0 %v179
    %1958 = vmatpush1.msra.mxu0 %v178
    %1959 = vmatprep.subr.mxu0 %v171
    %1960 = vmatpush1.msra.mxu0 %v170
    %1961 = vmatprep.subr.mxu0 %v163
    %1962 = vmatpush1.msra.mxu0 %v162
    %1963 = vmatprep.subr.mxu0 %v155
    %1964 = vmatpush1.msra.mxu0 %v154
    %1965 = vmatprep.subr.mxu0 %v147
    %1966 = vmatpush1.msra.mxu0 %v146
    %1967 = vmatprep.subr.mxu0 %v139
    %1968 = vmatpush1.msra.mxu0 %v138
    %1969 = vmatprep.subr.mxu0 %v131
    %1970 = vmatpush1.msra.mxu0 %v130
    %1971 = vmatprep.subr.mxu0 %v123
    %1972 = vmatpush1.msra.mxu0 %v122
    %1973 = vmatprep.subr.mxu0 %v115
    %1974 = vmatpush1.msra.mxu0 %v114
    %1975 = vmatprep.subr.mxu0 %v107
    %1976 = vmatpush1.msra.mxu0 %v106
    %1977 = vmatprep.subr.mxu0 %v99
    %1978 = vmatpush1.msra.mxu0 %v98
    %1979 = vmatprep.subr.mxu0 %v91
    %1980 = vmatpush1.msra.mxu0 %v90
    %1981 = vmatprep.subr.mxu0 %v83
    %1982 = vmatpush1.msra.mxu0 %v82
    %1983 = vmatprep.subr.mxu0 %v75
    %1984 = vmatpush1.msra.mxu0 %v74
    %1985 = vmatprep.subr.mxu0 %v67
    %1986 = vmatpush1.msra.mxu0 %v66
    %1987 = vmatprep.subr.mxu0 %v315
    %1988 = vmatpush2.msra.mxu0 %v314
    %1989 = vmatprep.subr.mxu0 %v307
    %1990 = vmatpush2.msra.mxu0 %v306
    %1991 = vmatprep.subr.mxu0 %v299
    %1992 = vmatpush2.msra.mxu0 %v298
    %1993 = vmatprep.subr.mxu0 %v291
    %1994 = vmatpush2.msra.mxu0 %v290
    %1995 = vmatprep.subr.mxu0 %v283
    %1996 = vmatpush2.msra.mxu0 %v282
    %1997 = vmatprep.subr.mxu0 %v275
    %1998 = vmatpush2.msra.mxu0 %v274
    %1999 = vmatprep.subr.mxu0 %v267
    %2000 = vmatpush2.msra.mxu0 %v266
    %2001 = vmatprep.subr.mxu0 %v259
    %2002 = vmatpush2.msra.mxu0 %v258
    %2003 = vmatprep.subr.mxu0 %v251
    %2004 = vmatpush2.msra.mxu0 %v250
    %2005 = vmatprep.subr.mxu0 %v243
    %2006 = vmatpush2.msra.mxu0 %v242
    %2007 = vmatprep.subr.mxu0 %v235
    %2008 = vmatpush2.msra.mxu0 %v234
    %2009 = vmatprep.subr.mxu0 %v227
    %2010 = vmatpush2.msra.mxu0 %v226
    %2011 = vmatprep.subr.mxu0 %v219
    %2012 = vmatpush2.msra.mxu0 %v218
    %2013 = vmatprep.subr.mxu0 %v211
    %2014 = vmatpush2.msra.mxu0 %v210
    %2015 = vmatprep.subr.mxu0 %v203
    %2016 = vmatpush2.msra.mxu0 %v202
    %2017 = vmatprep.subr.mxu0 %v195
    %2018 = vmatpush2.msra.mxu0 %v194
    %2019 = vmatprep.mubr.f32.mxu0 %v1780
    %2020 = vmatmul.mubr.f32.gmra.mxu0 %v1812
    %v2021 = vpop.f32.mrf.mxu0
    %v2022 = vadd.f32 0.0, %v2021
    %v2023 = vpop.f32.mrf.mxu0
    %v2024 = vadd.f32 0.0, %v2023
    %2025 = vdwg.mxu0
    %2026 = vmatprep.subr.mxu0 %v189
    %2027 = vmatpush1.msra.mxu0 %v188
    %2028 = vmatprep.subr.mxu0 %v181
    %2029 = vmatpush1.msra.mxu0 %v180
    %2030 = vmatprep.subr.mxu0 %v173
    %2031 = vmatpush1.msra.mxu0 %v172
    %2032 = vmatprep.subr.mxu0 %v165
    %2033 = vmatpush1.msra.mxu0 %v164
    %2034 = vmatprep.subr.mxu0 %v157
    %2035 = vmatpush1.msra.mxu0 %v156
    %2036 = vmatprep.subr.mxu0 %v149
    %2037 = vmatpush1.msra.mxu0 %v148
    %2038 = vmatprep.subr.mxu0 %v141
    %2039 = vmatpush1.msra.mxu0 %v140
    %2040 = vmatprep.subr.mxu0 %v133
    %2041 = vmatpush1.msra.mxu0 %v132
    %2042 = vmatprep.subr.mxu0 %v125
    %2043 = vmatpush1.msra.mxu0 %v124
    %2044 = vmatprep.subr.mxu0 %v117
    %2045 = vmatpush1.msra.mxu0 %v116
    %2046 = vmatprep.subr.mxu0 %v109
    %2047 = vmatpush1.msra.mxu0 %v108
    %2048 = vmatprep.subr.mxu0 %v101
    %2049 = vmatpush1.msra.mxu0 %v100
    %2050 = vmatprep.subr.mxu0 %v93
    %2051 = vmatpush1.msra.mxu0 %v92
    %2052 = vmatprep.subr.mxu0 %v85
    %2053 = vmatpush1.msra.mxu0 %v84
    %2054 = vmatprep.subr.mxu0 %v77
    %2055 = vmatpush1.msra.mxu0 %v76
    %2056 = vmatprep.subr.mxu0 %v69
    %2057 = vmatpush1.msra.mxu0 %v68
    %2058 = vmatprep.subr.mxu0 %v317
    %2059 = vmatpush2.msra.mxu0 %v316
    %2060 = vmatprep.subr.mxu0 %v309
    %2061 = vmatpush2.msra.mxu0 %v308
    %2062 = vmatprep.subr.mxu0 %v301
    %2063 = vmatpush2.msra.mxu0 %v300
    %2064 = vmatprep.subr.mxu0 %v293
    %2065 = vmatpush2.msra.mxu0 %v292
    %2066 = vmatprep.subr.mxu0 %v285
    %2067 = vmatpush2.msra.mxu0 %v284
    %2068 = vmatprep.subr.mxu0 %v277
    %2069 = vmatpush2.msra.mxu0 %v276
    %2070 = vmatprep.subr.mxu0 %v269
    %2071 = vmatpush2.msra.mxu0 %v268
    %2072 = vmatprep.subr.mxu0 %v261
    %2073 = vmatpush2.msra.mxu0 %v260
    %2074 = vmatprep.subr.mxu0 %v253
    %2075 = vmatpush2.msra.mxu0 %v252
    %2076 = vmatprep.subr.mxu0 %v245
    %2077 = vmatpush2.msra.mxu0 %v244
    %2078 = vmatprep.subr.mxu0 %v237
    %2079 = vmatpush2.msra.mxu0 %v236
    %2080 = vmatprep.subr.mxu0 %v229
    %2081 = vmatpush2.msra.mxu0 %v228
    %2082 = vmatprep.subr.mxu0 %v221
    %2083 = vmatpush2.msra.mxu0 %v220
    %2084 = vmatprep.subr.mxu0 %v213
    %2085 = vmatpush2.msra.mxu0 %v212
    %2086 = vmatprep.subr.mxu0 %v205
    %2087 = vmatpush2.msra.mxu0 %v204
    %2088 = vmatprep.subr.mxu0 %v197
    %2089 = vmatpush2.msra.mxu0 %v196
    %2090 = vmatprep.mubr.f32.mxu0 %v1780
    %2091 = vmatmul.mubr.f32.gmra.mxu0 %v1812
    %v2092 = vpop.f32.mrf.mxu0
    %v2093 = vadd.f32 0.0, %v2092
    %v2094 = vpop.f32.mrf.mxu0
    %v2095 = vadd.f32 0.0, %v2094
    %2096 = vdwg.mxu0
    %v2097 = vadd.f32 %v2022, %v380
    %v2098 = vadd.f32 %v2024, %v384
    %v2099 = vadd.f32 %v2093, %v388
    %v2100 = vadd.f32 %v2095, %v392
    %v2101 = vxor.u32 %v2097, 2147483648
    %v2102 = vxor.u32 %v2098, 2147483648
    %v2103 = vxor.u32 %v2099, 2147483648
    %v2104 = vmul.f32 %v2101, 1.442695
    %v2105 = vpow.pop %v2104
    %v2106 = vmul.f32 %v2102, 1.442695
    %v2107 = vpow.pop %v2106
    %v2108 = vmul.f32 %v2103, 1.442695
    %v2109 = vpow.pop %v2108
    %v2110 = vadd.f32 %v2105, 1.0
    %v2111 = vadd.f32 %v2107, 1.0
    %v2112 = vadd.f32 %v2109, 1.0
    %v2113 = vrcp.pop %v2110
    %v2114 = vmul.f32 1.0, %v2113
    %v2115 = vrcp.pop %v2111
    %v2116 = vmul.f32 1.0, %v2115
    %v2117 = vrcp.pop %v2112
    %v2118 = vmul.f32 1.0, %v2117
    %v2119 = vtanh.pop %v2100
    %v2120 = vmul.f32 %v2116, %v1778
    %v2121 = vmul.f32 %v2114, %v2119
    %v2122 = vadd.f32 %v2120, %v2121
    %v2123 = vtanh.pop %v2122
    %v2124 = vmul.f32 %v2118, %v2123
    %v2125 = vld [vmem:[#allocation2 + $0x80] sm:$0xff]
    %v2126 = vld [vmem:[#allocation2 + $0x88] sm:$0xff]
    %v2127 = vld [vmem:[#allocation2 + $0x90] sm:$0xff]
    %v2128 = vld [vmem:[#allocation2 + $0x98] sm:$0xff]
    %v2129 = vadd.f32 %v2125, %v1880
    %v2130 = vadd.f32 %v2126, %v1882
    %v2131 = vadd.f32 %v2127, %v1951
    %v2132 = vadd.f32 %v2128, %v1953
    %v2133 = vxor.u32 %v2129, 2147483648
    %v2134 = vxor.u32 %v2130, 2147483648
    %v2135 = vxor.u32 %v2131, 2147483648
    %v2136 = vmul.f32 %v2133, 1.442695
    %v2137 = vpow.pop %v2136
    %v2138 = vmul.f32 %v2134, 1.442695
    %v2139 = vpow.pop %v2138
    %v2140 = vmul.f32 %v2135, 1.442695
    %v2141 = vpow.pop %v2140
    %v2142 = vadd.f32 %v2137, 1.0
    %v2143 = vadd.f32 %v2139, 1.0
    %v2144 = vadd.f32 %v2141, 1.0
    %v2145 = vrcp.pop %v2142
    %v2146 = vmul.f32 1.0, %v2145
    %v2147 = vrcp.pop %v2143
    %v2148 = vmul.f32 1.0, %v2147
    %v2149 = vrcp.pop %v2144
    %v2150 = vmul.f32 1.0, %v2149
    %v2151 = vtanh.pop %v2132
    %v2152 = vmul.f32 %v2148, %v1810
    %v2153 = vmul.f32 %v2146, %v2151
    %v2154 = vadd.f32 %v2152, %v2153
    %v2155 = vtanh.pop %v2154
    %v2156 = vmul.f32 %v2150, %v2155
    %2157 = vmatprep.subr.mxu0 %v183
    %2158 = vmatpush1.msra.mxu0 %v182
    %2159 = vmatprep.subr.mxu0 %v175
    %2160 = vmatpush1.msra.mxu0 %v174
    %2161 = vmatprep.subr.mxu0 %v167
    %2162 = vmatpush1.msra.mxu0 %v166
    %2163 = vmatprep.subr.mxu0 %v159
    %2164 = vmatpush1.msra.mxu0 %v158
    %2165 = vmatprep.subr.mxu0 %v151
    %2166 = vmatpush1.msra.mxu0 %v150
    %2167 = vmatprep.subr.mxu0 %v143
    %2168 = vmatpush1.msra.mxu0 %v142
    %2169 = vmatprep.subr.mxu0 %v135
    %2170 = vmatpush1.msra.mxu0 %v134
    %2171 = vmatprep.subr.mxu0 %v127
    %2172 = vmatpush1.msra.mxu0 %v126
    %2173 = vmatprep.subr.mxu0 %v119
    %2174 = vmatpush1.msra.mxu0 %v118
    %2175 = vmatprep.subr.mxu0 %v111
    %2176 = vmatpush1.msra.mxu0 %v110
    %2177 = vmatprep.subr.mxu0 %v103
    %2178 = vmatpush1.msra.mxu0 %v102
    %2179 = vmatprep.subr.mxu0 %v95
    %2180 = vmatpush1.msra.mxu0 %v94
    %2181 = vmatprep.subr.mxu0 %v87
    %2182 = vmatpush1.msra.mxu0 %v86
    %2183 = vmatprep.subr.mxu0 %v79
    %2184 = vmatpush1.msra.mxu0 %v78
    %2185 = vmatprep.subr.mxu0 %v71
    %2186 = vmatpush1.msra.mxu0 %v70
    %2187 = vmatprep.subr.mxu0 %v63
    %2188 = vmatpush1.msra.mxu0 %v62
    %2189 = vmatprep.subr.mxu0 %v311
    %2190 = vmatpush2.msra.mxu0 %v310
    %2191 = vmatprep.subr.mxu0 %v303
    %2192 = vmatpush2.msra.mxu0 %v302
    %2193 = vmatprep.subr.mxu0 %v295
    %2194 = vmatpush2.msra.mxu0 %v294
    %2195 = vmatprep.subr.mxu0 %v287
    %2196 = vmatpush2.msra.mxu0 %v286
    %2197 = vmatprep.subr.mxu0 %v279
    %2198 = vmatpush2.msra.mxu0 %v278
    %2199 = vmatprep.subr.mxu0 %v271
    %2200 = vmatpush2.msra.mxu0 %v270
    %2201 = vmatprep.subr.mxu0 %v263
    %2202 = vmatpush2.msra.mxu0 %v262
    %2203 = vmatprep.subr.mxu0 %v255
    %2204 = vmatpush2.msra.mxu0 %v254
    %2205 = vmatprep.subr.mxu0 %v247
    %2206 = vmatpush2.msra.mxu0 %v246
    %2207 = vmatprep.subr.mxu0 %v239
    %2208 = vmatpush2.msra.mxu0 %v238
    %2209 = vmatprep.subr.mxu0 %v231
    %2210 = vmatpush2.msra.mxu0 %v230
    %2211 = vmatprep.subr.mxu0 %v223
    %2212 = vmatpush2.msra.mxu0 %v222
    %2213 = vmatprep.subr.mxu0 %v215
    %2214 = vmatpush2.msra.mxu0 %v214
    %2215 = vmatprep.subr.mxu0 %v207
    %2216 = vmatpush2.msra.mxu0 %v206
    %2217 = vmatprep.subr.mxu0 %v199
    %2218 = vmatpush2.msra.mxu0 %v198
    %2219 = vmatprep.subr.mxu0 %v191
    %2220 = vmatpush2.msra.mxu0 %v190
    %2221 = vmatprep.mubr.f32.mxu0 %v2124
    %2222 = vmatmul.mubr.f32.gmra.mxu0 %v2156
    %v2223 = vpop.f32.mrf.mxu0
    %v2224 = vadd.f32 0.0, %v2223
    %v2225 = vpop.f32.mrf.mxu0
    %v2226 = vadd.f32 0.0, %v2225
    %2227 = vdwg.mxu0
    %2228 = vmatprep.subr.mxu0 %v185
    %2229 = vmatpush1.msra.mxu0 %v184
    %2230 = vmatprep.subr.mxu0 %v177
    %2231 = vmatpush1.msra.mxu0 %v176
    %2232 = vmatprep.subr.mxu0 %v169
    %2233 = vmatpush1.msra.mxu0 %v168
    %2234 = vmatprep.subr.mxu0 %v161
    %2235 = vmatpush1.msra.mxu0 %v160
    %2236 = vmatprep.subr.mxu0 %v153
    %2237 = vmatpush1.msra.mxu0 %v152
    %2238 = vmatprep.subr.mxu0 %v145
    %2239 = vmatpush1.msra.mxu0 %v144
    %2240 = vmatprep.subr.mxu0 %v137
    %2241 = vmatpush1.msra.mxu0 %v136
    %2242 = vmatprep.subr.mxu0 %v129
    %2243 = vmatpush1.msra.mxu0 %v128
    %2244 = vmatprep.subr.mxu0 %v121
    %2245 = vmatpush1.msra.mxu0 %v120
    %2246 = vmatprep.subr.mxu0 %v113
    %2247 = vmatpush1.msra.mxu0 %v112
    %2248 = vmatprep.subr.mxu0 %v105
    %2249 = vmatpush1.msra.mxu0 %v104
    %2250 = vmatprep.subr.mxu0 %v97
    %2251 = vmatpush1.msra.mxu0 %v96
    %2252 = vmatprep.subr.mxu0 %v89
    %2253 = vmatpush1.msra.mxu0 %v88
    %2254 = vmatprep.subr.mxu0 %v81
    %2255 = vmatpush1.msra.mxu0 %v80
    %2256 = vmatprep.subr.mxu0 %v73
    %2257 = vmatpush1.msra.mxu0 %v72
    %2258 = vmatprep.subr.mxu0 %v65
    %2259 = vmatpush1.msra.mxu0 %v64
    %2260 = vmatprep.subr.mxu0 %v313
    %2261 = vmatpush2.msra.mxu0 %v312
    %2262 = vmatprep.subr.mxu0 %v305
    %2263 = vmatpush2.msra.mxu0 %v304
    %2264 = vmatprep.subr.mxu0 %v297
    %2265 = vmatpush2.msra.mxu0 %v296
    %2266 = vmatprep.subr.mxu0 %v289
    %2267 = vmatpush2.msra.mxu0 %v288
    %2268 = vmatprep.subr.mxu0 %v281
    %2269 = vmatpush2.msra.mxu0 %v280
    %2270 = vmatprep.subr.mxu0 %v273
    %2271 = vmatpush2.msra.mxu0 %v272
    %2272 = vmatprep.subr.mxu0 %v265
    %2273 = vmatpush2.msra.mxu0 %v264
    %2274 = vmatprep.subr.mxu0 %v257
    %2275 = vmatpush2.msra.mxu0 %v256
    %2276 = vmatprep.subr.mxu0 %v249
    %2277 = vmatpush2.msra.mxu0 %v248
    %2278 = vmatprep.subr.mxu0 %v241
    %2279 = vmatpush2.msra.mxu0 %v240
    %2280 = vmatprep.subr.mxu0 %v233
    %2281 = vmatpush2.msra.mxu0 %v232
    %2282 = vmatprep.subr.mxu0 %v225
    %2283 = vmatpush2.msra.mxu0 %v224
    %2284 = vmatprep.subr.mxu0 %v217
    %2285 = vmatpush2.msra.mxu0 %v216
    %2286 = vmatprep.subr.mxu0 %v209
    %2287 = vmatpush2.msra.mxu0 %v208
    %2288 = vmatprep.subr.mxu0 %v201
    %2289 = vmatpush2.msra.mxu0 %v200
    %2290 = vmatprep.subr.mxu0 %v193
    %2291 = vmatpush2.msra.mxu0 %v192
    %2292 = vmatprep.mubr.f32.mxu0 %v2124
    %2293 = vmatmul.mubr.f32.gmra.mxu0 %v2156
    %v2294 = vpop.f32.mrf.mxu0
    %v2295 = vadd.f32 0.0, %v2294
    %v2296 = vpop.f32.mrf.mxu0
    %v2297 = vadd.f32 0.0, %v2296
    %2298 = vdwg.mxu0
    %2299 = vmatprep.subr.mxu0 %v187
    %2300 = vmatpush1.msra.mxu0 %v186
    %2301 = vmatprep.subr.mxu0 %v179
    %2302 = vmatpush1.msra.mxu0 %v178
    %2303 = vmatprep.subr.mxu0 %v171
    %2304 = vmatpush1.msra.mxu0 %v170
    %2305 = vmatprep.subr.mxu0 %v163
    %2306 = vmatpush1.msra.mxu0 %v162
    %2307 = vmatprep.subr.mxu0 %v155
    %2308 = vmatpush1.msra.mxu0 %v154
    %2309 = vmatprep.subr.mxu0 %v147
    %2310 = vmatpush1.msra.mxu0 %v146
    %2311 = vmatprep.subr.mxu0 %v139
    %2312 = vmatpush1.msra.mxu0 %v138
    %2313 = vmatprep.subr.mxu0 %v131
    %2314 = vmatpush1.msra.mxu0 %v130
    %2315 = vmatprep.subr.mxu0 %v123
    %2316 = vmatpush1.msra.mxu0 %v122
    %2317 = vmatprep.subr.mxu0 %v115
    %2318 = vmatpush1.msra.mxu0 %v114
    %2319 = vmatprep.subr.mxu0 %v107
    %2320 = vmatpush1.msra.mxu0 %v106
    %2321 = vmatprep.subr.mxu0 %v99
    %2322 = vmatpush1.msra.mxu0 %v98
    %2323 = vmatprep.subr.mxu0 %v91
    %2324 = vmatpush1.msra.mxu0 %v90
    %2325 = vmatprep.subr.mxu0 %v83
    %2326 = vmatpush1.msra.mxu0 %v82
    %2327 = vmatprep.subr.mxu0 %v75
    %2328 = vmatpush1.msra.mxu0 %v74
    %2329 = vmatprep.subr.mxu0 %v67
    %2330 = vmatpush1.msra.mxu0 %v66
    %2331 = vmatprep.subr.mxu0 %v315
    %2332 = vmatpush2.msra.mxu0 %v314
    %2333 = vmatprep.subr.mxu0 %v307
    %2334 = vmatpush2.msra.mxu0 %v306
    %2335 = vmatprep.subr.mxu0 %v299
    %2336 = vmatpush2.msra.mxu0 %v298
    %2337 = vmatprep.subr.mxu0 %v291
    %2338 = vmatpush2.msra.mxu0 %v290
    %2339 = vmatprep.subr.mxu0 %v283
    %2340 = vmatpush2.msra.mxu0 %v282
    %2341 = vmatprep.subr.mxu0 %v275
    %2342 = vmatpush2.msra.mxu0 %v274
    %2343 = vmatprep.subr.mxu0 %v267
    %2344 = vmatpush2.msra.mxu0 %v266
    %2345 = vmatprep.subr.mxu0 %v259
    %2346 = vmatpush2.msra.mxu0 %v258
    %2347 = vmatprep.subr.mxu0 %v251
    %2348 = vmatpush2.msra.mxu0 %v250
    %2349 = vmatprep.subr.mxu0 %v243
    %2350 = vmatpush2.msra.mxu0 %v242
    %2351 = vmatprep.subr.mxu0 %v235
    %2352 = vmatpush2.msra.mxu0 %v234
    %2353 = vmatprep.subr.mxu0 %v227
    %2354 = vmatpush2.msra.mxu0 %v226
    %2355 = vmatprep.subr.mxu0 %v219
    %2356 = vmatpush2.msra.mxu0 %v218
    %2357 = vmatprep.subr.mxu0 %v211
    %2358 = vmatpush2.msra.mxu0 %v210
    %2359 = vmatprep.subr.mxu0 %v203
    %2360 = vmatpush2.msra.mxu0 %v202
    %2361 = vmatprep.subr.mxu0 %v195
    %2362 = vmatpush2.msra.mxu0 %v194
    %2363 = vmatprep.mubr.f32.mxu0 %v2124
    %2364 = vmatmul.mubr.f32.gmra.mxu0 %v2156
    %v2365 = vpop.f32.mrf.mxu0
    %v2366 = vadd.f32 0.0, %v2365
    %v2367 = vpop.f32.mrf.mxu0
    %v2368 = vadd.f32 0.0, %v2367
    %2369 = vdwg.mxu0
    %2370 = vmatprep.subr.mxu0 %v189
    %2371 = vmatpush1.msra.mxu0 %v188
    %2372 = vmatprep.subr.mxu0 %v181
    %2373 = vmatpush1.msra.mxu0 %v180
    %2374 = vmatprep.subr.mxu0 %v173
    %2375 = vmatpush1.msra.mxu0 %v172
    %2376 = vmatprep.subr.mxu0 %v165
    %2377 = vmatpush1.msra.mxu0 %v164
    %2378 = vmatprep.subr.mxu0 %v157
    %2379 = vmatpush1.msra.mxu0 %v156
    %2380 = vmatprep.subr.mxu0 %v149
    %2381 = vmatpush1.msra.mxu0 %v148
    %2382 = vmatprep.subr.mxu0 %v141
    %2383 = vmatpush1.msra.mxu0 %v140
    %2384 = vmatprep.subr.mxu0 %v133
    %2385 = vmatpush1.msra.mxu0 %v132
    %2386 = vmatprep.subr.mxu0 %v125
    %2387 = vmatpush1.msra.mxu0 %v124
    %2388 = vmatprep.subr.mxu0 %v117
    %2389 = vmatpush1.msra.mxu0 %v116
    %2390 = vmatprep.subr.mxu0 %v109
    %2391 = vmatpush1.msra.mxu0 %v108
    %2392 = vmatprep.subr.mxu0 %v101
    %2393 = vmatpush1.msra.mxu0 %v100
    %2394 = vmatprep.subr.mxu0 %v93
    %2395 = vmatpush1.msra.mxu0 %v92
    %2396 = vmatprep.subr.mxu0 %v85
    %2397 = vmatpush1.msra.mxu0 %v84
    %2398 = vmatprep.subr.mxu0 %v77
    %2399 = vmatpush1.msra.mxu0 %v76
    %2400 = vmatprep.subr.mxu0 %v69
    %2401 = vmatpush1.msra.mxu0 %v68
    %2402 = vmatprep.subr.mxu0 %v317
    %2403 = vmatpush2.msra.mxu0 %v316
    %2404 = vmatprep.subr.mxu0 %v309
    %2405 = vmatpush2.msra.mxu0 %v308
    %2406 = vmatprep.subr.mxu0 %v301
    %2407 = vmatpush2.msra.mxu0 %v300
    %2408 = vmatprep.subr.mxu0 %v293
    %2409 = vmatpush2.msra.mxu0 %v292
    %2410 = vmatprep.subr.mxu0 %v285
    %2411 = vmatpush2.msra.mxu0 %v284
    %2412 = vmatprep.subr.mxu0 %v277
    %2413 = vmatpush2.msra.mxu0 %v276
    %2414 = vmatprep.subr.mxu0 %v269
    %2415 = vmatpush2.msra.mxu0 %v268
    %2416 = vmatprep.subr.mxu0 %v261
    %2417 = vmatpush2.msra.mxu0 %v260
    %2418 = vmatprep.subr.mxu0 %v253
    %2419 = vmatpush2.msra.mxu0 %v252
    %2420 = vmatprep.subr.mxu0 %v245
    %2421 = vmatpush2.msra.mxu0 %v244
    %2422 = vmatprep.subr.mxu0 %v237
    %2423 = vmatpush2.msra.mxu0 %v236
    %2424 = vmatprep.subr.mxu0 %v229
    %2425 = vmatpush2.msra.mxu0 %v228
    %2426 = vmatprep.subr.mxu0 %v221
    %2427 = vmatpush2.msra.mxu0 %v220
    %2428 = vmatprep.subr.mxu0 %v213
    %2429 = vmatpush2.msra.mxu0 %v212
    %2430 = vmatprep.subr.mxu0 %v205
    %2431 = vmatpush2.msra.mxu0 %v204
    %2432 = vmatprep.subr.mxu0 %v197
    %2433 = vmatpush2.msra.mxu0 %v196
    %2434 = vmatprep.mubr.f32.mxu0 %v2124
    %2435 = vmatmul.mubr.f32.gmra.mxu0 %v2156
    %v2436 = vpop.f32.mrf.mxu0
    %v2437 = vadd.f32 0.0, %v2436
    %v2438 = vpop.f32.mrf.mxu0
    %v2439 = vadd.f32 0.0, %v2438
    %2440 = vdwg.mxu0
    %v2441 = vadd.f32 %v2366, %v380
    %v2442 = vadd.f32 %v2368, %v384
    %v2443 = vadd.f32 %v2437, %v388
    %v2444 = vadd.f32 %v2439, %v392
    %v2445 = vxor.u32 %v2441, 2147483648
    %v2446 = vxor.u32 %v2442, 2147483648
    %v2447 = vxor.u32 %v2443, 2147483648
    %v2448 = vmul.f32 %v2445, 1.442695
    %v2449 = vpow.pop %v2448
    %v2450 = vmul.f32 %v2446, 1.442695
    %v2451 = vpow.pop %v2450
    %v2452 = vmul.f32 %v2447, 1.442695
    %v2453 = vpow.pop %v2452
    %v2454 = vadd.f32 %v2449, 1.0
    %v2455 = vadd.f32 %v2451, 1.0
    %v2456 = vadd.f32 %v2453, 1.0
    %v2457 = vrcp.pop %v2454
    %v2458 = vmul.f32 1.0, %v2457
    %v2459 = vrcp.pop %v2455
    %v2460 = vmul.f32 1.0, %v2459
    %v2461 = vrcp.pop %v2456
    %v2462 = vmul.f32 1.0, %v2461
    %v2463 = vtanh.pop %v2444
    %v2464 = vmul.f32 %v2460, %v2122
    %v2465 = vmul.f32 %v2458, %v2463
    %v2466 = vadd.f32 %v2464, %v2465
    %v2467 = vtanh.pop %v2466
    %v2468 = vmul.f32 %v2462, %v2467
    %v2469 = vld [vmem:[#allocation2 + $0xa0] sm:$0xff]
    %v2470 = vld [vmem:[#allocation2 + $0xa8] sm:$0xff]
    %v2471 = vld [vmem:[#allocation2 + $0xb0] sm:$0xff]
    %v2472 = vld [vmem:[#allocation2 + $0xb8] sm:$0xff]
    %v2473 = vadd.f32 %v2469, %v2224
    %v2474 = vadd.f32 %v2470, %v2226
    %v2475 = vadd.f32 %v2471, %v2295
    %v2476 = vadd.f32 %v2472, %v2297
    %v2477 = vxor.u32 %v2473, 2147483648
    %v2478 = vxor.u32 %v2474, 2147483648
    %v2479 = vxor.u32 %v2475, 2147483648
    %v2480 = vmul.f32 %v2477, 1.442695
    %v2481 = vpow.pop %v2480
    %v2482 = vmul.f32 %v2478, 1.442695
    %v2483 = vpow.pop %v2482
    %v2484 = vmul.f32 %v2479, 1.442695
    %v2485 = vpow.pop %v2484
    %v2486 = vadd.f32 %v2481, 1.0
    %v2487 = vadd.f32 %v2483, 1.0
    %v2488 = vadd.f32 %v2485, 1.0
    %v2489 = vrcp.pop %v2486
    %v2490 = vmul.f32 1.0, %v2489
    %v2491 = vrcp.pop %v2487
    %v2492 = vmul.f32 1.0, %v2491
    %v2493 = vrcp.pop %v2488
    %v2494 = vmul.f32 1.0, %v2493
    %v2495 = vtanh.pop %v2476
    %v2496 = vmul.f32 %v2492, %v2154
    %v2497 = vmul.f32 %v2490, %v2495
    %v2498 = vadd.f32 %v2496, %v2497
    %v2499 = vtanh.pop %v2498
    %v2500 = vmul.f32 %v2494, %v2499
    %2501 = vmatprep.subr.mxu0 %v183
    %2502 = vmatpush1.msra.mxu0 %v182
    %2503 = vmatprep.subr.mxu0 %v175
    %2504 = vmatpush1.msra.mxu0 %v174
    %2505 = vmatprep.subr.mxu0 %v167
    %2506 = vmatpush1.msra.mxu0 %v166
    %2507 = vmatprep.subr.mxu0 %v159
    %2508 = vmatpush1.msra.mxu0 %v158
    %2509 = vmatprep.subr.mxu0 %v151
    %2510 = vmatpush1.msra.mxu0 %v150
    %2511 = vmatprep.subr.mxu0 %v143
    %2512 = vmatpush1.msra.mxu0 %v142
    %2513 = vmatprep.subr.mxu0 %v135
    %2514 = vmatpush1.msra.mxu0 %v134
    %2515 = vmatprep.subr.mxu0 %v127
    %2516 = vmatpush1.msra.mxu0 %v126
    %2517 = vmatprep.subr.mxu0 %v119
    %2518 = vmatpush1.msra.mxu0 %v118
    %2519 = vmatprep.subr.mxu0 %v111
    %2520 = vmatpush1.msra.mxu0 %v110
    %2521 = vmatprep.subr.mxu0 %v103
    %2522 = vmatpush1.msra.mxu0 %v102
    %2523 = vmatprep.subr.mxu0 %v95
    %2524 = vmatpush1.msra.mxu0 %v94
    %2525 = vmatprep.subr.mxu0 %v87
    %2526 = vmatpush1.msra.mxu0 %v86
    %2527 = vmatprep.subr.mxu0 %v79
    %2528 = vmatpush1.msra.mxu0 %v78
    %2529 = vmatprep.subr.mxu0 %v71
    %2530 = vmatpush1.msra.mxu0 %v70
    %2531 = vmatprep.subr.mxu0 %v63
    %2532 = vmatpush1.msra.mxu0 %v62
    %2533 = vmatprep.subr.mxu0 %v311
    %2534 = vmatpush2.msra.mxu0 %v310
    %2535 = vmatprep.subr.mxu0 %v303
    %2536 = vmatpush2.msra.mxu0 %v302
    %2537 = vmatprep.subr.mxu0 %v295
    %2538 = vmatpush2.msra.mxu0 %v294
    %2539 = vmatprep.subr.mxu0 %v287
    %2540 = vmatpush2.msra.mxu0 %v286
    %2541 = vmatprep.subr.mxu0 %v279
    %2542 = vmatpush2.msra.mxu0 %v278
    %2543 = vmatprep.subr.mxu0 %v271
    %2544 = vmatpush2.msra.mxu0 %v270
    %2545 = vmatprep.subr.mxu0 %v263
    %2546 = vmatpush2.msra.mxu0 %v262
    %2547 = vmatprep.subr.mxu0 %v255
    %2548 = vmatpush2.msra.mxu0 %v254
    %2549 = vmatprep.subr.mxu0 %v247
    %2550 = vmatpush2.msra.mxu0 %v246
    %2551 = vmatprep.subr.mxu0 %v239
    %2552 = vmatpush2.msra.mxu0 %v238
    %2553 = vmatprep.subr.mxu0 %v231
    %2554 = vmatpush2.msra.mxu0 %v230
    %2555 = vmatprep.subr.mxu0 %v223
    %2556 = vmatpush2.msra.mxu0 %v222
    %2557 = vmatprep.subr.mxu0 %v215
    %2558 = vmatpush2.msra.mxu0 %v214
    %2559 = vmatprep.subr.mxu0 %v207
    %2560 = vmatpush2.msra.mxu0 %v206
    %2561 = vmatprep.subr.mxu0 %v199
    %2562 = vmatpush2.msra.mxu0 %v198
    %2563 = vmatprep.subr.mxu0 %v191
    %2564 = vmatpush2.msra.mxu0 %v190
    %2565 = vmatprep.mubr.f32.mxu0 %v2468
    %2566 = vmatmul.mubr.f32.gmra.mxu0 %v2500
    %v2567 = vpop.f32.mrf.mxu0
    %v2568 = vadd.f32 0.0, %v2567
    %v2569 = vpop.f32.mrf.mxu0
    %v2570 = vadd.f32 0.0, %v2569
    %2571 = vdwg.mxu0
    %2572 = vmatprep.subr.mxu0 %v185
    %2573 = vmatpush1.msra.mxu0 %v184
    %2574 = vmatprep.subr.mxu0 %v177
    %2575 = vmatpush1.msra.mxu0 %v176
    %2576 = vmatprep.subr.mxu0 %v169
    %2577 = vmatpush1.msra.mxu0 %v168
    %2578 = vmatprep.subr.mxu0 %v161
    %2579 = vmatpush1.msra.mxu0 %v160
    %2580 = vmatprep.subr.mxu0 %v153
    %2581 = vmatpush1.msra.mxu0 %v152
    %2582 = vmatprep.subr.mxu0 %v145
    %2583 = vmatpush1.msra.mxu0 %v144
    %2584 = vmatprep.subr.mxu0 %v137
    %2585 = vmatpush1.msra.mxu0 %v136
    %2586 = vmatprep.subr.mxu0 %v129
    %2587 = vmatpush1.msra.mxu0 %v128
    %2588 = vmatprep.subr.mxu0 %v121
    %2589 = vmatpush1.msra.mxu0 %v120
    %2590 = vmatprep.subr.mxu0 %v113
    %2591 = vmatpush1.msra.mxu0 %v112
    %2592 = vmatprep.subr.mxu0 %v105
    %2593 = vmatpush1.msra.mxu0 %v104
    %2594 = vmatprep.subr.mxu0 %v97
    %2595 = vmatpush1.msra.mxu0 %v96
    %2596 = vmatprep.subr.mxu0 %v89
    %2597 = vmatpush1.msra.mxu0 %v88
    %2598 = vmatprep.subr.mxu0 %v81
    %2599 = vmatpush1.msra.mxu0 %v80
    %2600 = vmatprep.subr.mxu0 %v73
    %2601 = vmatpush1.msra.mxu0 %v72
    %2602 = vmatprep.subr.mxu0 %v65
    %2603 = vmatpush1.msra.mxu0 %v64
    %2604 = vmatprep.subr.mxu0 %v313
    %2605 = vmatpush2.msra.mxu0 %v312
    %2606 = vmatprep.subr.mxu0 %v305
    %2607 = vmatpush2.msra.mxu0 %v304
    %2608 = vmatprep.subr.mxu0 %v297
    %2609 = vmatpush2.msra.mxu0 %v296
    %2610 = vmatprep.subr.mxu0 %v289
    %2611 = vmatpush2.msra.mxu0 %v288
    %2612 = vmatprep.subr.mxu0 %v281
    %2613 = vmatpush2.msra.mxu0 %v280
    %2614 = vmatprep.subr.mxu0 %v273
    %2615 = vmatpush2.msra.mxu0 %v272
    %2616 = vmatprep.subr.mxu0 %v265
    %2617 = vmatpush2.msra.mxu0 %v264
    %2618 = vmatprep.subr.mxu0 %v257
    %2619 = vmatpush2.msra.mxu0 %v256
    %2620 = vmatprep.subr.mxu0 %v249
    %2621 = vmatpush2.msra.mxu0 %v248
    %2622 = vmatprep.subr.mxu0 %v241
    %2623 = vmatpush2.msra.mxu0 %v240
    %2624 = vmatprep.subr.mxu0 %v233
    %2625 = vmatpush2.msra.mxu0 %v232
    %2626 = vmatprep.subr.mxu0 %v225
    %2627 = vmatpush2.msra.mxu0 %v224
    %2628 = vmatprep.subr.mxu0 %v217
    %2629 = vmatpush2.msra.mxu0 %v216
    %2630 = vmatprep.subr.mxu0 %v209
    %2631 = vmatpush2.msra.mxu0 %v208
    %2632 = vmatprep.subr.mxu0 %v201
    %2633 = vmatpush2.msra.mxu0 %v200
    %2634 = vmatprep.subr.mxu0 %v193
    %2635 = vmatpush2.msra.mxu0 %v192
    %2636 = vmatprep.mubr.f32.mxu0 %v2468
    %2637 = vmatmul.mubr.f32.gmra.mxu0 %v2500
    %v2638 = vpop.f32.mrf.mxu0
    %v2639 = vadd.f32 0.0, %v2638
    %v2640 = vpop.f32.mrf.mxu0
    %v2641 = vadd.f32 0.0, %v2640
    %2642 = vdwg.mxu0
    %2643 = vmatprep.subr.mxu0 %v187
    %2644 = vmatpush1.msra.mxu0 %v186
    %2645 = vmatprep.subr.mxu0 %v179
    %2646 = vmatpush1.msra.mxu0 %v178
    %2647 = vmatprep.subr.mxu0 %v171
    %2648 = vmatpush1.msra.mxu0 %v170
    %2649 = vmatprep.subr.mxu0 %v163
    %2650 = vmatpush1.msra.mxu0 %v162
    %2651 = vmatprep.subr.mxu0 %v155
    %2652 = vmatpush1.msra.mxu0 %v154
    %2653 = vmatprep.subr.mxu0 %v147
    %2654 = vmatpush1.msra.mxu0 %v146
    %2655 = vmatprep.subr.mxu0 %v139
    %2656 = vmatpush1.msra.mxu0 %v138
    %2657 = vmatprep.subr.mxu0 %v131
    %2658 = vmatpush1.msra.mxu0 %v130
    %2659 = vmatprep.subr.mxu0 %v123
    %2660 = vmatpush1.msra.mxu0 %v122
    %2661 = vmatprep.subr.mxu0 %v115
    %2662 = vmatpush1.msra.mxu0 %v114
    %2663 = vmatprep.subr.mxu0 %v107
    %2664 = vmatpush1.msra.mxu0 %v106
    %2665 = vmatprep.subr.mxu0 %v99
    %2666 = vmatpush1.msra.mxu0 %v98
    %2667 = vmatprep.subr.mxu0 %v91
    %2668 = vmatpush1.msra.mxu0 %v90
    %2669 = vmatprep.subr.mxu0 %v83
    %2670 = vmatpush1.msra.mxu0 %v82
    %2671 = vmatprep.subr.mxu0 %v75
    %2672 = vmatpush1.msra.mxu0 %v74
    %2673 = vmatprep.subr.mxu0 %v67
    %2674 = vmatpush1.msra.mxu0 %v66
    %2675 = vmatprep.subr.mxu0 %v315
    %2676 = vmatpush2.msra.mxu0 %v314
    %2677 = vmatprep.subr.mxu0 %v307
    %2678 = vmatpush2.msra.mxu0 %v306
    %2679 = vmatprep.subr.mxu0 %v299
    %2680 = vmatpush2.msra.mxu0 %v298
    %2681 = vmatprep.subr.mxu0 %v291
    %2682 = vmatpush2.msra.mxu0 %v290
    %2683 = vmatprep.subr.mxu0 %v283
    %2684 = vmatpush2.msra.mxu0 %v282
    %2685 = vmatprep.subr.mxu0 %v275
    %2686 = vmatpush2.msra.mxu0 %v274
    %2687 = vmatprep.subr.mxu0 %v267
    %2688 = vmatpush2.msra.mxu0 %v266
    %2689 = vmatprep.subr.mxu0 %v259
    %2690 = vmatpush2.msra.mxu0 %v258
    %2691 = vmatprep.subr.mxu0 %v251
    %2692 = vmatpush2.msra.mxu0 %v250
    %2693 = vmatprep.subr.mxu0 %v243
    %2694 = vmatpush2.msra.mxu0 %v242
    %2695 = vmatprep.subr.mxu0 %v235
    %2696 = vmatpush2.msra.mxu0 %v234
    %2697 = vmatprep.subr.mxu0 %v227
    %2698 = vmatpush2.msra.mxu0 %v226
    %2699 = vmatprep.subr.mxu0 %v219
    %2700 = vmatpush2.msra.mxu0 %v218
    %2701 = vmatprep.subr.mxu0 %v211
    %2702 = vmatpush2.msra.mxu0 %v210
    %2703 = vmatprep.subr.mxu0 %v203
    %2704 = vmatpush2.msra.mxu0 %v202
    %2705 = vmatprep.subr.mxu0 %v195
    %2706 = vmatpush2.msra.mxu0 %v194
    %2707 = vmatprep.mubr.f32.mxu0 %v2468
    %2708 = vmatmul.mubr.f32.gmra.mxu0 %v2500
    %v2709 = vpop.f32.mrf.mxu0
    %v2710 = vadd.f32 0.0, %v2709
    %v2711 = vpop.f32.mrf.mxu0
    %v2712 = vadd.f32 0.0, %v2711
    %2713 = vdwg.mxu0
    %2714 = vmatprep.subr.mxu0 %v189
    %2715 = vmatpush1.msra.mxu0 %v188
    %2716 = vmatprep.subr.mxu0 %v181
    %2717 = vmatpush1.msra.mxu0 %v180
    %2718 = vmatprep.subr.mxu0 %v173
    %2719 = vmatpush1.msra.mxu0 %v172
    %2720 = vmatprep.subr.mxu0 %v165
    %2721 = vmatpush1.msra.mxu0 %v164
    %2722 = vmatprep.subr.mxu0 %v157
    %2723 = vmatpush1.msra.mxu0 %v156
    %2724 = vmatprep.subr.mxu0 %v149
    %2725 = vmatpush1.msra.mxu0 %v148
    %2726 = vmatprep.subr.mxu0 %v141
    %2727 = vmatpush1.msra.mxu0 %v140
    %2728 = vmatprep.subr.mxu0 %v133
    %2729 = vmatpush1.msra.mxu0 %v132
    %2730 = vmatprep.subr.mxu0 %v125
    %2731 = vmatpush1.msra.mxu0 %v124
    %2732 = vmatprep.subr.mxu0 %v117
    %2733 = vmatpush1.msra.mxu0 %v116
    %2734 = vmatprep.subr.mxu0 %v109
    %2735 = vmatpush1.msra.mxu0 %v108
    %2736 = vmatprep.subr.mxu0 %v101
    %2737 = vmatpush1.msra.mxu0 %v100
    %2738 = vmatprep.subr.mxu0 %v93
    %2739 = vmatpush1.msra.mxu0 %v92
    %2740 = vmatprep.subr.mxu0 %v85
    %2741 = vmatpush1.msra.mxu0 %v84
    %2742 = vmatprep.subr.mxu0 %v77
    %2743 = vmatpush1.msra.mxu0 %v76
    %2744 = vmatprep.subr.mxu0 %v69
    %2745 = vmatpush1.msra.mxu0 %v68
    %2746 = vmatprep.subr.mxu0 %v317
    %2747 = vmatpush2.msra.mxu0 %v316
    %2748 = vmatprep.subr.mxu0 %v309
    %2749 = vmatpush2.msra.mxu0 %v308
    %2750 = vmatprep.subr.mxu0 %v301
    %2751 = vmatpush2.msra.mxu0 %v300
    %2752 = vmatprep.subr.mxu0 %v293
    %2753 = vmatpush2.msra.mxu0 %v292
    %2754 = vmatprep.subr.mxu0 %v285
    %2755 = vmatpush2.msra.mxu0 %v284
    %2756 = vmatprep.subr.mxu0 %v277
    %2757 = vmatpush2.msra.mxu0 %v276
    %2758 = vmatprep.subr.mxu0 %v269
    %2759 = vmatpush2.msra.mxu0 %v268
    %2760 = vmatprep.subr.mxu0 %v261
    %2761 = vmatpush2.msra.mxu0 %v260
    %2762 = vmatprep.subr.mxu0 %v253
    %2763 = vmatpush2.msra.mxu0 %v252
    %2764 = vmatprep.subr.mxu0 %v245
    %2765 = vmatpush2.msra.mxu0 %v244
    %2766 = vmatprep.subr.mxu0 %v237
    %2767 = vmatpush2.msra.mxu0 %v236
    %2768 = vmatprep.subr.mxu0 %v229
    %2769 = vmatpush2.msra.mxu0 %v228
    %2770 = vmatprep.subr.mxu0 %v221
    %2771 = vmatpush2.msra.mxu0 %v220
    %2772 = vmatprep.subr.mxu0 %v213
    %2773 = vmatpush2.msra.mxu0 %v212
    %2774 = vmatprep.subr.mxu0 %v205
    %2775 = vmatpush2.msra.mxu0 %v204
    %2776 = vmatprep.subr.mxu0 %v197
    %2777 = vmatpush2.msra.mxu0 %v196
    %2778 = vmatprep.mubr.f32.mxu0 %v2468
    %2779 = vmatmul.mubr.f32.gmra.mxu0 %v2500
    %v2780 = vpop.f32.mrf.mxu0
    %v2781 = vadd.f32 0.0, %v2780
    %v2782 = vpop.f32.mrf.mxu0
    %v2783 = vadd.f32 0.0, %v2782
    %2784 = vdwg.mxu0
    %v2785 = vadd.f32 %v2710, %v380
    %v2786 = vadd.f32 %v2712, %v384
    %v2787 = vadd.f32 %v2781, %v388
    %v2788 = vadd.f32 %v2783, %v392
    %v2789 = vxor.u32 %v2785, 2147483648
    %v2790 = vxor.u32 %v2786, 2147483648
    %v2791 = vxor.u32 %v2787, 2147483648
    %v2792 = vmul.f32 %v2789, 1.442695
    %v2793 = vpow.pop %v2792
    %v2794 = vmul.f32 %v2790, 1.442695
    %v2795 = vpow.pop %v2794
    %v2796 = vmul.f32 %v2791, 1.442695
    %v2797 = vpow.pop %v2796
    %v2798 = vadd.f32 %v2793, 1.0
    %v2799 = vadd.f32 %v2795, 1.0
    %v2800 = vadd.f32 %v2797, 1.0
    %v2801 = vrcp.pop %v2798
    %v2802 = vmul.f32 1.0, %v2801
    %v2803 = vrcp.pop %v2799
    %v2804 = vmul.f32 1.0, %v2803
    %v2805 = vrcp.pop %v2800
    %v2806 = vmul.f32 1.0, %v2805
    %v2807 = vtanh.pop %v2788
    %v2808 = vmul.f32 %v2804, %v2466
    %v2809 = vmul.f32 %v2802, %v2807
    %v2810 = vadd.f32 %v2808, %v2809
    %v2811 = vtanh.pop %v2810
    %v2812 = vmul.f32 %v2806, %v2811
    %v2813 = vld [vmem:[#allocation2 + $0xc0] sm:$0xff]
    %v2814 = vld [vmem:[#allocation2 + $0xc8] sm:$0xff]
    %v2815 = vld [vmem:[#allocation2 + $0xd0] sm:$0xff]
    %v2816 = vld [vmem:[#allocation2 + $0xd8] sm:$0xff]
    %v2817 = vadd.f32 %v2813, %v2568
    %v2818 = vadd.f32 %v2814, %v2570
    %v2819 = vadd.f32 %v2815, %v2639
    %v2820 = vadd.f32 %v2816, %v2641
    %v2821 = vxor.u32 %v2817, 2147483648
    %v2822 = vxor.u32 %v2818, 2147483648
    %v2823 = vxor.u32 %v2819, 2147483648
    %v2824 = vmul.f32 %v2821, 1.442695
    %v2825 = vpow.pop %v2824
    %v2826 = vmul.f32 %v2822, 1.442695
    %v2827 = vpow.pop %v2826
    %v2828 = vmul.f32 %v2823, 1.442695
    %v2829 = vpow.pop %v2828
    %v2830 = vadd.f32 %v2825, 1.0
    %v2831 = vadd.f32 %v2827, 1.0
    %v2832 = vadd.f32 %v2829, 1.0
    %v2833 = vrcp.pop %v2830
    %v2834 = vmul.f32 1.0, %v2833
    %v2835 = vrcp.pop %v2831
    %v2836 = vmul.f32 1.0, %v2835
    %v2837 = vrcp.pop %v2832
    %v2838 = vmul.f32 1.0, %v2837
    %v2839 = vtanh.pop %v2820
    %v2840 = vmul.f32 %v2836, %v2498
    %v2841 = vmul.f32 %v2834, %v2839
    %v2842 = vadd.f32 %v2840, %v2841
    %v2843 = vtanh.pop %v2842
    %v2844 = vmul.f32 %v2838, %v2843
    %2845 = vmatprep.subr.mxu0 %v183
    %2846 = vmatpush1.msra.mxu0 %v182
    %2847 = vmatprep.subr.mxu0 %v175
    %2848 = vmatpush1.msra.mxu0 %v174
    %2849 = vmatprep.subr.mxu0 %v167
    %2850 = vmatpush1.msra.mxu0 %v166
    %2851 = vmatprep.subr.mxu0 %v159
    %2852 = vmatpush1.msra.mxu0 %v158
    %2853 = vmatprep.subr.mxu0 %v151
    %2854 = vmatpush1.msra.mxu0 %v150
    %2855 = vmatprep.subr.mxu0 %v143
    %2856 = vmatpush1.msra.mxu0 %v142
    %2857 = vmatprep.subr.mxu0 %v135
    %2858 = vmatpush1.msra.mxu0 %v134
    %2859 = vmatprep.subr.mxu0 %v127
    %2860 = vmatpush1.msra.mxu0 %v126
    %2861 = vmatprep.subr.mxu0 %v119
    %2862 = vmatpush1.msra.mxu0 %v118
    %2863 = vmatprep.subr.mxu0 %v111
    %2864 = vmatpush1.msra.mxu0 %v110
    %2865 = vmatprep.subr.mxu0 %v103
    %2866 = vmatpush1.msra.mxu0 %v102
    %2867 = vmatprep.subr.mxu0 %v95
    %2868 = vmatpush1.msra.mxu0 %v94
    %2869 = vmatprep.subr.mxu0 %v87
    %2870 = vmatpush1.msra.mxu0 %v86
    %2871 = vmatprep.subr.mxu0 %v79
    %2872 = vmatpush1.msra.mxu0 %v78
    %2873 = vmatprep.subr.mxu0 %v71
    %2874 = vmatpush1.msra.mxu0 %v70
    %2875 = vmatprep.subr.mxu0 %v63
    %2876 = vmatpush1.msra.mxu0 %v62
    %2877 = vmatprep.subr.mxu0 %v311
    %2878 = vmatpush2.msra.mxu0 %v310
    %2879 = vmatprep.subr.mxu0 %v303
    %2880 = vmatpush2.msra.mxu0 %v302
    %2881 = vmatprep.subr.mxu0 %v295
    %2882 = vmatpush2.msra.mxu0 %v294
    %2883 = vmatprep.subr.mxu0 %v287
    %2884 = vmatpush2.msra.mxu0 %v286
    %2885 = vmatprep.subr.mxu0 %v279
    %2886 = vmatpush2.msra.mxu0 %v278
    %2887 = vmatprep.subr.mxu0 %v271
    %2888 = vmatpush2.msra.mxu0 %v270
    %2889 = vmatprep.subr.mxu0 %v263
    %2890 = vmatpush2.msra.mxu0 %v262
    %2891 = vmatprep.subr.mxu0 %v255
    %2892 = vmatpush2.msra.mxu0 %v254
    %2893 = vmatprep.subr.mxu0 %v247
    %2894 = vmatpush2.msra.mxu0 %v246
    %2895 = vmatprep.subr.mxu0 %v239
    %2896 = vmatpush2.msra.mxu0 %v238
    %2897 = vmatprep.subr.mxu0 %v231
    %2898 = vmatpush2.msra.mxu0 %v230
    %2899 = vmatprep.subr.mxu0 %v223
    %2900 = vmatpush2.msra.mxu0 %v222
    %2901 = vmatprep.subr.mxu0 %v215
    %2902 = vmatpush2.msra.mxu0 %v214
    %2903 = vmatprep.subr.mxu0 %v207
    %2904 = vmatpush2.msra.mxu0 %v206
    %2905 = vmatprep.subr.mxu0 %v199
    %2906 = vmatpush2.msra.mxu0 %v198
    %2907 = vmatprep.subr.mxu0 %v191
    %2908 = vmatpush2.msra.mxu0 %v190
    %2909 = vmatprep.mubr.f32.mxu0 %v2812
    %2910 = vmatmul.mubr.f32.gmra.mxu0 %v2844
    %v2911 = vpop.f32.mrf.mxu0
    %v2912 = vadd.f32 0.0, %v2911
    %v2913 = vpop.f32.mrf.mxu0
    %v2914 = vadd.f32 0.0, %v2913
    %2915 = vdwg.mxu0
    %2916 = vmatprep.subr.mxu0 %v185
    %2917 = vmatpush1.msra.mxu0 %v184
    %2918 = vmatprep.subr.mxu0 %v177
    %2919 = vmatpush1.msra.mxu0 %v176
    %2920 = vmatprep.subr.mxu0 %v169
    %2921 = vmatpush1.msra.mxu0 %v168
    %2922 = vmatprep.subr.mxu0 %v161
    %2923 = vmatpush1.msra.mxu0 %v160
    %2924 = vmatprep.subr.mxu0 %v153
    %2925 = vmatpush1.msra.mxu0 %v152
    %2926 = vmatprep.subr.mxu0 %v145
    %2927 = vmatpush1.msra.mxu0 %v144
    %2928 = vmatprep.subr.mxu0 %v137
    %2929 = vmatpush1.msra.mxu0 %v136
    %2930 = vmatprep.subr.mxu0 %v129
    %2931 = vmatpush1.msra.mxu0 %v128
    %2932 = vmatprep.subr.mxu0 %v121
    %2933 = vmatpush1.msra.mxu0 %v120
    %2934 = vmatprep.subr.mxu0 %v113
    %2935 = vmatpush1.msra.mxu0 %v112
    %2936 = vmatprep.subr.mxu0 %v105
    %2937 = vmatpush1.msra.mxu0 %v104
    %2938 = vmatprep.subr.mxu0 %v97
    %2939 = vmatpush1.msra.mxu0 %v96
    %2940 = vmatprep.subr.mxu0 %v89
    %2941 = vmatpush1.msra.mxu0 %v88
    %2942 = vmatprep.subr.mxu0 %v81
    %2943 = vmatpush1.msra.mxu0 %v80
    %2944 = vmatprep.subr.mxu0 %v73
    %2945 = vmatpush1.msra.mxu0 %v72
    %2946 = vmatprep.subr.mxu0 %v65
    %2947 = vmatpush1.msra.mxu0 %v64
    %2948 = vmatprep.subr.mxu0 %v313
    %2949 = vmatpush2.msra.mxu0 %v312
    %2950 = vmatprep.subr.mxu0 %v305
    %2951 = vmatpush2.msra.mxu0 %v304
    %2952 = vmatprep.subr.mxu0 %v297
    %2953 = vmatpush2.msra.mxu0 %v296
    %2954 = vmatprep.subr.mxu0 %v289
    %2955 = vmatpush2.msra.mxu0 %v288
    %2956 = vmatprep.subr.mxu0 %v281
    %2957 = vmatpush2.msra.mxu0 %v280
    %2958 = vmatprep.subr.mxu0 %v273
    %2959 = vmatpush2.msra.mxu0 %v272
    %2960 = vmatprep.subr.mxu0 %v265
    %2961 = vmatpush2.msra.mxu0 %v264
    %2962 = vmatprep.subr.mxu0 %v257
    %2963 = vmatpush2.msra.mxu0 %v256
    %2964 = vmatprep.subr.mxu0 %v249
    %2965 = vmatpush2.msra.mxu0 %v248
    %2966 = vmatprep.subr.mxu0 %v241
    %2967 = vmatpush2.msra.mxu0 %v240
    %2968 = vmatprep.subr.mxu0 %v233
    %2969 = vmatpush2.msra.mxu0 %v232
    %2970 = vmatprep.subr.mxu0 %v225
    %2971 = vmatpush2.msra.mxu0 %v224
    %2972 = vmatprep.subr.mxu0 %v217
    %2973 = vmatpush2.msra.mxu0 %v216
    %2974 = vmatprep.subr.mxu0 %v209
    %2975 = vmatpush2.msra.mxu0 %v208
    %2976 = vmatprep.subr.mxu0 %v201
    %2977 = vmatpush2.msra.mxu0 %v200
    %2978 = vmatprep.subr.mxu0 %v193
    %2979 = vmatpush2.msra.mxu0 %v192
    %2980 = vmatprep.mubr.f32.mxu0 %v2812
    %2981 = vmatmul.mubr.f32.gmra.mxu0 %v2844
    %v2982 = vpop.f32.mrf.mxu0
    %v2983 = vadd.f32 0.0, %v2982
    %v2984 = vpop.f32.mrf.mxu0
    %v2985 = vadd.f32 0.0, %v2984
    %2986 = vdwg.mxu0
    %2987 = vmatprep.subr.mxu0 %v187
    %2988 = vmatpush1.msra.mxu0 %v186
    %2989 = vmatprep.subr.mxu0 %v179
    %2990 = vmatpush1.msra.mxu0 %v178
    %2991 = vmatprep.subr.mxu0 %v171
    %2992 = vmatpush1.msra.mxu0 %v170
    %2993 = vmatprep.subr.mxu0 %v163
    %2994 = vmatpush1.msra.mxu0 %v162
    %2995 = vmatprep.subr.mxu0 %v155
    %2996 = vmatpush1.msra.mxu0 %v154
    %2997 = vmatprep.subr.mxu0 %v147
    %2998 = vmatpush1.msra.mxu0 %v146
    %2999 = vmatprep.subr.mxu0 %v139
    %3000 = vmatpush1.msra.mxu0 %v138
    %3001 = vmatprep.subr.mxu0 %v131
    %3002 = vmatpush1.msra.mxu0 %v130
    %3003 = vmatprep.subr.mxu0 %v123
    %3004 = vmatpush1.msra.mxu0 %v122
    %3005 = vmatprep.subr.mxu0 %v115
    %3006 = vmatpush1.msra.mxu0 %v114
    %3007 = vmatprep.subr.mxu0 %v107
    %3008 = vmatpush1.msra.mxu0 %v106
    %3009 = vmatprep.subr.mxu0 %v99
    %3010 = vmatpush1.msra.mxu0 %v98
    %3011 = vmatprep.subr.mxu0 %v91
    %3012 = vmatpush1.msra.mxu0 %v90
    %3013 = vmatprep.subr.mxu0 %v83
    %3014 = vmatpush1.msra.mxu0 %v82
    %3015 = vmatprep.subr.mxu0 %v75
    %3016 = vmatpush1.msra.mxu0 %v74
    %3017 = vmatprep.subr.mxu0 %v67
    %3018 = vmatpush1.msra.mxu0 %v66
    %3019 = vmatprep.subr.mxu0 %v315
    %3020 = vmatpush2.msra.mxu0 %v314
    %3021 = vmatprep.subr.mxu0 %v307
    %3022 = vmatpush2.msra.mxu0 %v306
    %3023 = vmatprep.subr.mxu0 %v299
    %3024 = vmatpush2.msra.mxu0 %v298
    %3025 = vmatprep.subr.mxu0 %v291
    %3026 = vmatpush2.msra.mxu0 %v290
    %3027 = vmatprep.subr.mxu0 %v283
    %3028 = vmatpush2.msra.mxu0 %v282
    %3029 = vmatprep.subr.mxu0 %v275
    %3030 = vmatpush2.msra.mxu0 %v274
    %3031 = vmatprep.subr.mxu0 %v267
    %3032 = vmatpush2.msra.mxu0 %v266
    %3033 = vmatprep.subr.mxu0 %v259
    %3034 = vmatpush2.msra.mxu0 %v258
    %3035 = vmatprep.subr.mxu0 %v251
    %3036 = vmatpush2.msra.mxu0 %v250
    %3037 = vmatprep.subr.mxu0 %v243
    %3038 = vmatpush2.msra.mxu0 %v242
    %3039 = vmatprep.subr.mxu0 %v235
    %3040 = vmatpush2.msra.mxu0 %v234
    %3041 = vmatprep.subr.mxu0 %v227
    %3042 = vmatpush2.msra.mxu0 %v226
    %3043 = vmatprep.subr.mxu0 %v219
    %3044 = vmatpush2.msra.mxu0 %v218
    %3045 = vmatprep.subr.mxu0 %v211
    %3046 = vmatpush2.msra.mxu0 %v210
    %3047 = vmatprep.subr.mxu0 %v203
    %3048 = vmatpush2.msra.mxu0 %v202
    %3049 = vmatprep.subr.mxu0 %v195
    %3050 = vmatpush2.msra.mxu0 %v194
    %3051 = vmatprep.mubr.f32.mxu0 %v2812
    %3052 = vmatmul.mubr.f32.gmra.mxu0 %v2844
    %v3053 = vpop.f32.mrf.mxu0
    %v3054 = vadd.f32 0.0, %v3053
    %v3055 = vpop.f32.mrf.mxu0
    %v3056 = vadd.f32 0.0, %v3055
    %3057 = vdwg.mxu0
    %3058 = vmatprep.subr.mxu0 %v189
    %3059 = vmatpush1.msra.mxu0 %v188
    %3060 = vmatprep.subr.mxu0 %v181
    %3061 = vmatpush1.msra.mxu0 %v180
    %3062 = vmatprep.subr.mxu0 %v173
    %3063 = vmatpush1.msra.mxu0 %v172
    %3064 = vmatprep.subr.mxu0 %v165
    %3065 = vmatpush1.msra.mxu0 %v164
    %3066 = vmatprep.subr.mxu0 %v157
    %3067 = vmatpush1.msra.mxu0 %v156
    %3068 = vmatprep.subr.mxu0 %v149
    %3069 = vmatpush1.msra.mxu0 %v148
    %3070 = vmatprep.subr.mxu0 %v141
    %3071 = vmatpush1.msra.mxu0 %v140
    %3072 = vmatprep.subr.mxu0 %v133
    %3073 = vmatpush1.msra.mxu0 %v132
    %3074 = vmatprep.subr.mxu0 %v125
    %3075 = vmatpush1.msra.mxu0 %v124
    %3076 = vmatprep.subr.mxu0 %v117
    %3077 = vmatpush1.msra.mxu0 %v116
    %3078 = vmatprep.subr.mxu0 %v109
    %3079 = vmatpush1.msra.mxu0 %v108
    %3080 = vmatprep.subr.mxu0 %v101
    %3081 = vmatpush1.msra.mxu0 %v100
    %3082 = vmatprep.subr.mxu0 %v93
    %3083 = vmatpush1.msra.mxu0 %v92
    %3084 = vmatprep.subr.mxu0 %v85
    %3085 = vmatpush1.msra.mxu0 %v84
    %3086 = vmatprep.subr.mxu0 %v77
    %3087 = vmatpush1.msra.mxu0 %v76
    %3088 = vmatprep.subr.mxu0 %v69
    %3089 = vmatpush1.msra.mxu0 %v68
    %3090 = vmatprep.subr.mxu0 %v317
    %3091 = vmatpush2.msra.mxu0 %v316
    %3092 = vmatprep.subr.mxu0 %v309
    %3093 = vmatpush2.msra.mxu0 %v308
    %3094 = vmatprep.subr.mxu0 %v301
    %3095 = vmatpush2.msra.mxu0 %v300
    %3096 = vmatprep.subr.mxu0 %v293
    %3097 = vmatpush2.msra.mxu0 %v292
    %3098 = vmatprep.subr.mxu0 %v285
    %3099 = vmatpush2.msra.mxu0 %v284
    %3100 = vmatprep.subr.mxu0 %v277
    %3101 = vmatpush2.msra.mxu0 %v276
    %3102 = vmatprep.subr.mxu0 %v269
    %3103 = vmatpush2.msra.mxu0 %v268
    %3104 = vmatprep.subr.mxu0 %v261
    %3105 = vmatpush2.msra.mxu0 %v260
    %3106 = vmatprep.subr.mxu0 %v253
    %3107 = vmatpush2.msra.mxu0 %v252
    %3108 = vmatprep.subr.mxu0 %v245
    %3109 = vmatpush2.msra.mxu0 %v244
    %3110 = vmatprep.subr.mxu0 %v237
    %3111 = vmatpush2.msra.mxu0 %v236
    %3112 = vmatprep.subr.mxu0 %v229
    %3113 = vmatpush2.msra.mxu0 %v228
    %3114 = vmatprep.subr.mxu0 %v221
    %3115 = vmatpush2.msra.mxu0 %v220
    %3116 = vmatprep.subr.mxu0 %v213
    %3117 = vmatpush2.msra.mxu0 %v212
    %3118 = vmatprep.subr.mxu0 %v205
    %3119 = vmatpush2.msra.mxu0 %v204
    %3120 = vmatprep.subr.mxu0 %v197
    %3121 = vmatpush2.msra.mxu0 %v196
    %3122 = vmatprep.mubr.f32.mxu0 %v2812
    %3123 = vmatmul.mubr.f32.gmra.mxu0 %v2844
    %v3124 = vpop.f32.mrf.mxu0
    %v3125 = vadd.f32 0.0, %v3124
    %v3126 = vpop.f32.mrf.mxu0
    %v3127 = vadd.f32 0.0, %v3126
    %3128 = vdwg.mxu0
    %v3129 = vadd.f32 %v3054, %v380
    %v3130 = vadd.f32 %v3056, %v384
    %v3131 = vadd.f32 %v3125, %v388
    %v3132 = vadd.f32 %v3127, %v392
    %v3133 = vxor.u32 %v3129, 2147483648
    %v3134 = vxor.u32 %v3130, 2147483648
    %v3135 = vxor.u32 %v3131, 2147483648
    %v3136 = vmul.f32 %v3133, 1.442695
    %v3137 = vpow.pop %v3136
    %v3138 = vmul.f32 %v3134, 1.442695
    %v3139 = vpow.pop %v3138
    %v3140 = vmul.f32 %v3135, 1.442695
    %v3141 = vpow.pop %v3140
    %v3142 = vadd.f32 %v3137, 1.0
    %v3143 = vadd.f32 %v3139, 1.0
    %v3144 = vadd.f32 %v3141, 1.0
    %v3145 = vrcp.pop %v3142
    %v3146 = vmul.f32 1.0, %v3145
    %v3147 = vrcp.pop %v3143
    %v3148 = vmul.f32 1.0, %v3147
    %v3149 = vrcp.pop %v3144
    %v3150 = vmul.f32 1.0, %v3149
    %v3151 = vtanh.pop %v3132
    %v3152 = vmul.f32 %v3148, %v2810
    %v3153 = vmul.f32 %v3146, %v3151
    %v3154 = vadd.f32 %v3152, %v3153
    %v3155 = vtanh.pop %v3154
    %v3156 = vmul.f32 %v3150, %v3155
    %v3157 = vld [vmem:[#allocation2 + $0xe0] sm:$0xff]
    %v3158 = vld [vmem:[#allocation2 + $0xe8] sm:$0xff]
    %v3159 = vld [vmem:[#allocation2 + $0xf0] sm:$0xff]
    %v3160 = vld [vmem:[#allocation2 + $0xf8] sm:$0xff]
    %v3161 = vadd.f32 %v3157, %v2912
    %v3162 = vadd.f32 %v3158, %v2914
    %v3163 = vadd.f32 %v3159, %v2983
    %v3164 = vadd.f32 %v3160, %v2985
    %v3165 = vxor.u32 %v3161, 2147483648
    %v3166 = vxor.u32 %v3162, 2147483648
    %v3167 = vxor.u32 %v3163, 2147483648
    %v3168 = vmul.f32 %v3165, 1.442695
    %v3169 = vpow.pop %v3168
    %v3170 = vmul.f32 %v3166, 1.442695
    %v3171 = vpow.pop %v3170
    %v3172 = vmul.f32 %v3167, 1.442695
    %v3173 = vpow.pop %v3172
    %v3174 = vadd.f32 %v3169, 1.0
    %v3175 = vadd.f32 %v3171, 1.0
    %v3176 = vadd.f32 %v3173, 1.0
    %v3177 = vrcp.pop %v3174
    %v3178 = vmul.f32 1.0, %v3177
    %v3179 = vrcp.pop %v3175
    %v3180 = vmul.f32 1.0, %v3179
    %v3181 = vrcp.pop %v3176
    %v3182 = vmul.f32 1.0, %v3181
    %v3183 = vtanh.pop %v3164
    %v3184 = vmul.f32 %v3180, %v2842
    %v3185 = vmul.f32 %v3178, %v3183
    %v3186 = vadd.f32 %v3184, %v3185
    %v3187 = vtanh.pop %v3186
    %v3188 = vmul.f32 %v3182, %v3187
    %3189 = vmatprep.subr.mxu0 %v183
    %3190 = vmatpush1.msra.mxu0 %v182
    %3191 = vmatprep.subr.mxu0 %v175
    %3192 = vmatpush1.msra.mxu0 %v174
    %3193 = vmatprep.subr.mxu0 %v167
    %3194 = vmatpush1.msra.mxu0 %v166
    %3195 = vmatprep.subr.mxu0 %v159
    %3196 = vmatpush1.msra.mxu0 %v158
    %3197 = vmatprep.subr.mxu0 %v151
    %3198 = vmatpush1.msra.mxu0 %v150
    %3199 = vmatprep.subr.mxu0 %v143
    %3200 = vmatpush1.msra.mxu0 %v142
    %3201 = vmatprep.subr.mxu0 %v135
    %3202 = vmatpush1.msra.mxu0 %v134
    %3203 = vmatprep.subr.mxu0 %v127
    %3204 = vmatpush1.msra.mxu0 %v126
    %3205 = vmatprep.subr.mxu0 %v119
    %3206 = vmatpush1.msra.mxu0 %v118
    %3207 = vmatprep.subr.mxu0 %v111
    %3208 = vmatpush1.msra.mxu0 %v110
    %3209 = vmatprep.subr.mxu0 %v103
    %3210 = vmatpush1.msra.mxu0 %v102
    %3211 = vmatprep.subr.mxu0 %v95
    %3212 = vmatpush1.msra.mxu0 %v94
    %3213 = vmatprep.subr.mxu0 %v87
    %3214 = vmatpush1.msra.mxu0 %v86
    %3215 = vmatprep.subr.mxu0 %v79
    %3216 = vmatpush1.msra.mxu0 %v78
    %3217 = vmatprep.subr.mxu0 %v71
    %3218 = vmatpush1.msra.mxu0 %v70
    %3219 = vmatprep.subr.mxu0 %v63
    %3220 = vmatpush1.msra.mxu0 %v62
    %3221 = vmatprep.subr.mxu0 %v311
    %3222 = vmatpush2.msra.mxu0 %v310
    %3223 = vmatprep.subr.mxu0 %v303
    %3224 = vmatpush2.msra.mxu0 %v302
    %3225 = vmatprep.subr.mxu0 %v295
    %3226 = vmatpush2.msra.mxu0 %v294
    %3227 = vmatprep.subr.mxu0 %v287
    %3228 = vmatpush2.msra.mxu0 %v286
    %3229 = vmatprep.subr.mxu0 %v279
    %3230 = vmatpush2.msra.mxu0 %v278
    %3231 = vmatprep.subr.mxu0 %v271
    %3232 = vmatpush2.msra.mxu0 %v270
    %3233 = vmatprep.subr.mxu0 %v263
    %3234 = vmatpush2.msra.mxu0 %v262
    %3235 = vmatprep.subr.mxu0 %v255
    %3236 = vmatpush2.msra.mxu0 %v254
    %3237 = vmatprep.subr.mxu0 %v247
    %3238 = vmatpush2.msra.mxu0 %v246
    %3239 = vmatprep.subr.mxu0 %v239
    %3240 = vmatpush2.msra.mxu0 %v238
    %3241 = vmatprep.subr.mxu0 %v231
    %3242 = vmatpush2.msra.mxu0 %v230
    %3243 = vmatprep.subr.mxu0 %v223
    %3244 = vmatpush2.msra.mxu0 %v222
    %3245 = vmatprep.subr.mxu0 %v215
    %3246 = vmatpush2.msra.mxu0 %v214
    %3247 = vmatprep.subr.mxu0 %v207
    %3248 = vmatpush2.msra.mxu0 %v206
    %3249 = vmatprep.subr.mxu0 %v199
    %3250 = vmatpush2.msra.mxu0 %v198
    %3251 = vmatprep.subr.mxu0 %v191
    %3252 = vmatpush2.msra.mxu0 %v190
    %3253 = vmatprep.mubr.f32.mxu0 %v3156
    %3254 = vmatmul.mubr.f32.gmra.mxu0 %v3188
    %v3255 = vpop.f32.mrf.mxu0
    %v3256 = vadd.f32 0.0, %v3255
    %v3257 = vpop.f32.mrf.mxu0
    %v3258 = vadd.f32 0.0, %v3257
    %3259 = vdwg.mxu0
    %3260 = vmatprep.subr.mxu0 %v185
    %3261 = vmatpush1.msra.mxu0 %v184
    %3262 = vmatprep.subr.mxu0 %v177
    %3263 = vmatpush1.msra.mxu0 %v176
    %3264 = vmatprep.subr.mxu0 %v169
    %3265 = vmatpush1.msra.mxu0 %v168
    %3266 = vmatprep.subr.mxu0 %v161
    %3267 = vmatpush1.msra.mxu0 %v160
    %3268 = vmatprep.subr.mxu0 %v153
    %3269 = vmatpush1.msra.mxu0 %v152
    %3270 = vmatprep.subr.mxu0 %v145
    %3271 = vmatpush1.msra.mxu0 %v144
    %3272 = vmatprep.subr.mxu0 %v137
    %3273 = vmatpush1.msra.mxu0 %v136
    %3274 = vmatprep.subr.mxu0 %v129
    %3275 = vmatpush1.msra.mxu0 %v128
    %3276 = vmatprep.subr.mxu0 %v121
    %3277 = vmatpush1.msra.mxu0 %v120
    %3278 = vmatprep.subr.mxu0 %v113
    %3279 = vmatpush1.msra.mxu0 %v112
    %3280 = vmatprep.subr.mxu0 %v105
    %3281 = vmatpush1.msra.mxu0 %v104
    %3282 = vmatprep.subr.mxu0 %v97
    %3283 = vmatpush1.msra.mxu0 %v96
    %3284 = vmatprep.subr.mxu0 %v89
    %3285 = vmatpush1.msra.mxu0 %v88
    %3286 = vmatprep.subr.mxu0 %v81
    %3287 = vmatpush1.msra.mxu0 %v80
    %3288 = vmatprep.subr.mxu0 %v73
    %3289 = vmatpush1.msra.mxu0 %v72
    %3290 = vmatprep.subr.mxu0 %v65
    %3291 = vmatpush1.msra.mxu0 %v64
    %3292 = vmatprep.subr.mxu0 %v313
    %3293 = vmatpush2.msra.mxu0 %v312
    %3294 = vmatprep.subr.mxu0 %v305
    %3295 = vmatpush2.msra.mxu0 %v304
    %3296 = vmatprep.subr.mxu0 %v297
    %3297 = vmatpush2.msra.mxu0 %v296
    %3298 = vmatprep.subr.mxu0 %v289
    %3299 = vmatpush2.msra.mxu0 %v288
    %3300 = vmatprep.subr.mxu0 %v281
    %3301 = vmatpush2.msra.mxu0 %v280
    %3302 = vmatprep.subr.mxu0 %v273
    %3303 = vmatpush2.msra.mxu0 %v272
    %3304 = vmatprep.subr.mxu0 %v265
    %3305 = vmatpush2.msra.mxu0 %v264
    %3306 = vmatprep.subr.mxu0 %v257
    %3307 = vmatpush2.msra.mxu0 %v256
    %3308 = vmatprep.subr.mxu0 %v249
    %3309 = vmatpush2.msra.mxu0 %v248
    %3310 = vmatprep.subr.mxu0 %v241
    %3311 = vmatpush2.msra.mxu0 %v240
    %3312 = vmatprep.subr.mxu0 %v233
    %3313 = vmatpush2.msra.mxu0 %v232
    %3314 = vmatprep.subr.mxu0 %v225
    %3315 = vmatpush2.msra.mxu0 %v224
    %3316 = vmatprep.subr.mxu0 %v217
    %3317 = vmatpush2.msra.mxu0 %v216
    %3318 = vmatprep.subr.mxu0 %v209
    %3319 = vmatpush2.msra.mxu0 %v208
    %3320 = vmatprep.subr.mxu0 %v201
    %3321 = vmatpush2.msra.mxu0 %v200
    %3322 = vmatprep.subr.mxu0 %v193
    %3323 = vmatpush2.msra.mxu0 %v192
    %3324 = vmatprep.mubr.f32.mxu0 %v3156
    %3325 = vmatmul.mubr.f32.gmra.mxu0 %v3188
    %v3326 = vpop.f32.mrf.mxu0
    %v3327 = vadd.f32 0.0, %v3326
    %v3328 = vpop.f32.mrf.mxu0
    %v3329 = vadd.f32 0.0, %v3328
    %3330 = vdwg.mxu0
    %3331 = vmatprep.subr.mxu0 %v187
    %3332 = vmatpush1.msra.mxu0 %v186
    %3333 = vmatprep.subr.mxu0 %v179
    %3334 = vmatpush1.msra.mxu0 %v178
    %3335 = vmatprep.subr.mxu0 %v171
    %3336 = vmatpush1.msra.mxu0 %v170
    %3337 = vmatprep.subr.mxu0 %v163
    %3338 = vmatpush1.msra.mxu0 %v162
    %3339 = vmatprep.subr.mxu0 %v155
    %3340 = vmatpush1.msra.mxu0 %v154
    %3341 = vmatprep.subr.mxu0 %v147
    %3342 = vmatpush1.msra.mxu0 %v146
    %3343 = vmatprep.subr.mxu0 %v139
    %3344 = vmatpush1.msra.mxu0 %v138
    %3345 = vmatprep.subr.mxu0 %v131
    %3346 = vmatpush1.msra.mxu0 %v130
    %3347 = vmatprep.subr.mxu0 %v123
    %3348 = vmatpush1.msra.mxu0 %v122
    %3349 = vmatprep.subr.mxu0 %v115
    %3350 = vmatpush1.msra.mxu0 %v114
    %3351 = vmatprep.subr.mxu0 %v107
    %3352 = vmatpush1.msra.mxu0 %v106
    %3353 = vmatprep.subr.mxu0 %v99
    %3354 = vmatpush1.msra.mxu0 %v98
    %3355 = vmatprep.subr.mxu0 %v91
    %3356 = vmatpush1.msra.mxu0 %v90
    %3357 = vmatprep.subr.mxu0 %v83
    %3358 = vmatpush1.msra.mxu0 %v82
    %3359 = vmatprep.subr.mxu0 %v75
    %3360 = vmatpush1.msra.mxu0 %v74
    %3361 = vmatprep.subr.mxu0 %v67
    %3362 = vmatpush1.msra.mxu0 %v66
    %3363 = vmatprep.subr.mxu0 %v315
    %3364 = vmatpush2.msra.mxu0 %v314
    %3365 = vmatprep.subr.mxu0 %v307
    %3366 = vmatpush2.msra.mxu0 %v306
    %3367 = vmatprep.subr.mxu0 %v299
    %3368 = vmatpush2.msra.mxu0 %v298
    %3369 = vmatprep.subr.mxu0 %v291
    %3370 = vmatpush2.msra.mxu0 %v290
    %3371 = vmatprep.subr.mxu0 %v283
    %3372 = vmatpush2.msra.mxu0 %v282
    %3373 = vmatprep.subr.mxu0 %v275
    %3374 = vmatpush2.msra.mxu0 %v274
    %3375 = vmatprep.subr.mxu0 %v267
    %3376 = vmatpush2.msra.mxu0 %v266
    %3377 = vmatprep.subr.mxu0 %v259
    %3378 = vmatpush2.msra.mxu0 %v258
    %3379 = vmatprep.subr.mxu0 %v251
    %3380 = vmatpush2.msra.mxu0 %v250
    %3381 = vmatprep.subr.mxu0 %v243
    %3382 = vmatpush2.msra.mxu0 %v242
    %3383 = vmatprep.subr.mxu0 %v235
    %3384 = vmatpush2.msra.mxu0 %v234
    %3385 = vmatprep.subr.mxu0 %v227
    %3386 = vmatpush2.msra.mxu0 %v226
    %3387 = vmatprep.subr.mxu0 %v219
    %3388 = vmatpush2.msra.mxu0 %v218
    %3389 = vmatprep.subr.mxu0 %v211
    %3390 = vmatpush2.msra.mxu0 %v210
    %3391 = vmatprep.subr.mxu0 %v203
    %3392 = vmatpush2.msra.mxu0 %v202
    %3393 = vmatprep.subr.mxu0 %v195
    %3394 = vmatpush2.msra.mxu0 %v194
    %3395 = vmatprep.mubr.f32.mxu0 %v3156
    %3396 = vmatmul.mubr.f32.gmra.mxu0 %v3188
    %v3397 = vpop.f32.mrf.mxu0
    %v3398 = vadd.f32 0.0, %v3397
    %v3399 = vpop.f32.mrf.mxu0
    %v3400 = vadd.f32 0.0, %v3399
    %3401 = vdwg.mxu0
    %3402 = vmatprep.subr.mxu0 %v189
    %3403 = vmatpush1.msra.mxu0 %v188
    %3404 = vmatprep.subr.mxu0 %v181
    %3405 = vmatpush1.msra.mxu0 %v180
    %3406 = vmatprep.subr.mxu0 %v173
    %3407 = vmatpush1.msra.mxu0 %v172
    %3408 = vmatprep.subr.mxu0 %v165
    %3409 = vmatpush1.msra.mxu0 %v164
    %3410 = vmatprep.subr.mxu0 %v157
    %3411 = vmatpush1.msra.mxu0 %v156
    %3412 = vmatprep.subr.mxu0 %v149
    %3413 = vmatpush1.msra.mxu0 %v148
    %3414 = vmatprep.subr.mxu0 %v141
    %3415 = vmatpush1.msra.mxu0 %v140
    %3416 = vmatprep.subr.mxu0 %v133
    %3417 = vmatpush1.msra.mxu0 %v132
    %3418 = vmatprep.subr.mxu0 %v125
    %3419 = vmatpush1.msra.mxu0 %v124
    %3420 = vmatprep.subr.mxu0 %v117
    %3421 = vmatpush1.msra.mxu0 %v116
    %3422 = vmatprep.subr.mxu0 %v109
    %3423 = vmatpush1.msra.mxu0 %v108
    %3424 = vmatprep.subr.mxu0 %v101
    %3425 = vmatpush1.msra.mxu0 %v100
    %3426 = vmatprep.subr.mxu0 %v93
    %3427 = vmatpush1.msra.mxu0 %v92
    %3428 = vmatprep.subr.mxu0 %v85
    %3429 = vmatpush1.msra.mxu0 %v84
    %3430 = vmatprep.subr.mxu0 %v77
    %3431 = vmatpush1.msra.mxu0 %v76
    %3432 = vmatprep.subr.mxu0 %v69
    %3433 = vmatpush1.msra.mxu0 %v68
    %3434 = vmatprep.subr.mxu0 %v317
    %3435 = vmatpush2.msra.mxu0 %v316
    %3436 = vmatprep.subr.mxu0 %v309
    %3437 = vmatpush2.msra.mxu0 %v308
    %3438 = vmatprep.subr.mxu0 %v301
    %3439 = vmatpush2.msra.mxu0 %v300
    %3440 = vmatprep.subr.mxu0 %v293
    %3441 = vmatpush2.msra.mxu0 %v292
    %3442 = vmatprep.subr.mxu0 %v285
    %3443 = vmatpush2.msra.mxu0 %v284
    %3444 = vmatprep.subr.mxu0 %v277
    %3445 = vmatpush2.msra.mxu0 %v276
    %3446 = vmatprep.subr.mxu0 %v269
    %3447 = vmatpush2.msra.mxu0 %v268
    %3448 = vmatprep.subr.mxu0 %v261
    %3449 = vmatpush2.msra.mxu0 %v260
    %3450 = vmatprep.subr.mxu0 %v253
    %3451 = vmatpush2.msra.mxu0 %v252
    %3452 = vmatprep.subr.mxu0 %v245
    %3453 = vmatpush2.msra.mxu0 %v244
    %3454 = vmatprep.subr.mxu0 %v237
    %3455 = vmatpush2.msra.mxu0 %v236
    %3456 = vmatprep.subr.mxu0 %v229
    %3457 = vmatpush2.msra.mxu0 %v228
    %3458 = vmatprep.subr.mxu0 %v221
    %3459 = vmatpush2.msra.mxu0 %v220
    %3460 = vmatprep.subr.mxu0 %v213
    %3461 = vmatpush2.msra.mxu0 %v212
    %3462 = vmatprep.subr.mxu0 %v205
    %3463 = vmatpush2.msra.mxu0 %v204
    %3464 = vmatprep.subr.mxu0 %v197
    %3465 = vmatpush2.msra.mxu0 %v196
    %3466 = vmatprep.mubr.f32.mxu0 %v3156
    %3467 = vmatmul.mubr.f32.gmra.mxu0 %v3188
    %v3468 = vpop.f32.mrf.mxu0
    %v3469 = vadd.f32 0.0, %v3468
    %v3470 = vpop.f32.mrf.mxu0
    %v3471 = vadd.f32 0.0, %v3470
    %3472 = vdwg.mxu0
    %v3473 = vadd.f32 %v3398, %v380
    %v3474 = vadd.f32 %v3400, %v384
    %v3475 = vadd.f32 %v3469, %v388
    %v3476 = vadd.f32 %v3471, %v392
    %v3477 = vxor.u32 %v3473, 2147483648
    %v3478 = vxor.u32 %v3474, 2147483648
    %v3479 = vxor.u32 %v3475, 2147483648
    %v3480 = vmul.f32 %v3477, 1.442695
    %v3481 = vpow.pop %v3480
    %v3482 = vmul.f32 %v3478, 1.442695
    %v3483 = vpow.pop %v3482
    %v3484 = vmul.f32 %v3479, 1.442695
    %v3485 = vpow.pop %v3484
    %v3486 = vadd.f32 %v3481, 1.0
    %v3487 = vadd.f32 %v3483, 1.0
    %v3488 = vadd.f32 %v3485, 1.0
    %v3489 = vrcp.pop %v3486
    %v3490 = vmul.f32 1.0, %v3489
    %v3491 = vrcp.pop %v3487
    %v3492 = vmul.f32 1.0, %v3491
    %v3493 = vrcp.pop %v3488
    %v3494 = vmul.f32 1.0, %v3493
    %v3495 = vtanh.pop %v3476
    %v3496 = vmul.f32 %v3492, %v3154
    %v3497 = vmul.f32 %v3490, %v3495
    %v3498 = vadd.f32 %v3496, %v3497
    %v3499 = vtanh.pop %v3498
    %v3500 = vmul.f32 %v3494, %v3499
    %v3501 = vld [vmem:[#allocation2 + $0x100] sm:$0xff]
    %v3502 = vld [vmem:[#allocation2 + $0x108] sm:$0xff]
    %v3503 = vld [vmem:[#allocation2 + $0x110] sm:$0xff]
    %v3504 = vld [vmem:[#allocation2 + $0x118] sm:$0xff]
    %v3505 = vadd.f32 %v3501, %v3256
    %v3506 = vadd.f32 %v3502, %v3258
    %v3507 = vadd.f32 %v3503, %v3327
    %v3508 = vadd.f32 %v3504, %v3329
    %v3509 = vxor.u32 %v3505, 2147483648
    %v3510 = vxor.u32 %v3506, 2147483648
    %v3511 = vxor.u32 %v3507, 2147483648
    %v3512 = vmul.f32 %v3509, 1.442695
    %v3513 = vpow.pop %v3512
    %v3514 = vmul.f32 %v3510, 1.442695
    %v3515 = vpow.pop %v3514
    %v3516 = vmul.f32 %v3511, 1.442695
    %v3517 = vpow.pop %v3516
    %v3518 = vadd.f32 %v3513, 1.0
    %v3519 = vadd.f32 %v3515, 1.0
    %v3520 = vadd.f32 %v3517, 1.0
    %v3521 = vrcp.pop %v3518
    %v3522 = vmul.f32 1.0, %v3521
    %v3523 = vrcp.pop %v3519
    %v3524 = vmul.f32 1.0, %v3523
    %v3525 = vrcp.pop %v3520
    %v3526 = vmul.f32 1.0, %v3525
    %v3527 = vtanh.pop %v3508
    %v3528 = vmul.f32 %v3524, %v3186
    %v3529 = vmul.f32 %v3522, %v3527
    %v3530 = vadd.f32 %v3528, %v3529
    %v3531 = vtanh.pop %v3530
    %v3532 = vmul.f32 %v3526, %v3531
    %3533 = vmatprep.subr.mxu0 %v183
    %3534 = vmatpush1.msra.mxu0 %v182
    %3535 = vmatprep.subr.mxu0 %v175
    %3536 = vmatpush1.msra.mxu0 %v174
    %3537 = vmatprep.subr.mxu0 %v167
    %3538 = vmatpush1.msra.mxu0 %v166
    %3539 = vmatprep.subr.mxu0 %v159
    %3540 = vmatpush1.msra.mxu0 %v158
    %3541 = vmatprep.subr.mxu0 %v151
    %3542 = vmatpush1.msra.mxu0 %v150
    %3543 = vmatprep.subr.mxu0 %v143
    %3544 = vmatpush1.msra.mxu0 %v142
    %3545 = vmatprep.subr.mxu0 %v135
    %3546 = vmatpush1.msra.mxu0 %v134
    %3547 = vmatprep.subr.mxu0 %v127
    %3548 = vmatpush1.msra.mxu0 %v126
    %3549 = vmatprep.subr.mxu0 %v119
    %3550 = vmatpush1.msra.mxu0 %v118
    %3551 = vmatprep.subr.mxu0 %v111
    %3552 = vmatpush1.msra.mxu0 %v110
    %3553 = vmatprep.subr.mxu0 %v103
    %3554 = vmatpush1.msra.mxu0 %v102
    %3555 = vmatprep.subr.mxu0 %v95
    %3556 = vmatpush1.msra.mxu0 %v94
    %3557 = vmatprep.subr.mxu0 %v87
    %3558 = vmatpush1.msra.mxu0 %v86
    %3559 = vmatprep.subr.mxu0 %v79
    %3560 = vmatpush1.msra.mxu0 %v78
    %3561 = vmatprep.subr.mxu0 %v71
    %3562 = vmatpush1.msra.mxu0 %v70
    %3563 = vmatprep.subr.mxu0 %v63
    %3564 = vmatpush1.msra.mxu0 %v62
    %3565 = vmatprep.subr.mxu0 %v311
    %3566 = vmatpush2.msra.mxu0 %v310
    %3567 = vmatprep.subr.mxu0 %v303
    %3568 = vmatpush2.msra.mxu0 %v302
    %3569 = vmatprep.subr.mxu0 %v295
    %3570 = vmatpush2.msra.mxu0 %v294
    %3571 = vmatprep.subr.mxu0 %v287
    %3572 = vmatpush2.msra.mxu0 %v286
    %3573 = vmatprep.subr.mxu0 %v279
    %3574 = vmatpush2.msra.mxu0 %v278
    %3575 = vmatprep.subr.mxu0 %v271
    %3576 = vmatpush2.msra.mxu0 %v270
    %3577 = vmatprep.subr.mxu0 %v263
    %3578 = vmatpush2.msra.mxu0 %v262
    %3579 = vmatprep.subr.mxu0 %v255
    %3580 = vmatpush2.msra.mxu0 %v254
    %3581 = vmatprep.subr.mxu0 %v247
    %3582 = vmatpush2.msra.mxu0 %v246
    %3583 = vmatprep.subr.mxu0 %v239
    %3584 = vmatpush2.msra.mxu0 %v238
    %3585 = vmatprep.subr.mxu0 %v231
    %3586 = vmatpush2.msra.mxu0 %v230
    %3587 = vmatprep.subr.mxu0 %v223
    %3588 = vmatpush2.msra.mxu0 %v222
    %3589 = vmatprep.subr.mxu0 %v215
    %3590 = vmatpush2.msra.mxu0 %v214
    %3591 = vmatprep.subr.mxu0 %v207
    %3592 = vmatpush2.msra.mxu0 %v206
    %3593 = vmatprep.subr.mxu0 %v199
    %3594 = vmatpush2.msra.mxu0 %v198
    %3595 = vmatprep.subr.mxu0 %v191
    %3596 = vmatpush2.msra.mxu0 %v190
    %3597 = vmatprep.mubr.f32.mxu0 %v3500
    %3598 = vmatmul.mubr.f32.gmra.mxu0 %v3532
    %v3599 = vpop.f32.mrf.mxu0
    %v3600 = vadd.f32 0.0, %v3599
    %v3601 = vpop.f32.mrf.mxu0
    %v3602 = vadd.f32 0.0, %v3601
    %3603 = vdwg.mxu0
    %3604 = vmatprep.subr.mxu0 %v185
    %3605 = vmatpush1.msra.mxu0 %v184
    %3606 = vmatprep.subr.mxu0 %v177
    %3607 = vmatpush1.msra.mxu0 %v176
    %3608 = vmatprep.subr.mxu0 %v169
    %3609 = vmatpush1.msra.mxu0 %v168
    %3610 = vmatprep.subr.mxu0 %v161
    %3611 = vmatpush1.msra.mxu0 %v160
    %3612 = vmatprep.subr.mxu0 %v153
    %3613 = vmatpush1.msra.mxu0 %v152
    %3614 = vmatprep.subr.mxu0 %v145
    %3615 = vmatpush1.msra.mxu0 %v144
    %3616 = vmatprep.subr.mxu0 %v137
    %3617 = vmatpush1.msra.mxu0 %v136
    %3618 = vmatprep.subr.mxu0 %v129
    %3619 = vmatpush1.msra.mxu0 %v128
    %3620 = vmatprep.subr.mxu0 %v121
    %3621 = vmatpush1.msra.mxu0 %v120
    %3622 = vmatprep.subr.mxu0 %v113
    %3623 = vmatpush1.msra.mxu0 %v112
    %3624 = vmatprep.subr.mxu0 %v105
    %3625 = vmatpush1.msra.mxu0 %v104
    %3626 = vmatprep.subr.mxu0 %v97
    %3627 = vmatpush1.msra.mxu0 %v96
    %3628 = vmatprep.subr.mxu0 %v89
    %3629 = vmatpush1.msra.mxu0 %v88
    %3630 = vmatprep.subr.mxu0 %v81
    %3631 = vmatpush1.msra.mxu0 %v80
    %3632 = vmatprep.subr.mxu0 %v73
    %3633 = vmatpush1.msra.mxu0 %v72
    %3634 = vmatprep.subr.mxu0 %v65
    %3635 = vmatpush1.msra.mxu0 %v64
    %3636 = vmatprep.subr.mxu0 %v313
    %3637 = vmatpush2.msra.mxu0 %v312
    %3638 = vmatprep.subr.mxu0 %v305
    %3639 = vmatpush2.msra.mxu0 %v304
    %3640 = vmatprep.subr.mxu0 %v297
    %3641 = vmatpush2.msra.mxu0 %v296
    %3642 = vmatprep.subr.mxu0 %v289
    %3643 = vmatpush2.msra.mxu0 %v288
    %3644 = vmatprep.subr.mxu0 %v281
    %3645 = vmatpush2.msra.mxu0 %v280
    %3646 = vmatprep.subr.mxu0 %v273
    %3647 = vmatpush2.msra.mxu0 %v272
    %3648 = vmatprep.subr.mxu0 %v265
    %3649 = vmatpush2.msra.mxu0 %v264
    %3650 = vmatprep.subr.mxu0 %v257
    %3651 = vmatpush2.msra.mxu0 %v256
    %3652 = vmatprep.subr.mxu0 %v249
    %3653 = vmatpush2.msra.mxu0 %v248
    %3654 = vmatprep.subr.mxu0 %v241
    %3655 = vmatpush2.msra.mxu0 %v240
    %3656 = vmatprep.subr.mxu0 %v233
    %3657 = vmatpush2.msra.mxu0 %v232
    %3658 = vmatprep.subr.mxu0 %v225
    %3659 = vmatpush2.msra.mxu0 %v224
    %3660 = vmatprep.subr.mxu0 %v217
    %3661 = vmatpush2.msra.mxu0 %v216
    %3662 = vmatprep.subr.mxu0 %v209
    %3663 = vmatpush2.msra.mxu0 %v208
    %3664 = vmatprep.subr.mxu0 %v201
    %3665 = vmatpush2.msra.mxu0 %v200
    %3666 = vmatprep.subr.mxu0 %v193
    %3667 = vmatpush2.msra.mxu0 %v192
    %3668 = vmatprep.mubr.f32.mxu0 %v3500
    %3669 = vmatmul.mubr.f32.gmra.mxu0 %v3532
    %v3670 = vpop.f32.mrf.mxu0
    %v3671 = vadd.f32 0.0, %v3670
    %v3672 = vpop.f32.mrf.mxu0
    %v3673 = vadd.f32 0.0, %v3672
    %3674 = vdwg.mxu0
    %3675 = vmatprep.subr.mxu0 %v187
    %3676 = vmatpush1.msra.mxu0 %v186
    %3677 = vmatprep.subr.mxu0 %v179
    %3678 = vmatpush1.msra.mxu0 %v178
    %3679 = vmatprep.subr.mxu0 %v171
    %3680 = vmatpush1.msra.mxu0 %v170
    %3681 = vmatprep.subr.mxu0 %v163
    %3682 = vmatpush1.msra.mxu0 %v162
    %3683 = vmatprep.subr.mxu0 %v155
    %3684 = vmatpush1.msra.mxu0 %v154
    %3685 = vmatprep.subr.mxu0 %v147
    %3686 = vmatpush1.msra.mxu0 %v146
    %3687 = vmatprep.subr.mxu0 %v139
    %3688 = vmatpush1.msra.mxu0 %v138
    %3689 = vmatprep.subr.mxu0 %v131
    %3690 = vmatpush1.msra.mxu0 %v130
    %3691 = vmatprep.subr.mxu0 %v123
    %3692 = vmatpush1.msra.mxu0 %v122
    %3693 = vmatprep.subr.mxu0 %v115
    %3694 = vmatpush1.msra.mxu0 %v114
    %3695 = vmatprep.subr.mxu0 %v107
    %3696 = vmatpush1.msra.mxu0 %v106
    %3697 = vmatprep.subr.mxu0 %v99
    %3698 = vmatpush1.msra.mxu0 %v98
    %3699 = vmatprep.subr.mxu0 %v91
    %3700 = vmatpush1.msra.mxu0 %v90
    %3701 = vmatprep.subr.mxu0 %v83
    %3702 = vmatpush1.msra.mxu0 %v82
    %3703 = vmatprep.subr.mxu0 %v75
    %3704 = vmatpush1.msra.mxu0 %v74
    %3705 = vmatprep.subr.mxu0 %v67
    %3706 = vmatpush1.msra.mxu0 %v66
    %3707 = vmatprep.subr.mxu0 %v315
    %3708 = vmatpush2.msra.mxu0 %v314
    %3709 = vmatprep.subr.mxu0 %v307
    %3710 = vmatpush2.msra.mxu0 %v306
    %3711 = vmatprep.subr.mxu0 %v299
    %3712 = vmatpush2.msra.mxu0 %v298
    %3713 = vmatprep.subr.mxu0 %v291
    %3714 = vmatpush2.msra.mxu0 %v290
    %3715 = vmatprep.subr.mxu0 %v283
    %3716 = vmatpush2.msra.mxu0 %v282
    %3717 = vmatprep.subr.mxu0 %v275
    %3718 = vmatpush2.msra.mxu0 %v274
    %3719 = vmatprep.subr.mxu0 %v267
    %3720 = vmatpush2.msra.mxu0 %v266
    %3721 = vmatprep.subr.mxu0 %v259
    %3722 = vmatpush2.msra.mxu0 %v258
    %3723 = vmatprep.subr.mxu0 %v251
    %3724 = vmatpush2.msra.mxu0 %v250
    %3725 = vmatprep.subr.mxu0 %v243
    %3726 = vmatpush2.msra.mxu0 %v242
    %3727 = vmatprep.subr.mxu0 %v235
    %3728 = vmatpush2.msra.mxu0 %v234
    %3729 = vmatprep.subr.mxu0 %v227
    %3730 = vmatpush2.msra.mxu0 %v226
    %3731 = vmatprep.subr.mxu0 %v219
    %3732 = vmatpush2.msra.mxu0 %v218
    %3733 = vmatprep.subr.mxu0 %v211
    %3734 = vmatpush2.msra.mxu0 %v210
    %3735 = vmatprep.subr.mxu0 %v203
    %3736 = vmatpush2.msra.mxu0 %v202
    %3737 = vmatprep.subr.mxu0 %v195
    %3738 = vmatpush2.msra.mxu0 %v194
    %3739 = vmatprep.mubr.f32.mxu0 %v3500
    %3740 = vmatmul.mubr.f32.gmra.mxu0 %v3532
    %v3741 = vpop.f32.mrf.mxu0
    %v3742 = vadd.f32 0.0, %v3741
    %v3743 = vpop.f32.mrf.mxu0
    %v3744 = vadd.f32 0.0, %v3743
    %3745 = vdwg.mxu0
    %3746 = vmatprep.subr.mxu0 %v189
    %3747 = vmatpush1.msra.mxu0 %v188
    %3748 = vmatprep.subr.mxu0 %v181
    %3749 = vmatpush1.msra.mxu0 %v180
    %3750 = vmatprep.subr.mxu0 %v173
    %3751 = vmatpush1.msra.mxu0 %v172
    %3752 = vmatprep.subr.mxu0 %v165
    %3753 = vmatpush1.msra.mxu0 %v164
    %3754 = vmatprep.subr.mxu0 %v157
    %3755 = vmatpush1.msra.mxu0 %v156
    %3756 = vmatprep.subr.mxu0 %v149
    %3757 = vmatpush1.msra.mxu0 %v148
    %3758 = vmatprep.subr.mxu0 %v141
    %3759 = vmatpush1.msra.mxu0 %v140
    %3760 = vmatprep.subr.mxu0 %v133
    %3761 = vmatpush1.msra.mxu0 %v132
    %3762 = vmatprep.subr.mxu0 %v125
    %3763 = vmatpush1.msra.mxu0 %v124
    %3764 = vmatprep.subr.mxu0 %v117
    %3765 = vmatpush1.msra.mxu0 %v116
    %3766 = vmatprep.subr.mxu0 %v109
    %3767 = vmatpush1.msra.mxu0 %v108
    %3768 = vmatprep.subr.mxu0 %v101
    %3769 = vmatpush1.msra.mxu0 %v100
    %3770 = vmatprep.subr.mxu0 %v93
    %3771 = vmatpush1.msra.mxu0 %v92
    %3772 = vmatprep.subr.mxu0 %v85
    %3773 = vmatpush1.msra.mxu0 %v84
    %3774 = vmatprep.subr.mxu0 %v77
    %3775 = vmatpush1.msra.mxu0 %v76
    %3776 = vmatprep.subr.mxu0 %v69
    %3777 = vmatpush1.msra.mxu0 %v68
    %3778 = vmatprep.subr.mxu0 %v317
    %3779 = vmatpush2.msra.mxu0 %v316
    %3780 = vmatprep.subr.mxu0 %v309
    %3781 = vmatpush2.msra.mxu0 %v308
    %3782 = vmatprep.subr.mxu0 %v301
    %3783 = vmatpush2.msra.mxu0 %v300
    %3784 = vmatprep.subr.mxu0 %v293
    %3785 = vmatpush2.msra.mxu0 %v292
    %3786 = vmatprep.subr.mxu0 %v285
    %3787 = vmatpush2.msra.mxu0 %v284
    %3788 = vmatprep.subr.mxu0 %v277
    %3789 = vmatpush2.msra.mxu0 %v276
    %3790 = vmatprep.subr.mxu0 %v269
    %3791 = vmatpush2.msra.mxu0 %v268
    %3792 = vmatprep.subr.mxu0 %v261
    %3793 = vmatpush2.msra.mxu0 %v260
    %3794 = vmatprep.subr.mxu0 %v253
    %3795 = vmatpush2.msra.mxu0 %v252
    %3796 = vmatprep.subr.mxu0 %v245
    %3797 = vmatpush2.msra.mxu0 %v244
    %3798 = vmatprep.subr.mxu0 %v237
    %3799 = vmatpush2.msra.mxu0 %v236
    %3800 = vmatprep.subr.mxu0 %v229
    %3801 = vmatpush2.msra.mxu0 %v228
    %3802 = vmatprep.subr.mxu0 %v221
    %3803 = vmatpush2.msra.mxu0 %v220
    %3804 = vmatprep.subr.mxu0 %v213
    %3805 = vmatpush2.msra.mxu0 %v212
    %3806 = vmatprep.subr.mxu0 %v205
    %3807 = vmatpush2.msra.mxu0 %v204
    %3808 = vmatprep.subr.mxu0 %v197
    %3809 = vmatpush2.msra.mxu0 %v196
    %3810 = vmatprep.mubr.f32.mxu0 %v3500
    %3811 = vmatmul.mubr.f32.gmra.mxu0 %v3532
    %v3812 = vpop.f32.mrf.mxu0
    %v3813 = vadd.f32 0.0, %v3812
    %v3814 = vpop.f32.mrf.mxu0
    %v3815 = vadd.f32 0.0, %v3814
    %3816 = vdwg.mxu0
    %v3817 = vadd.f32 %v3742, %v380
    %v3818 = vadd.f32 %v3744, %v384
    %v3819 = vadd.f32 %v3813, %v388
    %v3820 = vadd.f32 %v3815, %v392
    %v3821 = vxor.u32 %v3817, 2147483648
    %v3822 = vxor.u32 %v3818, 2147483648
    %v3823 = vxor.u32 %v3819, 2147483648
    %v3824 = vmul.f32 %v3821, 1.442695
    %v3825 = vpow.pop %v3824
    %v3826 = vmul.f32 %v3822, 1.442695
    %v3827 = vpow.pop %v3826
    %v3828 = vmul.f32 %v3823, 1.442695
    %v3829 = vpow.pop %v3828
    %v3830 = vadd.f32 %v3825, 1.0
    %v3831 = vadd.f32 %v3827, 1.0
    %v3832 = vadd.f32 %v3829, 1.0
    %v3833 = vrcp.pop %v3830
    %v3834 = vmul.f32 1.0, %v3833
    %v3835 = vrcp.pop %v3831
    %v3836 = vmul.f32 1.0, %v3835
    %v3837 = vrcp.pop %v3832
    %v3838 = vmul.f32 1.0, %v3837
    %v3839 = vtanh.pop %v3820
    %v3840 = vmul.f32 %v3836, %v3498
    %v3841 = vmul.f32 %v3834, %v3839
    %v3842 = vadd.f32 %v3840, %v3841
    %v3843 = vtanh.pop %v3842
    %v3844 = vmul.f32 %v3838, %v3843
    %v3845 = vld [vmem:[#allocation2 + $0x120] sm:$0xff]
    %v3846 = vld [vmem:[#allocation2 + $0x128] sm:$0xff]
    %v3847 = vld [vmem:[#allocation2 + $0x130] sm:$0xff]
    %v3848 = vld [vmem:[#allocation2 + $0x138] sm:$0xff]
    %v3849 = vadd.f32 %v3845, %v3600
    %v3850 = vadd.f32 %v3846, %v3602
    %v3851 = vadd.f32 %v3847, %v3671
    %v3852 = vadd.f32 %v3848, %v3673
    %v3853 = vxor.u32 %v3849, 2147483648
    %v3854 = vxor.u32 %v3850, 2147483648
    %v3855 = vxor.u32 %v3851, 2147483648
    %v3856 = vmul.f32 %v3853, 1.442695
    %v3857 = vpow.pop %v3856
    %v3858 = vmul.f32 %v3854, 1.442695
    %v3859 = vpow.pop %v3858
    %v3860 = vmul.f32 %v3855, 1.442695
    %v3861 = vpow.pop %v3860
    %v3862 = vadd.f32 %v3857, 1.0
    %v3863 = vadd.f32 %v3859, 1.0
    %v3864 = vadd.f32 %v3861, 1.0
    %v3865 = vrcp.pop %v3862
    %v3866 = vmul.f32 1.0, %v3865
    %v3867 = vrcp.pop %v3863
    %v3868 = vmul.f32 1.0, %v3867
    %v3869 = vrcp.pop %v3864
    %v3870 = vmul.f32 1.0, %v3869
    %v3871 = vtanh.pop %v3852
    %v3872 = vmul.f32 %v3868, %v3530
    %v3873 = vmul.f32 %v3866, %v3871
    %v3874 = vadd.f32 %v3872, %v3873
    %v3875 = vtanh.pop %v3874
    %v3876 = vmul.f32 %v3870, %v3875
    %3877 = vmatprep.subr.mxu0 %v187
    %3878 = vmatpush1.msra.mxu0 %v186
    %3879 = vmatprep.subr.mxu0 %v179
    %3880 = vmatpush1.msra.mxu0 %v178
    %3881 = vmatprep.subr.mxu0 %v171
    %3882 = vmatpush1.msra.mxu0 %v170
    %3883 = vmatprep.subr.mxu0 %v163
    %3884 = vmatpush1.msra.mxu0 %v162
    %3885 = vmatprep.subr.mxu0 %v155
    %3886 = vmatpush1.msra.mxu0 %v154
    %3887 = vmatprep.subr.mxu0 %v147
    %3888 = vmatpush1.msra.mxu0 %v146
    %3889 = vmatprep.subr.mxu0 %v139
    %3890 = vmatpush1.msra.mxu0 %v138
    %3891 = vmatprep.subr.mxu0 %v131
    %3892 = vmatpush1.msra.mxu0 %v130
    %3893 = vmatprep.subr.mxu0 %v123
    %3894 = vmatpush1.msra.mxu0 %v122
    %3895 = vmatprep.subr.mxu0 %v115
    %3896 = vmatpush1.msra.mxu0 %v114
    %3897 = vmatprep.subr.mxu0 %v107
    %3898 = vmatpush1.msra.mxu0 %v106
    %3899 = vmatprep.subr.mxu0 %v99
    %3900 = vmatpush1.msra.mxu0 %v98
    %3901 = vmatprep.subr.mxu0 %v91
    %3902 = vmatpush1.msra.mxu0 %v90
    %3903 = vmatprep.subr.mxu0 %v83
    %3904 = vmatpush1.msra.mxu0 %v82
    %3905 = vmatprep.subr.mxu0 %v75
    %3906 = vmatpush1.msra.mxu0 %v74
    %3907 = vmatprep.subr.mxu0 %v67
    %3908 = vmatpush1.msra.mxu0 %v66
    %3909 = vmatprep.subr.mxu0 %v315
    %3910 = vmatpush2.msra.mxu0 %v314
    %3911 = vmatprep.subr.mxu0 %v307
    %3912 = vmatpush2.msra.mxu0 %v306
    %3913 = vmatprep.subr.mxu0 %v299
    %3914 = vmatpush2.msra.mxu0 %v298
    %3915 = vmatprep.subr.mxu0 %v291
    %3916 = vmatpush2.msra.mxu0 %v290
    %3917 = vmatprep.subr.mxu0 %v283
    %3918 = vmatpush2.msra.mxu0 %v282
    %3919 = vmatprep.subr.mxu0 %v275
    %3920 = vmatpush2.msra.mxu0 %v274
    %3921 = vmatprep.subr.mxu0 %v267
    %3922 = vmatpush2.msra.mxu0 %v266
    %3923 = vmatprep.subr.mxu0 %v259
    %3924 = vmatpush2.msra.mxu0 %v258
    %3925 = vmatprep.subr.mxu0 %v251
    %3926 = vmatpush2.msra.mxu0 %v250
    %3927 = vmatprep.subr.mxu0 %v243
    %3928 = vmatpush2.msra.mxu0 %v242
    %3929 = vmatprep.subr.mxu0 %v235
    %3930 = vmatpush2.msra.mxu0 %v234
    %3931 = vmatprep.subr.mxu0 %v227
    %3932 = vmatpush2.msra.mxu0 %v226
    %3933 = vmatprep.subr.mxu0 %v219
    %3934 = vmatpush2.msra.mxu0 %v218
    %3935 = vmatprep.subr.mxu0 %v211
    %3936 = vmatpush2.msra.mxu0 %v210
    %3937 = vmatprep.subr.mxu0 %v203
    %3938 = vmatpush2.msra.mxu0 %v202
    %3939 = vmatprep.subr.mxu0 %v195
    %3940 = vmatpush2.msra.mxu0 %v194
    %3941 = vmatprep.mubr.f32.mxu0 %v3844
    %3942 = vmatmul.mubr.f32.gmra.mxu0 %v3876
    %v3943 = vpop.f32.mrf.mxu0
    %v3944 = vadd.f32 0.0, %v3943
    %v3945 = vpop.f32.mrf.mxu0
    %v3946 = vadd.f32 0.0, %v3945
    %3947 = vdwg.mxu0
    %3948 = vmatprep.subr.mxu0 %v189
    %3949 = vmatpush1.msra.mxu0 %v188
    %3950 = vmatprep.subr.mxu0 %v181
    %3951 = vmatpush1.msra.mxu0 %v180
    %3952 = vmatprep.subr.mxu0 %v173
    %3953 = vmatpush1.msra.mxu0 %v172
    %3954 = vmatprep.subr.mxu0 %v165
    %3955 = vmatpush1.msra.mxu0 %v164
    %3956 = vmatprep.subr.mxu0 %v157
    %3957 = vmatpush1.msra.mxu0 %v156
    %3958 = vmatprep.subr.mxu0 %v149
    %3959 = vmatpush1.msra.mxu0 %v148
    %3960 = vmatprep.subr.mxu0 %v141
    %3961 = vmatpush1.msra.mxu0 %v140
    %3962 = vmatprep.subr.mxu0 %v133
    %3963 = vmatpush1.msra.mxu0 %v132
    %3964 = vmatprep.subr.mxu0 %v125
    %3965 = vmatpush1.msra.mxu0 %v124
    %3966 = vmatprep.subr.mxu0 %v117
    %3967 = vmatpush1.msra.mxu0 %v116
    %3968 = vmatprep.subr.mxu0 %v109
    %3969 = vmatpush1.msra.mxu0 %v108
    %3970 = vmatprep.subr.mxu0 %v101
    %3971 = vmatpush1.msra.mxu0 %v100
    %3972 = vmatprep.subr.mxu0 %v93
    %3973 = vmatpush1.msra.mxu0 %v92
    %3974 = vmatprep.subr.mxu0 %v85
    %3975 = vmatpush1.msra.mxu0 %v84
    %3976 = vmatprep.subr.mxu0 %v77
    %3977 = vmatpush1.msra.mxu0 %v76
    %3978 = vmatprep.subr.mxu0 %v69
    %3979 = vmatpush1.msra.mxu0 %v68
    %3980 = vmatprep.subr.mxu0 %v317
    %3981 = vmatpush2.msra.mxu0 %v316
    %3982 = vmatprep.subr.mxu0 %v309
    %3983 = vmatpush2.msra.mxu0 %v308
    %3984 = vmatprep.subr.mxu0 %v301
    %3985 = vmatpush2.msra.mxu0 %v300
    %3986 = vmatprep.subr.mxu0 %v293
    %3987 = vmatpush2.msra.mxu0 %v292
    %3988 = vmatprep.subr.mxu0 %v285
    %3989 = vmatpush2.msra.mxu0 %v284
    %3990 = vmatprep.subr.mxu0 %v277
    %3991 = vmatpush2.msra.mxu0 %v276
    %3992 = vmatprep.subr.mxu0 %v269
    %3993 = vmatpush2.msra.mxu0 %v268
    %3994 = vmatprep.subr.mxu0 %v261
    %3995 = vmatpush2.msra.mxu0 %v260
    %3996 = vmatprep.subr.mxu0 %v253
    %3997 = vmatpush2.msra.mxu0 %v252
    %3998 = vmatprep.subr.mxu0 %v245
    %3999 = vmatpush2.msra.mxu0 %v244
    %4000 = vmatprep.subr.mxu0 %v237
    %4001 = vmatpush2.msra.mxu0 %v236
    %4002 = vmatprep.subr.mxu0 %v229
    %4003 = vmatpush2.msra.mxu0 %v228
    %4004 = vmatprep.subr.mxu0 %v221
    %4005 = vmatpush2.msra.mxu0 %v220
    %4006 = vmatprep.subr.mxu0 %v213
    %4007 = vmatpush2.msra.mxu0 %v212
    %4008 = vmatprep.subr.mxu0 %v205
    %4009 = vmatpush2.msra.mxu0 %v204
    %4010 = vmatprep.subr.mxu0 %v197
    %4011 = vmatpush2.msra.mxu0 %v196
    %4012 = vmatprep.mubr.f32.mxu0 %v3844
    %4013 = vmatmul.mubr.f32.gmra.mxu0 %v3876
    %v4014 = vpop.f32.mrf.mxu0
    %v4015 = vadd.f32 0.0, %v4014
    %v4016 = vpop.f32.mrf.mxu0
    %v4017 = vadd.f32 0.0, %v4016
    %4018 = vdwg.mxu0
    %v4019 = vadd.f32 %v3944, %v380
    %v4020 = vadd.f32 %v3946, %v384
    %v4021 = vadd.f32 %v4015, %v388
    %v4022 = vadd.f32 %v4017, %v392
    %v4023 = vxor.u32 %v4019, 2147483648
    %v4024 = vxor.u32 %v4020, 2147483648
    %v4025 = vxor.u32 %v4021, 2147483648
    %v4026 = vmul.f32 %v4023, 1.442695
    %v4027 = vpow.pop %v4026
    %v4028 = vmul.f32 %v4024, 1.442695
    %v4029 = vpow.pop %v4028
    %v4030 = vmul.f32 %v4025, 1.442695
    %v4031 = vpow.pop %v4030
    %v4032 = vadd.f32 %v4027, 1.0
    %v4033 = vadd.f32 %v4029, 1.0
    %v4034 = vadd.f32 %v4031, 1.0
    %v4035 = vrcp.pop %v4032
    %v4036 = vmul.f32 1.0, %v4035
    %v4037 = vrcp.pop %v4033
    %v4038 = vmul.f32 1.0, %v4037
    %v4039 = vrcp.pop %v4034
    %v4040 = vmul.f32 1.0, %v4039
    %v4041 = vtanh.pop %v4022
    %v4042 = vmul.f32 %v4038, %v3842
    %v4043 = vmul.f32 %v4036, %v4041
    %v4044 = vadd.f32 %v4042, %v4043
    %v4045 = vtanh.pop %v4044
    %v4046 = vmul.f32 %v4040, %v4045
    %4047 = vmatprep.subr.mxu0 0.0
    %4048 = vmatpush1.msra.mxu0 %v333
    %4049 = vmatprep.subr.mxu0 0.0
    %4050 = vmatpush1.msra.mxu0 %v332
    %4051 = vmatprep.subr.mxu0 0.0
    %4052 = vmatpush1.msra.mxu0 %v331
    %4053 = vmatprep.subr.mxu0 0.0
    %4054 = vmatpush1.msra.mxu0 %v330
    %4055 = vmatprep.subr.mxu0 0.0
    %4056 = vmatpush1.msra.mxu0 %v329
    %4057 = vmatprep.subr.mxu0 0.0
    %4058 = vmatpush1.msra.mxu0 %v328
    %4059 = vmatprep.subr.mxu0 0.0
    %4060 = vmatpush1.msra.mxu0 %v327
    %4061 = vmatprep.subr.mxu0 0.0
    %4062 = vmatpush1.msra.mxu0 %v326
    %4063 = vmatprep.subr.mxu0 0.0
    %4064 = vmatpush1.msra.mxu0 %v325
    %4065 = vmatprep.subr.mxu0 0.0
    %4066 = vmatpush1.msra.mxu0 %v324
    %4067 = vmatprep.subr.mxu0 0.0
    %4068 = vmatpush1.msra.mxu0 %v323
    %4069 = vmatprep.subr.mxu0 0.0
    %4070 = vmatpush1.msra.mxu0 %v322
    %4071 = vmatprep.subr.mxu0 0.0
    %4072 = vmatpush1.msra.mxu0 %v321
    %4073 = vmatprep.subr.mxu0 0.0
    %4074 = vmatpush1.msra.mxu0 %v320
    %4075 = vmatprep.subr.mxu0 0.0
    %4076 = vmatpush1.msra.mxu0 %v319
    %4077 = vmatprep.subr.mxu0 0.0
    %4078 = vmatpush1.msra.mxu0 %v318
    %4079 = vmatprep.subr.mxu0 0.0
    %4080 = vmatpush2.msra.mxu0 0.0
    %4081 = vmatprep.subr.mxu0 0.0
    %4082 = vmatpush2.msra.mxu0 0.0
    %4083 = vmatprep.subr.mxu0 0.0
    %4084 = vmatpush2.msra.mxu0 0.0
    %4085 = vmatprep.subr.mxu0 0.0
    %4086 = vmatpush2.msra.mxu0 0.0
    %4087 = vmatprep.subr.mxu0 0.0
    %4088 = vmatpush2.msra.mxu0 0.0
    %4089 = vmatprep.subr.mxu0 0.0
    %4090 = vmatpush2.msra.mxu0 0.0
    %4091 = vmatprep.subr.mxu0 0.0
    %4092 = vmatpush2.msra.mxu0 0.0
    %4093 = vmatprep.subr.mxu0 0.0
    %4094 = vmatpush2.msra.mxu0 0.0
    %4095 = vmatprep.subr.mxu0 0.0
    %4096 = vmatpush2.msra.mxu0 0.0
    %4097 = vmatprep.subr.mxu0 0.0
    %4098 = vmatpush2.msra.mxu0 0.0
    %4099 = vmatprep.subr.mxu0 0.0
    %4100 = vmatpush2.msra.mxu0 0.0
    %4101 = vmatprep.subr.mxu0 0.0
    %4102 = vmatpush2.msra.mxu0 0.0
    %4103 = vmatprep.subr.mxu0 0.0
    %4104 = vmatpush2.msra.mxu0 0.0
    %4105 = vmatprep.subr.mxu0 0.0
    %4106 = vmatpush2.msra.mxu0 0.0
    %4107 = vmatprep.subr.mxu0 0.0
    %4108 = vmatpush2.msra.mxu0 0.0
    %4109 = vmatprep.subr.mxu0 0.0
    %4110 = vmatpush2.msra.mxu0 0.0
    %4111 = vmatprep.mubr.f32.mxu0 0.0
    %4112 = vmatmul.mubr.f32.gmra.mxu0 %v4046
    %v4113 = vpop.f32.mrf.mxu0
    %v4114 = vadd.f32 %v369, %v4113
    %v4115 = vpop.f32.mrf.mxu0
    %4116 = vdwg.mxu0
    %v4117 = vrot.slane %v4114, 4
    %v4118 = vadd.f32 %v4114, %v4117
    %v4119 = vrot.slane %v4118, 2
    %v4120 = vadd.f32 %v4118, %v4119
    %v4121 = vrot.slane %v4120, 1
    %v4122 = vadd.f32 %v4120, %v4121
    %v4123 = vrcp.pop 8.0
    %v4124 = vmul.f32 %v4122, %v4123
    %v4125 = vsub.f32 %v4114, %v4124
    %v4126 = vmul.f32 %v4125, %v4125
    %v4127 = vrot.slane %v4126, 4
    %v4128 = vadd.f32 %v4126, %v4127
    %v4129 = vrot.slane %v4128, 2
    %v4130 = vadd.f32 %v4128, %v4129
    %v4131 = vrot.slane %v4130, 1
    %v4132 = vadd.f32 %v4130, %v4131
    %v4133 = vmul.f32 %v4132, %v4123
    %v4134 = vadd.f32 %v4133, 1e-05
    %v4135 = vrsqrt.pop %v4134
    %v4136 = vmul.f32 %v4125, %v4135
    %v4137 = vmul.f32 %v4136, %v370
    %v4138 = vadd.f32 %v4137, %v371
    %v4139 = vmax.f32 %v4138, 0.0
    %4140 = vmatprep.subr.mxu0 0.0
    %4141 = vmatpush1.msra.mxu0 %v349
    %4142 = vmatprep.subr.mxu0 0.0
    %4143 = vmatpush1.msra.mxu0 %v348
    %4144 = vmatprep.subr.mxu0 0.0
    %4145 = vmatpush1.msra.mxu0 %v347
    %4146 = vmatprep.subr.mxu0 0.0
    %4147 = vmatpush1.msra.mxu0 %v346
    %4148 = vmatprep.subr.mxu0 0.0
    %4149 = vmatpush1.msra.mxu0 %v345
    %4150 = vmatprep.subr.mxu0 0.0
    %4151 = vmatpush1.msra.mxu0 %v344
    %4152 = vmatprep.subr.mxu0 0.0
    %4153 = vmatpush1.msra.mxu0 %v343
    %4154 = vmatprep.subr.mxu0 0.0
    %4155 = vmatpush1.msra.mxu0 %v342
    %4156 = vmatprep.subr.mxu0 0.0
    %4157 = vmatpush1.msra.mxu0 %v341
    %4158 = vmatprep.subr.mxu0 0.0
    %4159 = vmatpush1.msra.mxu0 %v340
    %4160 = vmatprep.subr.mxu0 0.0
    %4161 = vmatpush1.msra.mxu0 %v339
    %4162 = vmatprep.subr.mxu0 0.0
    %4163 = vmatpush1.msra.mxu0 %v338
    %4164 = vmatprep.subr.mxu0 0.0
    %4165 = vmatpush1.msra.mxu0 %v337
    %4166 = vmatprep.subr.mxu0 0.0
    %4167 = vmatpush1.msra.mxu0 %v336
    %4168 = vmatprep.subr.mxu0 0.0
    %4169 = vmatpush1.msra.mxu0 %v335
    %4170 = vmatprep.subr.mxu0 0.0
    %4171 = vmatpush1.msra.mxu0 %v334
    %4172 = vmatprep.subr.mxu0 0.0
    %4173 = vmatpush2.msra.mxu0 0.0
    %4174 = vmatprep.subr.mxu0 0.0
    %4175 = vmatpush2.msra.mxu0 0.0
    %4176 = vmatprep.subr.mxu0 0.0
    %4177 = vmatpush2.msra.mxu0 0.0
    %4178 = vmatprep.subr.mxu0 0.0
    %4179 = vmatpush2.msra.mxu0 0.0
    %4180 = vmatprep.subr.mxu0 0.0
    %4181 = vmatpush2.msra.mxu0 0.0
    %4182 = vmatprep.subr.mxu0 0.0
    %4183 = vmatpush2.msra.mxu0 0.0
    %4184 = vmatprep.subr.mxu0 0.0
    %4185 = vmatpush2.msra.mxu0 0.0
    %4186 = vmatprep.subr.mxu0 0.0
    %4187 = vmatpush2.msra.mxu0 0.0
    %4188 = vmatprep.subr.mxu0 0.0
    %4189 = vmatpush2.msra.mxu0 0.0
    %4190 = vmatprep.subr.mxu0 0.0
    %4191 = vmatpush2.msra.mxu0 0.0
    %4192 = vmatprep.subr.mxu0 0.0
    %4193 = vmatpush2.msra.mxu0 0.0
    %4194 = vmatprep.subr.mxu0 0.0
    %4195 = vmatpush2.msra.mxu0 0.0
    %4196 = vmatprep.subr.mxu0 0.0
    %4197 = vmatpush2.msra.mxu0 0.0
    %4198 = vmatprep.subr.mxu0 0.0
    %4199 = vmatpush2.msra.mxu0 0.0
    %4200 = vmatprep.subr.mxu0 0.0
    %4201 = vmatpush2.msra.mxu0 0.0
    %4202 = vmatprep.subr.mxu0 0.0
    %4203 = vmatpush2.msra.mxu0 0.0
    %4204 = vmatprep.mubr.f32.mxu0 0.0
    %4205 = vmatmul.mubr.f32.gmra.mxu0 %v4139
    %v4206 = vpop.f32.mrf.mxu0
    %v4207 = vadd.f32 %v372, %v4206
    %v4208 = vpop.f32.mrf.mxu0
    %4209 = vdwg.mxu0
    %v4210 = vrot.slane %v4207, 4
    %v4211 = vadd.f32 %v4207, %v4210
    %v4212 = vrot.slane %v4211, 2
    %v4213 = vadd.f32 %v4211, %v4212
    %v4214 = vrot.slane %v4213, 1
    %v4215 = vadd.f32 %v4213, %v4214
    %v4216 = vmul.f32 %v4215, %v4123
    %v4217 = vsub.f32 %v4207, %v4216
    %v4218 = vmul.f32 %v4217, %v4217
    %v4219 = vrot.slane %v4218, 4
    %v4220 = vadd.f32 %v4218, %v4219
    %v4221 = vrot.slane %v4220, 2
    %v4222 = vadd.f32 %v4220, %v4221
    %v4223 = vrot.slane %v4222, 1
    %v4224 = vadd.f32 %v4222, %v4223
    %v4225 = vmul.f32 %v4224, %v4123
    %v4226 = vadd.f32 %v4225, 1e-05
    %v4227 = vrsqrt.pop %v4226
    %v4228 = vmul.f32 %v4217, %v4227
    %v4229 = vmul.f32 %v4228, %v373
    %v4230 = vadd.f32 %v4229, %v374
    %v4231 = vmax.f32 %v4230, 0.0
    %4232 = vmatprep.subr.mxu0 0.0
    %4233 = vmatpush1.msra.mxu0 %v365
    %4234 = vmatprep.subr.mxu0 0.0
    %4235 = vmatpush1.msra.mxu0 %v364
    %4236 = vmatprep.subr.mxu0 0.0
    %4237 = vmatpush1.msra.mxu0 %v363
    %4238 = vmatprep.subr.mxu0 0.0
    %4239 = vmatpush1.msra.mxu0 %v362
    %4240 = vmatprep.subr.mxu0 0.0
    %4241 = vmatpush1.msra.mxu0 %v361
    %4242 = vmatprep.subr.mxu0 0.0
    %4243 = vmatpush1.msra.mxu0 %v360
    %4244 = vmatprep.subr.mxu0 0.0
    %4245 = vmatpush1.msra.mxu0 %v359
    %4246 = vmatprep.subr.mxu0 0.0
    %4247 = vmatpush1.msra.mxu0 %v358
    %4248 = vmatprep.subr.mxu0 0.0
    %4249 = vmatpush1.msra.mxu0 %v357
    %4250 = vmatprep.subr.mxu0 0.0
    %4251 = vmatpush1.msra.mxu0 %v356
    %4252 = vmatprep.subr.mxu0 0.0
    %4253 = vmatpush1.msra.mxu0 %v355
    %4254 = vmatprep.subr.mxu0 0.0
    %4255 = vmatpush1.msra.mxu0 %v354
    %4256 = vmatprep.subr.mxu0 0.0
    %4257 = vmatpush1.msra.mxu0 %v353
    %4258 = vmatprep.subr.mxu0 0.0
    %4259 = vmatpush1.msra.mxu0 %v352
    %4260 = vmatprep.subr.mxu0 0.0
    %4261 = vmatpush1.msra.mxu0 %v351
    %4262 = vmatprep.subr.mxu0 0.0
    %4263 = vmatpush1.msra.mxu0 %v350
    %4264 = vmatprep.subr.mxu0 0.0
    %4265 = vmatpush2.msra.mxu0 0.0
    %4266 = vmatprep.subr.mxu0 0.0
    %4267 = vmatpush2.msra.mxu0 0.0
    %4268 = vmatprep.subr.mxu0 0.0
    %4269 = vmatpush2.msra.mxu0 0.0
    %4270 = vmatprep.subr.mxu0 0.0
    %4271 = vmatpush2.msra.mxu0 0.0
    %4272 = vmatprep.subr.mxu0 0.0
    %4273 = vmatpush2.msra.mxu0 0.0
    %4274 = vmatprep.subr.mxu0 0.0
    %4275 = vmatpush2.msra.mxu0 0.0
    %4276 = vmatprep.subr.mxu0 0.0
    %4277 = vmatpush2.msra.mxu0 0.0
    %4278 = vmatprep.subr.mxu0 0.0
    %4279 = vmatpush2.msra.mxu0 0.0
    %4280 = vmatprep.subr.mxu0 0.0
    %4281 = vmatpush2.msra.mxu0 0.0
    %4282 = vmatprep.subr.mxu0 0.0
    %4283 = vmatpush2.msra.mxu0 0.0
    %4284 = vmatprep.subr.mxu0 0.0
    %4285 = vmatpush2.msra.mxu0 0.0
    %4286 = vmatprep.subr.mxu0 0.0
    %4287 = vmatpush2.msra.mxu0 0.0
    %4288 = vmatprep.subr.mxu0 0.0
    %4289 = vmatpush2.msra.mxu0 0.0
    %4290 = vmatprep.subr.mxu0 0.0
    %4291 = vmatpush2.msra.mxu0 0.0
    %4292 = vmatprep.subr.mxu0 0.0
    %4293 = vmatpush2.msra.mxu0 0.0
    %4294 = vmatprep.subr.mxu0 0.0
    %4295 = vmatpush2.msra.mxu0 0.0
    %4296 = vmatprep.mubr.f32.mxu0 0.0
    %4297 = vmatmul.mubr.f32.gmra.mxu0 %v4231
    %v4298 = vpop.f32.mrf.mxu0
    %v4299 = vadd.f32 0.0, %v4298
    %v4300 = vpop.f32.mrf.mxu0
    %4301 = vdwg.mxu0
    %v4302 = vadd.f32 %v4299, %v375
    %vm4303 = vcmask 7168
    %4304 = vst.msk [vmem:[%s4] sm:$0xff] %vm4303, %v4302
    // Predicated region
    $region30: #{tpu_custom_call.1} parent=1 // pred_check
      _
    $region31: #{tpu_custom_call.1} parent=1 // pred_check_branch
      %4306 = sbr.rel (0) target = $region33
    $region32: #{tpu_custom_call.1} parent=1 // pred_region
      _
    $region33: #{tpu_custom_call.1} parent=1 // pred_fallthru
      _
    // Predicated region
    $region34: #{tpu_custom_call.1} parent=1 // pred_check
      _
    $region35: #{tpu_custom_call.1} parent=1 // pred_check_branch
      %4308 = sbr.rel (0) target = $region37
    $region36: #{tpu_custom_call.1} parent=1 // pred_region
      _
    $region37: #{tpu_custom_call.1} parent=1 // pred_fallthru
      _
    %4309 = vsyncpa [#allocation4], 1
    %4310 = vsyncpa [#allocation6], 1

</llo_original>
